<compile_context>
chip_gen: v6e
topology: v6e:2x2x1
jax: 0.10.0
libtpu: 0.0.40
codegen_flags: <defaults>
</compile_context>

<pallas_src>
import jax
import jax.numpy as jnp
import numpy as np
from jax.experimental import pallas as pl
from jax.experimental.pallas import tpu as pltpu

# ---- small config (BertConfig-like) ----
B = 2               # batch
S = 64              # sequence length  (BS = 128 -> full MXU M dim)
V = 64              # vocab size
H = 128             # hidden_size (lane-dense)
NUM_HEADS = 4
HEAD_DIM = H // NUM_HEADS
I_DIM = 256         # intermediate_size (lane-dense)
NUM_LAYERS = 2      # num_hidden_layers
N_TYPES = 2         # type_vocab_size
NUM_LABELS = 2
LANE = 128          # padded logits width (lane-dense output slab)
OUT_ROWS = 8        # padded logits rows  (sublane-dense output slab)
BS = B * S
LN_EPS = 1e-12
SCALE = 1.0 / float(np.sqrt(HEAD_DIM))

# packed per-layer param rows (pvec): 0,1,2=b_q,b_k,b_v  3=b_ao  4=ln1_g  5=ln1_b
#                                     6,7=b_int  8=b_out  9=ln2_g  10=ln2_b
# packed global rows (gvec): 0=ln_e_g 1=ln_e_b 2=b_pool 3=b_cls_pad


def mixtext_kernel(emb_ref, bias_ref, gvec_ref, pvec_ref,
                   w_qkv_ref, w_ao_ref, w_int_ref, w_out_ref, w_pc_ref,
                   out_ref, x_ref):
    layer = pl.program_id(0)
    f32, bf16 = jnp.float32, jnp.bfloat16

    def layer_norm(x, g, b):
        mu = jnp.mean(x, axis=-1, keepdims=True)
        xc = x - mu
        var = jnp.mean(xc * xc, axis=-1, keepdims=True)
        return xc * jax.lax.rsqrt(var + LN_EPS) * g + b

    # ---- BertEmbeddings LayerNorm: only on the first grid step ----
    @pl.when(layer == 0)
    def _():
        x_ref[...] = layer_norm(emb_ref[...], gvec_ref[0:1, :], gvec_ref[1:2, :])

    x = x_ref[...]                                                   # (BS, H) f32
    pvec = pvec_ref[...]                                             # (16, H) f32

    # extended attention mask, materialized once per layer (hoisted out of head loop)
    att_bias = jnp.broadcast_to(bias_ref[...][:, None, :], (B, S, S))  # (B,S,S) f32

    # ---- BertSelfAttention: fused QKV projection (bf16 MXU, f32 accumulate) ----
    x_bf = x.astype(bf16)
    qkv = jnp.dot(x_bf, w_qkv_ref[...], preferred_element_type=f32)  # (BS, 3H)
    q_all = qkv[:, 0 * H:1 * H] + pvec[0:1, :]
    k_all = qkv[:, 1 * H:2 * H] + pvec[1:2, :]
    v_all = qkv[:, 2 * H:3 * H] + pvec[2:3, :]

    attn = jnp.zeros((BS, H), f32)
    for h in range(NUM_HEADS):                                       # static unroll
        lo = h * HEAD_DIM
        qh = q_all[:, lo:lo + HEAD_DIM].reshape(B, S, HEAD_DIM).astype(bf16)
        kh = k_all[:, lo:lo + HEAD_DIM].reshape(B, S, HEAD_DIM).astype(bf16)
        vh = v_all[:, lo:lo + HEAD_DIM].reshape(B, S, HEAD_DIM).astype(bf16)
        s = jnp.einsum('bqd,bkd->bqk', qh, kh,
                       preferred_element_type=f32) * SCALE            # (B,S,S) f32
        s = s + att_bias
        m = jnp.max(s, axis=-1, keepdims=True)
        p = jnp.exp(s - m)
        p = p * pl.reciprocal(jnp.sum(p, axis=-1, keepdims=True), approx=True)
        ctx = jnp.einsum('bqk,bkd->bqd', p.astype(bf16), vh,
                         preferred_element_type=f32)                  # (B,S,hd)
        # fold head recombination into the output projection (no lane concat)
        attn = attn + jnp.dot(ctx.reshape(BS, HEAD_DIM).astype(bf16),
                              w_ao_ref[lo:lo + HEAD_DIM, :],
                              preferred_element_type=f32)
    attn = attn + pvec[3:4, :]
    x = layer_norm(x + attn, pvec[4:5, :], pvec[5:6, :])

    # ---- BertIntermediate (GELU) + BertOutput ----
    b_int = jnp.concatenate([pvec[6:7, :], pvec[7:8, :]], axis=1)     # (1, I)
    hmid = jnp.dot(x.astype(bf16), w_int_ref[...],
                   preferred_element_type=f32) + b_int                # (BS, I)
    hmid = jax.nn.gelu(hmid, approximate=True)
    ffn = jnp.dot(hmid.astype(bf16), w_out_ref[...],
                  preferred_element_type=f32) + pvec[8:9, :]          # (BS, H)
    x = layer_norm(x + ffn, pvec[9:10, :], pvec[10:11, :])
    x_ref[...] = x                                                    # carry to next layer

    # ---- BertPooler + classifier on the final grid step ----
    @pl.when(layer == NUM_LAYERS - 1)
    def _():
        cls = x.reshape(B, S, H)[:, 0, :]                             # (B, H)
        cls8 = jnp.concatenate(
            [cls, jnp.zeros((OUT_ROWS - B, H), f32)], axis=0)         # (8, H)
        pooled = jnp.tanh(
            jnp.dot(cls8.astype(bf16), w_pc_ref[0], preferred_element_type=f32)
            + gvec_ref[2:3, :])
        out_ref[...] = (jnp.dot(pooled.astype(bf16), w_pc_ref[1],
                                preferred_element_type=f32)
                        + gvec_ref[3:4, :])                           # (8, 128) full tile


def mixtext_forward(input_ids, attention_mask, token_type_ids, params):
    # embedding gathers (data-dependent) in the wrapper; everything else in-kernel
    emb = (params['word'][input_ids].astype(jnp.float32)
           + params['pos'][None, :, :].astype(jnp.float32)
           + params['type'][token_type_ids].astype(jnp.float32))      # (B, S, H)
    emb_flat = emb.reshape(BS, H)
    bias = (1.0 - attention_mask.astype(jnp.float32)) * -10000.0      # (B, S)

    # pack small per-layer params into one (L, 16, 128) slab
    pvec = jnp.concatenate([
        params['b_qkv'],                                  # rows 0-2
        params['b_ao'], params['ln1_g'], params['ln1_b'],  # rows 3-5
        params['b_int'].reshape(NUM_LAYERS, 2, H),         # rows 6-7
        params['b_out'], params['ln2_g'], params['ln2_b'],  # rows 8-10
        jnp.zeros((NUM_LAYERS, 5, H), jnp.float32),         # pad to 16 rows
    ], axis=1)
    # pack global small params into one (8, 128) slab
    gvec = jnp.concatenate([
        params['ln_e_g'], params['ln_e_b'],
        params['b_pool'], params['b_cls_pad'],
        jnp.zeros((4, H), jnp.float32)], axis=0)
    # pooler + classifier weights stacked (bf16)
    w_pc = jnp.stack([params['w_pool'], params['w_cls_pad']], axis=0)  # (2, H, 128)

    grid_spec = pltpu.PrefetchScalarGridSpec(
        num_scalar_prefetch=0,
        grid=(NUM_LAYERS,),
        in_specs=[
            pl.BlockSpec((BS, H), lambda l: (0, 0)),                     # emb
            pl.BlockSpec((B, S), lambda l: (0, 0)),                      # mask bias
            pl.BlockSpec((8, H), lambda l: (0, 0)),                      # gvec
            pl.BlockSpec((None, 16, H), lambda l: (l, 0, 0)),            # pvec
            pl.BlockSpec((None, H, 3 * H), lambda l: (l, 0, 0)),         # w_qkv
            pl.BlockSpec((None, H, H), lambda l: (l, 0, 0)),             # w_ao
            pl.BlockSpec((None, H, I_DIM), lambda l: (l, 0, 0)),         # w_int
            pl.BlockSpec((None, I_DIM, H), lambda l: (l, 0, 0)),         # w_out
            pl.BlockSpec((2, H, LANE), lambda l: (0, 0, 0)),             # w_pool/cls
        ],
        out_specs=pl.BlockSpec((OUT_ROWS, LANE), lambda l: (0, 0)),
        scratch_shapes=[pltpu.VMEM((BS, H), jnp.float32)],               # residual stream
    )
    logits_pad = pl.pallas_call(
        mixtext_kernel,
        out_shape=jax.ShapeDtypeStruct((OUT_ROWS, LANE), jnp.float32),
        grid_spec=grid_spec,
        compiler_params=pltpu.CompilerParams(
            dimension_semantics=("arbitrary",)),
    )(emb_flat, bias, gvec, pvec,
      params['w_qkv'], params['w_ao'], params['w_int'], params['w_out'], w_pc)
    return logits_pad[:B, :NUM_LABELS]


def reference_forward(input_ids, attention_mask, token_type_ids, params):
    """Pure-JAX reference of the MixText forward (same bf16-weight / f32-acc recipe)."""
    f32, bf16 = jnp.float32, jnp.bfloat16

    def ln(x, g, b):
        mu = jnp.mean(x, axis=-1, keepdims=True)
        xc = x - mu
        var = jnp.mean(xc * xc, axis=-1, keepdims=True)
        return xc * jax.lax.rsqrt(var + LN_EPS) * g + b

    def mm(a, w):
        return jnp.dot(a.astype(bf16), w, preferred_element_type=f32)

    emb = (params['word'][input_ids].astype(f32)
           + params['pos'][None, :, :].astype(f32)
           + params['type'][token_type_ids].astype(f32))               # (B,S,H)
    x = ln(emb, params['ln_e_g'], params['ln_e_b'])
    bias = (1.0 - attention_mask.astype(f32)) * -10000.0                # (B,S)

    for layer in range(NUM_LAYERS):
        qkv = mm(x, params['w_qkv'][layer])                             # (B,S,3H)
        q = qkv[..., 0 * H:1 * H] + params['b_qkv'][layer, 0]
        k = qkv[..., 1 * H:2 * H] + params['b_qkv'][layer, 1]
        v = qkv[..., 2 * H:3 * H] + params['b_qkv'][layer, 2]

        def heads(t):
            return t.reshape(B, S, NUM_HEADS, HEAD_DIM).transpose(0, 2, 1, 3)

        qh, kh, vh = heads(q), heads(k), heads(v)
        s = jnp.einsum('bnqd,bnkd->bnqk', qh.astype(bf16), kh.astype(bf16),
                       preferred_element_type=f32) * SCALE
        s = s + bias[:, None, None, :]
        p = jax.nn.softmax(s, axis=-1)
        ctx = jnp.einsum('bnqk,bnkd->bnqd', p.astype(bf16), vh.astype(bf16),
                         preferred_element_type=f32)
        ctx = ctx.transpose(0, 2, 1, 3).reshape(B, S, H)

        attn = mm(ctx, params['w_ao'][layer]) + params['b_ao'][layer]
        x = ln(x + attn, params['ln1_g'][layer], params['ln1_b'][layer])

        hmid = jax.nn.gelu(mm(x, params['w_int'][layer]) + params['b_int'][layer],
                           approximate=True)
        ffn = mm(hmid, params['w_out'][layer]) + params['b_out'][layer]
        x = ln(x + ffn, params['ln2_g'][layer], params['ln2_b'][layer])

    pooled = jnp.tanh(mm(x[:, 0, :], params['w_pool']) + params['b_pool'])
    logits = mm(pooled, params['w_cls_pad']) + params['b_cls_pad']
    return logits[:, :NUM_LABELS]


def init_params(key):
    ks = jax.random.split(key, 21)
    bf = jnp.bfloat16

    def nrm(i, shape, scale, dtype=jnp.float32):
        return (scale * jax.random.normal(ks[i], shape, jnp.float32)).astype(dtype)

    p = {
        'word':   nrm(0, (V, H), 0.5, bf),
        'pos':    nrm(1, (S, H), 0.5, bf),
        'type':   nrm(2, (N_TYPES, H), 0.5, bf),
        'ln_e_g': 1.0 + nrm(3, (1, H), 0.1),
        'ln_e_b': nrm(4, (1, H), 0.1),
        'w_qkv':  nrm(5, (NUM_LAYERS, H, 3 * H), 0.05, bf),
        'b_qkv':  nrm(6, (NUM_LAYERS, 3, H), 0.05),          # rows: q, k, v bias
        'w_ao':   nrm(7, (NUM_LAYERS, H, H), 0.05, bf),
        'b_ao':   nrm(8, (NUM_LAYERS, 1, H), 0.05),
        'ln1_g':  1.0 + nrm(9, (NUM_LAYERS, 1, H), 0.1),
        'ln1_b':  nrm(10, (NUM_LAYERS, 1, H), 0.1),
        'w_int':  nrm(11, (NUM_LAYERS, H, I_DIM), 0.05, bf),
        'b_int':  nrm(12, (NUM_LAYERS, 1, I_DIM), 0.05),
        'w_out':  nrm(13, (NUM_LAYERS, I_DIM, H), 0.05, bf),
        'b_out':  nrm(14, (NUM_LAYERS, 1, H), 0.05),
        'ln2_g':  1.0 + nrm(15, (NUM_LAYERS, 1, H), 0.1),
        'ln2_b':  nrm(16, (NUM_LAYERS, 1, H), 0.1),
        'w_pool': nrm(17, (H, H), 0.05, bf),
        'b_pool': nrm(18, (1, H), 0.05),
    }
    w_cls = nrm(19, (H, NUM_LABELS), 0.1)
    b_cls = nrm(20, (1, NUM_LABELS), 0.1)
    # pad classifier to a lane-dense 128-wide slab; wrapper slices the real logits
    p['w_cls_pad'] = jnp.pad(w_cls, ((0, 0), (0, LANE - NUM_LABELS))).astype(bf)
    p['b_cls_pad'] = jnp.pad(b_cls, ((0, 0), (0, LANE - NUM_LABELS)))
    return p


if __name__ == "__main__":
    key = jax.random.PRNGKey(0)
    kp, kd = jax.random.split(key)
    params = init_params(kp)

    # synthetic batch: token ids, padding mask, token types (pad id = 1)
    lengths = jnp.array([S, 40], dtype=jnp.int32)
    attention_mask = (jnp.arange(S)[None, :] < lengths[:, None]).astype(jnp.int32)  # (B,S)
    input_ids = jax.random.randint(kd, (B, S), 2, V)
    input_ids = jnp.where(attention_mask > 0, input_ids, 1)
    token_type_ids = jnp.broadcast_to(
        (jnp.arange(S) >= S // 2).astype(jnp.int32), (B, S))

    logits = mixtext_forward(input_ids, attention_mask, token_type_ids, params)
    logits = jax.block_until_ready(logits)

    ref = reference_forward(input_ids, attention_mask, token_type_ids, params)
    np.testing.assert_allclose(np.asarray(logits), np.asarray(ref),
                               rtol=2e-2, atol=2e-2)
    print("KERNEL_OK")
</pallas_src>

<mosaic_0001>
module attributes {stable_mosaic.version = 11 : i64} {
  func.func @mixtext_kernel(%arg0: i32, %arg1: memref<128x128xf32, #tpu.memory_space<vmem>>, %arg2: memref<2x64xf32, #tpu.memory_space<vmem>>, %arg3: memref<8x128xf32, #tpu.memory_space<vmem>>, %arg4: memref<1x16x128xf32, #tpu.memory_space<vmem>>, %arg5: memref<1x128x384xbf16, #tpu.memory_space<vmem>>, %arg6: memref<1x128x128xbf16, #tpu.memory_space<vmem>>, %arg7: memref<1x128x256xbf16, #tpu.memory_space<vmem>>, %arg8: memref<1x256x128xbf16, #tpu.memory_space<vmem>>, %arg9: memref<2x128x128xbf16, #tpu.memory_space<vmem>>, %arg10: memref<8x128xf32, #tpu.memory_space<vmem>>, %arg11: memref<128x128xf32, #tpu.memory_space<vmem>>) attributes {dimension_semantics = [#tpu.dimension_semantics<arbitrary>], iteration_bounds = array<i64: 2>, scalar_prefetch = 0 : i64, scratch_operands = 1 : i64, tpu.core_type = #tpu.core_type<tc>, window_params = [{pipeline_mode = #tpu.pipeline_mode<synchronous>, transform_indices = @transform_0, window_bounds = array<i64: 128, 128>}, {pipeline_mode = #tpu.pipeline_mode<synchronous>, transform_indices = @transform_1, window_bounds = array<i64: 2, 64>}, {pipeline_mode = #tpu.pipeline_mode<synchronous>, transform_indices = @transform_2, window_bounds = array<i64: 8, 128>}, {transform_indices = @transform_3, window_bounds = array<i64: 1, 16, 128>}, {transform_indices = @transform_4, window_bounds = array<i64: 1, 128, 384>}, {transform_indices = @transform_5, window_bounds = array<i64: 1, 128, 128>}, {transform_indices = @transform_6, window_bounds = array<i64: 1, 128, 256>}, {transform_indices = @transform_7, window_bounds = array<i64: 1, 256, 128>}, {pipeline_mode = #tpu.pipeline_mode<synchronous>, transform_indices = @transform_8, window_bounds = array<i64: 2, 128, 128>}, {pipeline_mode = #tpu.pipeline_mode<synchronous>, transform_indices = @transform_9, window_bounds = array<i64: 8, 128>}]} {
    %c0_i32 = arith.constant 0 : i32
    %0 = arith.cmpi eq, %arg0, %c0_i32 : i32
    %1 = arith.extui %0 : i1 to i32
    %c0_i32_0 = arith.constant 0 : i32
    %2 = arith.cmpi ne, %1, %c0_i32_0 : i32
    scf.if %2 {
      %c0_69 = arith.constant 0 : index
      %c0_70 = arith.constant 0 : index
      %233 = vector.load %arg1[%c0_69, %c0_70] : memref<128x128xf32, #tpu.memory_space<vmem>>, vector<128x128xf32>
      %c0_71 = arith.constant 0 : index
      %c0_72 = arith.constant 0 : index
      %234 = vector.load %arg3[%c0_71, %c0_72] : memref<8x128xf32, #tpu.memory_space<vmem>>, vector<1x128xf32>
      %c1 = arith.constant 1 : index
      %c0_73 = arith.constant 0 : index
      %235 = vector.load %arg3[%c1, %c0_73] : memref<8x128xf32, #tpu.memory_space<vmem>>, vector<1x128xf32>
      %cst_74 = arith.constant dense<0.000000e+00> : vector<128xf32>
      %236 = vector.multi_reduction <add>, %233, %cst_74 [1] : vector<128x128xf32> to vector<128xf32>
      %237 = vector.shape_cast %236 : vector<128xf32> to vector<128x1xf32>
      %cst_75 = arith.constant 1.280000e+02 : f32
      %238 = vector.broadcast %cst_75 : f32 to vector<128x1xf32>
      %239 = arith.divf %237, %238 : vector<128x1xf32>
      %240 = vector.broadcast %239 : vector<128x1xf32> to vector<128x128xf32>
      %241 = arith.subf %233, %240 : vector<128x128xf32>
      %242 = arith.mulf %241, %241 : vector<128x128xf32>
      %cst_76 = arith.constant dense<0.000000e+00> : vector<128xf32>
      %243 = vector.multi_reduction <add>, %242, %cst_76 [1] : vector<128x128xf32> to vector<128xf32>
      %244 = vector.shape_cast %243 : vector<128xf32> to vector<128x1xf32>
      %cst_77 = arith.constant 1.280000e+02 : f32
      %245 = vector.broadcast %cst_77 : f32 to vector<128x1xf32>
      %246 = arith.divf %244, %245 : vector<128x1xf32>
      %cst_78 = arith.constant 9.99999996E-13 : f32
      %247 = vector.broadcast %cst_78 : f32 to vector<128x1xf32>
      %248 = arith.addf %246, %247 : vector<128x1xf32>
      %249 = math.rsqrt %248 : vector<128x1xf32>
      %250 = vector.broadcast %249 : vector<128x1xf32> to vector<128x128xf32>
      %251 = arith.mulf %241, %250 : vector<128x128xf32>
      %252 = vector.broadcast %234 : vector<1x128xf32> to vector<128x128xf32>
      %253 = arith.mulf %251, %252 : vector<128x128xf32>
      %254 = vector.broadcast %235 : vector<1x128xf32> to vector<128x128xf32>
      %255 = arith.addf %253, %254 : vector<128x128xf32>
      %c0_79 = arith.constant 0 : index
      %c0_80 = arith.constant 0 : index
      %256 = vector.load %arg11[%c0_79, %c0_80] : memref<128x128xf32, #tpu.memory_space<vmem>>, vector<128x128xf32>
      tpu.vector_store %arg11[%c0_79, %c0_80], %255 {strides = array<i32>} : memref<128x128xf32, #tpu.memory_space<vmem>>, vector<128x128xf32>,
    } else {
    }
    %c0 = arith.constant 0 : index
    %c0_1 = arith.constant 0 : index
    %3 = vector.load %arg11[%c0, %c0_1] : memref<128x128xf32, #tpu.memory_space<vmem>>, vector<128x128xf32>
    %c0_2 = arith.constant 0 : index
    %c0_3 = arith.constant 0 : index
    %c0_4 = arith.constant 0 : index
    %4 = vector.load %arg4[%c0_2, %c0_3, %c0_4] : memref<1x16x128xf32, #tpu.memory_space<vmem>>, vector<1x16x128xf32>
    %5 = vector.shape_cast %4 : vector<1x16x128xf32> to vector<16x128xf32>
    %c0_5 = arith.constant 0 : index
    %c0_6 = arith.constant 0 : index
    %6 = vector.load %arg2[%c0_5, %c0_6] : memref<2x64xf32, #tpu.memory_space<vmem>>, vector<2x64xf32>
    %7 = vector.shape_cast %6 : vector<2x64xf32> to vector<2x1x64xf32>
    %8 = vector.shape_cast %7 : vector<2x1x64xf32> to vector<2x1x64xf32>
    %9 = vector.broadcast %8 : vector<2x1x64xf32> to vector<2x64x64xf32>
    %10 = arith.truncf %3 : vector<128x128xf32> to vector<128x128xbf16>
    %c0_7 = arith.constant 0 : index
    %c0_8 = arith.constant 0 : index
    %c0_9 = arith.constant 0 : index
    %11 = vector.load %arg5[%c0_7, %c0_8, %c0_9] : memref<1x128x384xbf16, #tpu.memory_space<vmem>>, vector<1x128x384xbf16>
    %12 = vector.shape_cast %11 : vector<1x128x384xbf16> to vector<128x384xbf16>
    %cst = arith.constant dense<0.000000e+00> : vector<128x384xf32>
    %13 = tpu.matmul %10, %12, %cst {dimension_numbers = #tpu.dot_dimension_numbers<[1], [0], [0], [1], [0, 0, 1, 1], [], []>} : vector<128x128xbf16>, vector<128x384xbf16>, vector<128x384xf32> -> vector<128x384xf32>
    %14 = vector.extract_strided_slice %13 {offsets = [0, 0], sizes = [128, 128], strides = [1, 1]} : vector<128x384xf32> to vector<128x128xf32>
    %15 = vector.extract_strided_slice %5 {offsets = [0, 0], sizes = [1, 128], strides = [1, 1]} : vector<16x128xf32> to vector<1x128xf32>
    %16 = vector.broadcast %15 : vector<1x128xf32> to vector<128x128xf32>
    %17 = arith.addf %14, %16 : vector<128x128xf32>
    %18 = vector.extract_strided_slice %13 {offsets = [0, 128], sizes = [128, 128], strides = [1, 1]} : vector<128x384xf32> to vector<128x128xf32>
    %19 = vector.extract_strided_slice %5 {offsets = [1, 0], sizes = [1, 128], strides = [1, 1]} : vector<16x128xf32> to vector<1x128xf32>
    %20 = vector.broadcast %19 : vector<1x128xf32> to vector<128x128xf32>
    %21 = arith.addf %18, %20 : vector<128x128xf32>
    %22 = vector.extract_strided_slice %13 {offsets = [0, 256], sizes = [128, 128], strides = [1, 1]} : vector<128x384xf32> to vector<128x128xf32>
    %23 = vector.extract_strided_slice %5 {offsets = [2, 0], sizes = [1, 128], strides = [1, 1]} : vector<16x128xf32> to vector<1x128xf32>
    %24 = vector.broadcast %23 : vector<1x128xf32> to vector<128x128xf32>
    %25 = arith.addf %22, %24 : vector<128x128xf32>
    %cst_10 = arith.constant 0.000000e+00 : f32
    %26 = vector.broadcast %cst_10 : f32 to vector<128x128xf32>
    %27 = vector.extract_strided_slice %17 {offsets = [0, 0], sizes = [128, 32], strides = [1, 1]} : vector<128x128xf32> to vector<128x32xf32>
    %28 = vector.shape_cast %27 : vector<128x32xf32> to vector<2x64x32xf32>
    %29 = arith.truncf %28 : vector<2x64x32xf32> to vector<2x64x32xbf16>
    %30 = vector.extract_strided_slice %21 {offsets = [0, 0], sizes = [128, 32], strides = [1, 1]} : vector<128x128xf32> to vector<128x32xf32>
    %31 = vector.shape_cast %30 : vector<128x32xf32> to vector<2x64x32xf32>
    %32 = arith.truncf %31 : vector<2x64x32xf32> to vector<2x64x32xbf16>
    %33 = vector.extract_strided_slice %25 {offsets = [0, 0], sizes = [128, 32], strides = [1, 1]} : vector<128x128xf32> to vector<128x32xf32>
    %34 = vector.shape_cast %33 : vector<128x32xf32> to vector<2x64x32xf32>
    %35 = arith.truncf %34 : vector<2x64x32xf32> to vector<2x64x32xbf16>
    "tpu.trace_start"() <{level = 10 : i32, message = "bqd,bkd->bqk"}> : () -> ()
    %cst_11 = arith.constant dense<0.000000e+00> : vector<2x64x64xf32>
    %36 = tpu.matmul %29, %32, %cst_11 {dimension_numbers = #tpu.dot_dimension_numbers<[2], [2], [1], [1], [0, 0, 0, 1, 1, 1], [0], [0]>} : vector<2x64x32xbf16>, vector<2x64x32xbf16>, vector<2x64x64xf32> -> vector<2x64x64xf32>
    "tpu.trace_stop"() : () -> ()
    %cst_12 = arith.constant 0.176776692 : f32
    %37 = vector.broadcast %cst_12 : f32 to vector<2x64x64xf32>
    %38 = arith.mulf %36, %37 : vector<2x64x64xf32>
    %39 = arith.addf %38, %9 : vector<2x64x64xf32>
    %cst_13 = arith.constant dense<0xFF800000> : vector<2x64xf32>
    %40 = vector.multi_reduction <maximumf>, %39, %cst_13 [2] : vector<2x64x64xf32> to vector<2x64xf32>
    %41 = vector.shape_cast %40 : vector<2x64xf32> to vector<2x64x1xf32>
    %42 = vector.broadcast %41 : vector<2x64x1xf32> to vector<2x64x64xf32>
    %43 = arith.subf %39, %42 : vector<2x64x64xf32>
    %44 = math.exp %43 : vector<2x64x64xf32>
    %cst_14 = arith.constant dense<0.000000e+00> : vector<2x64xf32>
    %45 = vector.multi_reduction <add>, %44, %cst_14 [2] : vector<2x64x64xf32> to vector<2x64xf32>
    %46 = vector.shape_cast %45 : vector<2x64xf32> to vector<2x64x1xf32>
    %47 = tpu.reciprocal %46 {approx = true} : vector<2x64x1xf32> -> vector<2x64x1xf32>
    %48 = vector.broadcast %47 : vector<2x64x1xf32> to vector<2x64x64xf32>
    %49 = arith.mulf %44, %48 : vector<2x64x64xf32>
    %50 = arith.truncf %49 : vector<2x64x64xf32> to vector<2x64x64xbf16>
    "tpu.trace_start"() <{level = 10 : i32, message = "bqk,bkd->bqd"}> : () -> ()
    %cst_15 = arith.constant dense<0.000000e+00> : vector<2x64x32xf32>
    %51 = tpu.matmul %50, %35, %cst_15 {dimension_numbers = #tpu.dot_dimension_numbers<[2], [1], [1], [2], [0, 0, 0, 1, 1, 2], [0], [0]>} : vector<2x64x64xbf16>, vector<2x64x32xbf16>, vector<2x64x32xf32> -> vector<2x64x32xf32>
    "tpu.trace_stop"() : () -> ()
    %52 = vector.shape_cast %51 : vector<2x64x32xf32> to vector<128x32xf32>
    %53 = arith.truncf %52 : vector<128x32xf32> to vector<128x32xbf16>
    %c0_16 = arith.constant 0 : index
    %c0_17 = arith.constant 0 : index
    %c0_18 = arith.constant 0 : index
    %54 = vector.load %arg6[%c0_16, %c0_17, %c0_18] : memref<1x128x128xbf16, #tpu.memory_space<vmem>>, vector<1x32x128xbf16>
    %55 = vector.shape_cast %54 : vector<1x32x128xbf16> to vector<32x128xbf16>
    %cst_19 = arith.constant dense<0.000000e+00> : vector<128x128xf32>
    %56 = tpu.matmul %53, %55, %cst_19 {dimension_numbers = #tpu.dot_dimension_numbers<[1], [0], [0], [1], [0, 0, 1, 1], [], []>} : vector<128x32xbf16>, vector<32x128xbf16>, vector<128x128xf32> -> vector<128x128xf32>
    %57 = arith.addf %26, %56 : vector<128x128xf32>
    %58 = vector.extract_strided_slice %17 {offsets = [0, 32], sizes = [128, 32], strides = [1, 1]} : vector<128x128xf32> to vector<128x32xf32>
    %59 = vector.shape_cast %58 : vector<128x32xf32> to vector<2x64x32xf32>
    %60 = arith.truncf %59 : vector<2x64x32xf32> to vector<2x64x32xbf16>
    %61 = vector.extract_strided_slice %21 {offsets = [0, 32], sizes = [128, 32], strides = [1, 1]} : vector<128x128xf32> to vector<128x32xf32>
    %62 = vector.shape_cast %61 : vector<128x32xf32> to vector<2x64x32xf32>
    %63 = arith.truncf %62 : vector<2x64x32xf32> to vector<2x64x32xbf16>
    %64 = vector.extract_strided_slice %25 {offsets = [0, 32], sizes = [128, 32], strides = [1, 1]} : vector<128x128xf32> to vector<128x32xf32>
    %65 = vector.shape_cast %64 : vector<128x32xf32> to vector<2x64x32xf32>
    %66 = arith.truncf %65 : vector<2x64x32xf32> to vector<2x64x32xbf16>
    "tpu.trace_start"() <{level = 10 : i32, message = "bqd,bkd->bqk"}> : () -> ()
    %cst_20 = arith.constant dense<0.000000e+00> : vector<2x64x64xf32>
    %67 = tpu.matmul %60, %63, %cst_20 {dimension_numbers = #tpu.dot_dimension_numbers<[2], [2], [1], [1], [0, 0, 0, 1, 1, 1], [0], [0]>} : vector<2x64x32xbf16>, vector<2x64x32xbf16>, vector<2x64x64xf32> -> vector<2x64x64xf32>
    "tpu.trace_stop"() : () -> ()
    %cst_21 = arith.constant 0.176776692 : f32
    %68 = vector.broadcast %cst_21 : f32 to vector<2x64x64xf32>
    %69 = arith.mulf %67, %68 : vector<2x64x64xf32>
    %70 = arith.addf %69, %9 : vector<2x64x64xf32>
    %cst_22 = arith.constant dense<0xFF800000> : vector<2x64xf32>
    %71 = vector.multi_reduction <maximumf>, %70, %cst_22 [2] : vector<2x64x64xf32> to vector<2x64xf32>
    %72 = vector.shape_cast %71 : vector<2x64xf32> to vector<2x64x1xf32>
    %73 = vector.broadcast %72 : vector<2x64x1xf32> to vector<2x64x64xf32>
    %74 = arith.subf %70, %73 : vector<2x64x64xf32>
    %75 = math.exp %74 : vector<2x64x64xf32>
    %cst_23 = arith.constant dense<0.000000e+00> : vector<2x64xf32>
    %76 = vector.multi_reduction <add>, %75, %cst_23 [2] : vector<2x64x64xf32> to vector<2x64xf32>
    %77 = vector.shape_cast %76 : vector<2x64xf32> to vector<2x64x1xf32>
    %78 = tpu.reciprocal %77 {approx = true} : vector<2x64x1xf32> -> vector<2x64x1xf32>
    %79 = vector.broadcast %78 : vector<2x64x1xf32> to vector<2x64x64xf32>
    %80 = arith.mulf %75, %79 : vector<2x64x64xf32>
    %81 = arith.truncf %80 : vector<2x64x64xf32> to vector<2x64x64xbf16>
    "tpu.trace_start"() <{level = 10 : i32, message = "bqk,bkd->bqd"}> : () -> ()
    %cst_24 = arith.constant dense<0.000000e+00> : vector<2x64x32xf32>
    %82 = tpu.matmul %81, %66, %cst_24 {dimension_numbers = #tpu.dot_dimension_numbers<[2], [1], [1], [2], [0, 0, 0, 1, 1, 2], [0], [0]>} : vector<2x64x64xbf16>, vector<2x64x32xbf16>, vector<2x64x32xf32> -> vector<2x64x32xf32>
    "tpu.trace_stop"() : () -> ()
    %83 = vector.shape_cast %82 : vector<2x64x32xf32> to vector<128x32xf32>
    %84 = arith.truncf %83 : vector<128x32xf32> to vector<128x32xbf16>
    %c0_25 = arith.constant 0 : index
    %c32 = arith.constant 32 : index
    %c0_26 = arith.constant 0 : index
    %85 = vector.load %arg6[%c0_25, %c32, %c0_26] : memref<1x128x128xbf16, #tpu.memory_space<vmem>>, vector<1x32x128xbf16>
    %86 = vector.shape_cast %85 : vector<1x32x128xbf16> to vector<32x128xbf16>
    %cst_27 = arith.constant dense<0.000000e+00> : vector<128x128xf32>
    %87 = tpu.matmul %84, %86, %cst_27 {dimension_numbers = #tpu.dot_dimension_numbers<[1], [0], [0], [1], [0, 0, 1, 1], [], []>} : vector<128x32xbf16>, vector<32x128xbf16>, vector<128x128xf32> -> vector<128x128xf32>
    %88 = arith.addf %57, %87 : vector<128x128xf32>
    %89 = vector.extract_strided_slice %17 {offsets = [0, 64], sizes = [128, 32], strides = [1, 1]} : vector<128x128xf32> to vector<128x32xf32>
    %90 = vector.shape_cast %89 : vector<128x32xf32> to vector<2x64x32xf32>
    %91 = arith.truncf %90 : vector<2x64x32xf32> to vector<2x64x32xbf16>
    %92 = vector.extract_strided_slice %21 {offsets = [0, 64], sizes = [128, 32], strides = [1, 1]} : vector<128x128xf32> to vector<128x32xf32>
    %93 = vector.shape_cast %92 : vector<128x32xf32> to vector<2x64x32xf32>
    %94 = arith.truncf %93 : vector<2x64x32xf32> to vector<2x64x32xbf16>
    %95 = vector.extract_strided_slice %25 {offsets = [0, 64], sizes = [128, 32], strides = [1, 1]} : vector<128x128xf32> to vector<128x32xf32>
    %96 = vector.shape_cast %95 : vector<128x32xf32> to vector<2x64x32xf32>
    %97 = arith.truncf %96 : vector<2x64x32xf32> to vector<2x64x32xbf16>
    "tpu.trace_start"() <{level = 10 : i32, message = "bqd,bkd->bqk"}> : () -> ()
    %cst_28 = arith.constant dense<0.000000e+00> : vector<2x64x64xf32>
    %98 = tpu.matmul %91, %94, %cst_28 {dimension_numbers = #tpu.dot_dimension_numbers<[2], [2], [1], [1], [0, 0, 0, 1, 1, 1], [0], [0]>} : vector<2x64x32xbf16>, vector<2x64x32xbf16>, vector<2x64x64xf32> -> vector<2x64x64xf32>
    "tpu.trace_stop"() : () -> ()
    %cst_29 = arith.constant 0.176776692 : f32
    %99 = vector.broadcast %cst_29 : f32 to vector<2x64x64xf32>
    %100 = arith.mulf %98, %99 : vector<2x64x64xf32>
    %101 = arith.addf %100, %9 : vector<2x64x64xf32>
    %cst_30 = arith.constant dense<0xFF800000> : vector<2x64xf32>
    %102 = vector.multi_reduction <maximumf>, %101, %cst_30 [2] : vector<2x64x64xf32> to vector<2x64xf32>
    %103 = vector.shape_cast %102 : vector<2x64xf32> to vector<2x64x1xf32>
    %104 = vector.broadcast %103 : vector<2x64x1xf32> to vector<2x64x64xf32>
    %105 = arith.subf %101, %104 : vector<2x64x64xf32>
    %106 = math.exp %105 : vector<2x64x64xf32>
    %cst_31 = arith.constant dense<0.000000e+00> : vector<2x64xf32>
    %107 = vector.multi_reduction <add>, %106, %cst_31 [2] : vector<2x64x64xf32> to vector<2x64xf32>
    %108 = vector.shape_cast %107 : vector<2x64xf32> to vector<2x64x1xf32>
    %109 = tpu.reciprocal %108 {approx = true} : vector<2x64x1xf32> -> vector<2x64x1xf32>
    %110 = vector.broadcast %109 : vector<2x64x1xf32> to vector<2x64x64xf32>
    %111 = arith.mulf %106, %110 : vector<2x64x64xf32>
    %112 = arith.truncf %111 : vector<2x64x64xf32> to vector<2x64x64xbf16>
    "tpu.trace_start"() <{level = 10 : i32, message = "bqk,bkd->bqd"}> : () -> ()
    %cst_32 = arith.constant dense<0.000000e+00> : vector<2x64x32xf32>
    %113 = tpu.matmul %112, %97, %cst_32 {dimension_numbers = #tpu.dot_dimension_numbers<[2], [1], [1], [2], [0, 0, 0, 1, 1, 2], [0], [0]>} : vector<2x64x64xbf16>, vector<2x64x32xbf16>, vector<2x64x32xf32> -> vector<2x64x32xf32>
    "tpu.trace_stop"() : () -> ()
    %114 = vector.shape_cast %113 : vector<2x64x32xf32> to vector<128x32xf32>
    %115 = arith.truncf %114 : vector<128x32xf32> to vector<128x32xbf16>
    %c0_33 = arith.constant 0 : index
    %c64 = arith.constant 64 : index
    %c0_34 = arith.constant 0 : index
    %116 = vector.load %arg6[%c0_33, %c64, %c0_34] : memref<1x128x128xbf16, #tpu.memory_space<vmem>>, vector<1x32x128xbf16>
    %117 = vector.shape_cast %116 : vector<1x32x128xbf16> to vector<32x128xbf16>
    %cst_35 = arith.constant dense<0.000000e+00> : vector<128x128xf32>
    %118 = tpu.matmul %115, %117, %cst_35 {dimension_numbers = #tpu.dot_dimension_numbers<[1], [0], [0], [1], [0, 0, 1, 1], [], []>} : vector<128x32xbf16>, vector<32x128xbf16>, vector<128x128xf32> -> vector<128x128xf32>
    %119 = arith.addf %88, %118 : vector<128x128xf32>
    %120 = vector.extract_strided_slice %17 {offsets = [0, 96], sizes = [128, 32], strides = [1, 1]} : vector<128x128xf32> to vector<128x32xf32>
    %121 = vector.shape_cast %120 : vector<128x32xf32> to vector<2x64x32xf32>
    %122 = arith.truncf %121 : vector<2x64x32xf32> to vector<2x64x32xbf16>
    %123 = vector.extract_strided_slice %21 {offsets = [0, 96], sizes = [128, 32], strides = [1, 1]} : vector<128x128xf32> to vector<128x32xf32>
    %124 = vector.shape_cast %123 : vector<128x32xf32> to vector<2x64x32xf32>
    %125 = arith.truncf %124 : vector<2x64x32xf32> to vector<2x64x32xbf16>
    %126 = vector.extract_strided_slice %25 {offsets = [0, 96], sizes = [128, 32], strides = [1, 1]} : vector<128x128xf32> to vector<128x32xf32>
    %127 = vector.shape_cast %126 : vector<128x32xf32> to vector<2x64x32xf32>
    %128 = arith.truncf %127 : vector<2x64x32xf32> to vector<2x64x32xbf16>
    "tpu.trace_start"() <{level = 10 : i32, message = "bqd,bkd->bqk"}> : () -> ()
    %cst_36 = arith.constant dense<0.000000e+00> : vector<2x64x64xf32>
    %129 = tpu.matmul %122, %125, %cst_36 {dimension_numbers = #tpu.dot_dimension_numbers<[2], [2], [1], [1], [0, 0, 0, 1, 1, 1], [0], [0]>} : vector<2x64x32xbf16>, vector<2x64x32xbf16>, vector<2x64x64xf32> -> vector<2x64x64xf32>
    "tpu.trace_stop"() : () -> ()
    %cst_37 = arith.constant 0.176776692 : f32
    %130 = vector.broadcast %cst_37 : f32 to vector<2x64x64xf32>
    %131 = arith.mulf %129, %130 : vector<2x64x64xf32>
    %132 = arith.addf %131, %9 : vector<2x64x64xf32>
    %cst_38 = arith.constant dense<0xFF800000> : vector<2x64xf32>
    %133 = vector.multi_reduction <maximumf>, %132, %cst_38 [2] : vector<2x64x64xf32> to vector<2x64xf32>
    %134 = vector.shape_cast %133 : vector<2x64xf32> to vector<2x64x1xf32>
    %135 = vector.broadcast %134 : vector<2x64x1xf32> to vector<2x64x64xf32>
    %136 = arith.subf %132, %135 : vector<2x64x64xf32>
    %137 = math.exp %136 : vector<2x64x64xf32>
    %cst_39 = arith.constant dense<0.000000e+00> : vector<2x64xf32>
    %138 = vector.multi_reduction <add>, %137, %cst_39 [2] : vector<2x64x64xf32> to vector<2x64xf32>
    %139 = vector.shape_cast %138 : vector<2x64xf32> to vector<2x64x1xf32>
    %140 = tpu.reciprocal %139 {approx = true} : vector<2x64x1xf32> -> vector<2x64x1xf32>
    %141 = vector.broadcast %140 : vector<2x64x1xf32> to vector<2x64x64xf32>
    %142 = arith.mulf %137, %141 : vector<2x64x64xf32>
    %143 = arith.truncf %142 : vector<2x64x64xf32> to vector<2x64x64xbf16>
    "tpu.trace_start"() <{level = 10 : i32, message = "bqk,bkd->bqd"}> : () -> ()
    %cst_40 = arith.constant dense<0.000000e+00> : vector<2x64x32xf32>
    %144 = tpu.matmul %143, %128, %cst_40 {dimension_numbers = #tpu.dot_dimension_numbers<[2], [1], [1], [2], [0, 0, 0, 1, 1, 2], [0], [0]>} : vector<2x64x64xbf16>, vector<2x64x32xbf16>, vector<2x64x32xf32> -> vector<2x64x32xf32>
    "tpu.trace_stop"() : () -> ()
    %145 = vector.shape_cast %144 : vector<2x64x32xf32> to vector<128x32xf32>
    %146 = arith.truncf %145 : vector<128x32xf32> to vector<128x32xbf16>
    %c0_41 = arith.constant 0 : index
    %c96 = arith.constant 96 : index
    %c0_42 = arith.constant 0 : index
    %147 = vector.load %arg6[%c0_41, %c96, %c0_42] : memref<1x128x128xbf16, #tpu.memory_space<vmem>>, vector<1x32x128xbf16>
    %148 = vector.shape_cast %147 : vector<1x32x128xbf16> to vector<32x128xbf16>
    %cst_43 = arith.constant dense<0.000000e+00> : vector<128x128xf32>
    %149 = tpu.matmul %146, %148, %cst_43 {dimension_numbers = #tpu.dot_dimension_numbers<[1], [0], [0], [1], [0, 0, 1, 1], [], []>} : vector<128x32xbf16>, vector<32x128xbf16>, vector<128x128xf32> -> vector<128x128xf32>
    %150 = arith.addf %119, %149 : vector<128x128xf32>
    %151 = vector.extract_strided_slice %5 {offsets = [3, 0], sizes = [1, 128], strides = [1, 1]} : vector<16x128xf32> to vector<1x128xf32>
    %152 = vector.broadcast %151 : vector<1x128xf32> to vector<128x128xf32>
    %153 = arith.addf %150, %152 : vector<128x128xf32>
    %154 = arith.addf %3, %153 : vector<128x128xf32>
    %155 = vector.extract_strided_slice %5 {offsets = [4, 0], sizes = [1, 128], strides = [1, 1]} : vector<16x128xf32> to vector<1x128xf32>
    %156 = vector.extract_strided_slice %5 {offsets = [5, 0], sizes = [1, 128], strides = [1, 1]} : vector<16x128xf32> to vector<1x128xf32>
    %cst_44 = arith.constant dense<0.000000e+00> : vector<128xf32>
    %157 = vector.multi_reduction <add>, %154, %cst_44 [1] : vector<128x128xf32> to vector<128xf32>
    %158 = vector.shape_cast %157 : vector<128xf32> to vector<128x1xf32>
    %cst_45 = arith.constant 1.280000e+02 : f32
    %159 = vector.broadcast %cst_45 : f32 to vector<128x1xf32>
    %160 = arith.divf %158, %159 : vector<128x1xf32>
    %161 = vector.broadcast %160 : vector<128x1xf32> to vector<128x128xf32>
    %162 = arith.subf %154, %161 : vector<128x128xf32>
    %163 = arith.mulf %162, %162 : vector<128x128xf32>
    %cst_46 = arith.constant dense<0.000000e+00> : vector<128xf32>
    %164 = vector.multi_reduction <add>, %163, %cst_46 [1] : vector<128x128xf32> to vector<128xf32>
    %165 = vector.shape_cast %164 : vector<128xf32> to vector<128x1xf32>
    %cst_47 = arith.constant 1.280000e+02 : f32
    %166 = vector.broadcast %cst_47 : f32 to vector<128x1xf32>
    %167 = arith.divf %165, %166 : vector<128x1xf32>
    %cst_48 = arith.constant 9.99999996E-13 : f32
    %168 = vector.broadcast %cst_48 : f32 to vector<128x1xf32>
    %169 = arith.addf %167, %168 : vector<128x1xf32>
    %170 = math.rsqrt %169 : vector<128x1xf32>
    %171 = vector.broadcast %170 : vector<128x1xf32> to vector<128x128xf32>
    %172 = arith.mulf %162, %171 : vector<128x128xf32>
    %173 = vector.broadcast %155 : vector<1x128xf32> to vector<128x128xf32>
    %174 = arith.mulf %172, %173 : vector<128x128xf32>
    %175 = vector.broadcast %156 : vector<1x128xf32> to vector<128x128xf32>
    %176 = arith.addf %174, %175 : vector<128x128xf32>
    %177 = vector.extract_strided_slice %5 {offsets = [6, 0], sizes = [1, 128], strides = [1, 1]} : vector<16x128xf32> to vector<1x128xf32>
    %178 = vector.extract_strided_slice %5 {offsets = [7, 0], sizes = [1, 128], strides = [1, 1]} : vector<16x128xf32> to vector<1x128xf32>
    %179 = tpu.concatenate %177, %178 in 1 : vector<1x128xf32>, vector<1x128xf32> -> vector<1x256xf32>
    %180 = arith.truncf %176 : vector<128x128xf32> to vector<128x128xbf16>
    %c0_49 = arith.constant 0 : index
    %c0_50 = arith.constant 0 : index
    %c0_51 = arith.constant 0 : index
    %181 = vector.load %arg7[%c0_49, %c0_50, %c0_51] : memref<1x128x256xbf16, #tpu.memory_space<vmem>>, vector<1x128x256xbf16>
    %182 = vector.shape_cast %181 : vector<1x128x256xbf16> to vector<128x256xbf16>
    %cst_52 = arith.constant dense<0.000000e+00> : vector<128x256xf32>
    %183 = tpu.matmul %180, %182, %cst_52 {dimension_numbers = #tpu.dot_dimension_numbers<[1], [0], [0], [1], [0, 0, 1, 1], [], []>} : vector<128x128xbf16>, vector<128x256xbf16>, vector<128x256xf32> -> vector<128x256xf32>
    %184 = vector.broadcast %179 : vector<1x256xf32> to vector<128x256xf32>
    %185 = arith.addf %183, %184 : vector<128x256xf32>
    %186 = arith.mulf %185, %185 : vector<128x256xf32>
    %187 = arith.mulf %185, %186 : vector<128x256xf32>
    %cst_53 = arith.constant 4.471500e-02 : f32
    %188 = vector.broadcast %cst_53 : f32 to vector<128x256xf32>
    %189 = arith.mulf %188, %187 : vector<128x256xf32>
    %190 = arith.addf %185, %189 : vector<128x256xf32>
    %cst_54 = arith.constant 0.797884583 : f32
    %191 = vector.broadcast %cst_54 : f32 to vector<128x256xf32>
    %192 = arith.mulf %191, %190 : vector<128x256xf32>
    %193 = math.tanh %192 : vector<128x256xf32>
    %cst_55 = arith.constant 1.000000e+00 : f32
    %194 = vector.broadcast %cst_55 : f32 to vector<128x256xf32>
    %195 = arith.addf %194, %193 : vector<128x256xf32>
    %cst_56 = arith.constant 5.000000e-01 : f32
    %196 = vector.broadcast %cst_56 : f32 to vector<128x256xf32>
    %197 = arith.mulf %196, %195 : vector<128x256xf32>
    %198 = arith.mulf %185, %197 : vector<128x256xf32>
    %199 = arith.truncf %198 : vector<128x256xf32> to vector<128x256xbf16>
    %c0_57 = arith.constant 0 : index
    %c0_58 = arith.constant 0 : index
    %c0_59 = arith.constant 0 : index
    %200 = vector.load %arg8[%c0_57, %c0_58, %c0_59] : memref<1x256x128xbf16, #tpu.memory_space<vmem>>, vector<1x256x128xbf16>
    %201 = vector.shape_cast %200 : vector<1x256x128xbf16> to vector<256x128xbf16>
    %cst_60 = arith.constant dense<0.000000e+00> : vector<128x128xf32>
    %202 = tpu.matmul %199, %201, %cst_60 {dimension_numbers = #tpu.dot_dimension_numbers<[1], [0], [0], [1], [0, 0, 1, 1], [], []>} : vector<128x256xbf16>, vector<256x128xbf16>, vector<128x128xf32> -> vector<128x128xf32>
    %203 = vector.extract_strided_slice %5 {offsets = [8, 0], sizes = [1, 128], strides = [1, 1]} : vector<16x128xf32> to vector<1x128xf32>
    %204 = vector.broadcast %203 : vector<1x128xf32> to vector<128x128xf32>
    %205 = arith.addf %202, %204 : vector<128x128xf32>
    %206 = arith.addf %176, %205 : vector<128x128xf32>
    %207 = vector.extract_strided_slice %5 {offsets = [9, 0], sizes = [1, 128], strides = [1, 1]} : vector<16x128xf32> to vector<1x128xf32>
    %208 = vector.extract_strided_slice %5 {offsets = [10, 0], sizes = [1, 128], strides = [1, 1]} : vector<16x128xf32> to vector<1x128xf32>
    %cst_61 = arith.constant dense<0.000000e+00> : vector<128xf32>
    %209 = vector.multi_reduction <add>, %206, %cst_61 [1] : vector<128x128xf32> to vector<128xf32>
    %210 = vector.shape_cast %209 : vector<128xf32> to vector<128x1xf32>
    %cst_62 = arith.constant 1.280000e+02 : f32
    %211 = vector.broadcast %cst_62 : f32 to vector<128x1xf32>
    %212 = arith.divf %210, %211 : vector<128x1xf32>
    %213 = vector.broadcast %212 : vector<128x1xf32> to vector<128x128xf32>
    %214 = arith.subf %206, %213 : vector<128x128xf32>
    %215 = arith.mulf %214, %214 : vector<128x128xf32>
    %cst_63 = arith.constant dense<0.000000e+00> : vector<128xf32>
    %216 = vector.multi_reduction <add>, %215, %cst_63 [1] : vector<128x128xf32> to vector<128xf32>
    %217 = vector.shape_cast %216 : vector<128xf32> to vector<128x1xf32>
    %cst_64 = arith.constant 1.280000e+02 : f32
    %218 = vector.broadcast %cst_64 : f32 to vector<128x1xf32>
    %219 = arith.divf %217, %218 : vector<128x1xf32>
    %cst_65 = arith.constant 9.99999996E-13 : f32
    %220 = vector.broadcast %cst_65 : f32 to vector<128x1xf32>
    %221 = arith.addf %219, %220 : vector<128x1xf32>
    %222 = math.rsqrt %221 : vector<128x1xf32>
    %223 = vector.broadcast %222 : vector<128x1xf32> to vector<128x128xf32>
    %224 = arith.mulf %214, %223 : vector<128x128xf32>
    %225 = vector.broadcast %207 : vector<1x128xf32> to vector<128x128xf32>
    %226 = arith.mulf %224, %225 : vector<128x128xf32>
    %227 = vector.broadcast %208 : vector<1x128xf32> to vector<128x128xf32>
    %228 = arith.addf %226, %227 : vector<128x128xf32>
    %c0_66 = arith.constant 0 : index
    %c0_67 = arith.constant 0 : index
    %229 = vector.load %arg11[%c0_66, %c0_67] : memref<128x128xf32, #tpu.memory_space<vmem>>, vector<128x128xf32>
    tpu.vector_store %arg11[%c0_66, %c0_67], %228 {strides = array<i32>} : memref<128x128xf32, #tpu.memory_space<vmem>>, vector<128x128xf32>,
    %c1_i32 = arith.constant 1 : i32
    %230 = arith.cmpi eq, %arg0, %c1_i32 : i32
    %231 = arith.extui %230 : i1 to i32
    %c0_i32_68 = arith.constant 0 : i32
    %232 = arith.cmpi ne, %231, %c0_i32_68 : i32
    scf.if %232 {
      %233 = vector.shape_cast %228 : vector<128x128xf32> to vector<2x64x128xf32>
      %234 = vector.extract_strided_slice %233 {offsets = [0, 0, 0], sizes = [2, 1, 128], strides = [1, 1, 1]} : vector<2x64x128xf32> to vector<2x1x128xf32>
      %235 = vector.shape_cast %234 : vector<2x1x128xf32> to vector<2x128xf32>
      %cst_69 = arith.constant 0.000000e+00 : f32
      %236 = vector.broadcast %cst_69 : f32 to vector<6x128xf32>
      %237 = tpu.concatenate %235, %236 in 0 : vector<2x128xf32>, vector<6x128xf32> -> vector<8x128xf32>
      %238 = arith.truncf %237 : vector<8x128xf32> to vector<8x128xbf16>
      %c0_70 = arith.constant 0 : index
      %c0_71 = arith.constant 0 : index
      %c0_72 = arith.constant 0 : index
      %239 = vector.load %arg9[%c0_70, %c0_71, %c0_72] : memref<2x128x128xbf16, #tpu.memory_space<vmem>>, vector<1x128x128xbf16>
      %240 = vector.shape_cast %239 : vector<1x128x128xbf16> to vector<128x128xbf16>
      %cst_73 = arith.constant dense<0.000000e+00> : vector<8x128xf32>
      %241 = tpu.matmul %238, %240, %cst_73 {dimension_numbers = #tpu.dot_dimension_numbers<[1], [0], [0], [1], [0, 0, 1, 1], [], []>} : vector<8x128xbf16>, vector<128x128xbf16>, vector<8x128xf32> -> vector<8x128xf32>
      %c2 = arith.constant 2 : index
      %c0_74 = arith.constant 0 : index
      %242 = vector.load %arg3[%c2, %c0_74] : memref<8x128xf32, #tpu.memory_space<vmem>>, vector<1x128xf32>
      %243 = vector.broadcast %242 : vector<1x128xf32> to vector<8x128xf32>
      %244 = arith.addf %241, %243 : vector<8x128xf32>
      %245 = math.tanh %244 : vector<8x128xf32>
      %246 = arith.truncf %245 : vector<8x128xf32> to vector<8x128xbf16>
      %c1 = arith.constant 1 : index
      %c0_75 = arith.constant 0 : index
      %c0_76 = arith.constant 0 : index
      %247 = vector.load %arg9[%c1, %c0_75, %c0_76] : memref<2x128x128xbf16, #tpu.memory_space<vmem>>, vector<1x128x128xbf16>
      %248 = vector.shape_cast %247 : vector<1x128x128xbf16> to vector<128x128xbf16>
      %cst_77 = arith.constant dense<0.000000e+00> : vector<8x128xf32>
      %249 = tpu.matmul %246, %248, %cst_77 {dimension_numbers = #tpu.dot_dimension_numbers<[1], [0], [0], [1], [0, 0, 1, 1], [], []>} : vector<8x128xbf16>, vector<128x128xbf16>, vector<8x128xf32> -> vector<8x128xf32>
      %c3 = arith.constant 3 : index
      %c0_78 = arith.constant 0 : index
      %250 = vector.load %arg3[%c3, %c0_78] : memref<8x128xf32, #tpu.memory_space<vmem>>, vector<1x128xf32>
      %251 = vector.broadcast %250 : vector<1x128xf32> to vector<8x128xf32>
      %252 = arith.addf %249, %251 : vector<8x128xf32>
      %c0_79 = arith.constant 0 : index
      %c0_80 = arith.constant 0 : index
      %253 = vector.load %arg10[%c0_79, %c0_80] : memref<8x128xf32, #tpu.memory_space<vmem>>, vector<8x128xf32>
      tpu.vector_store %arg10[%c0_79, %c0_80], %252 {strides = array<i32>} : memref<8x128xf32, #tpu.memory_space<vmem>>, vector<8x128xf32>,
    } else {
    }
    return
  }
  func.func @transform_0(%arg0: i32) -> (i32, i32) {
    %c0_i32 = arith.constant 0 : i32
    %c0_i32_0 = arith.constant 0 : i32
    %c0_i32_1 = arith.constant 0 : i32
    return %c0_i32, %c0_i32_0 : i32, i32
  }
  func.func @transform_1(%arg0: i32) -> (i32, i32) {
    %c0_i32 = arith.constant 0 : i32
    %c0_i32_0 = arith.constant 0 : i32
    %c0_i32_1 = arith.constant 0 : i32
    return %c0_i32, %c0_i32_0 : i32, i32
  }
  func.func @transform_2(%arg0: i32) -> (i32, i32) {
    %c0_i32 = arith.constant 0 : i32
    %c0_i32_0 = arith.constant 0 : i32
    %c0_i32_1 = arith.constant 0 : i32
    return %c0_i32, %c0_i32_0 : i32, i32
  }
  func.func @transform_3(%arg0: i32) -> (i32, i32, i32) {
    %c0_i32 = arith.constant 0 : i32
    %c0_i32_0 = arith.constant 0 : i32
    %c0_i32_1 = arith.constant 0 : i32
    return %arg0, %c0_i32, %c0_i32_0 : i32, i32, i32
  }
  func.func @transform_4(%arg0: i32) -> (i32, i32, i32) {
    %c0_i32 = arith.constant 0 : i32
    %c0_i32_0 = arith.constant 0 : i32
    %c0_i32_1 = arith.constant 0 : i32
    return %arg0, %c0_i32, %c0_i32_0 : i32, i32, i32
  }
  func.func @transform_5(%arg0: i32) -> (i32, i32, i32) {
    %c0_i32 = arith.constant 0 : i32
    %c0_i32_0 = arith.constant 0 : i32
    %c0_i32_1 = arith.constant 0 : i32
    return %arg0, %c0_i32, %c0_i32_0 : i32, i32, i32
  }
  func.func @transform_6(%arg0: i32) -> (i32, i32, i32) {
    %c0_i32 = arith.constant 0 : i32
    %c0_i32_0 = arith.constant 0 : i32
    %c0_i32_1 = arith.constant 0 : i32
    return %arg0, %c0_i32, %c0_i32_0 : i32, i32, i32
  }
  func.func @transform_7(%arg0: i32) -> (i32, i32, i32) {
    %c0_i32 = arith.constant 0 : i32
    %c0_i32_0 = arith.constant 0 : i32
    %c0_i32_1 = arith.constant 0 : i32
    return %arg0, %c0_i32, %c0_i32_0 : i32, i32, i32
  }
  func.func @transform_8(%arg0: i32) -> (i32, i32, i32) {
    %c0_i32 = arith.constant 0 : i32
    %c0_i32_0 = arith.constant 0 : i32
    %c0_i32_1 = arith.constant 0 : i32
    %c0_i32_2 = arith.constant 0 : i32
    return %c0_i32, %c0_i32_0, %c0_i32_1 : i32, i32, i32
  }
  func.func @transform_9(%arg0: i32) -> (i32, i32) {
    %c0_i32 = arith.constant 0 : i32
    %c0_i32_0 = arith.constant 0 : i32
    %c0_i32_1 = arith.constant 0 : i32
    return %c0_i32, %c0_i32_0 : i32, i32
  }
}

</mosaic_0001>

<llo_original>
// kernel: tpu_custom_call.1
$region0: #{tpu_custom_call.1}
  #allocation0 [shape = 'u32[]', space=smem, size = 0x4, offset = 0x4, fixed_abs, tag = 'smem constant byte address 0x4 - core index']
  #allocation1 [shape = 'u32[144,128]{1,0:T(1,128)}', space=vmem, size = 0x12000, scoped, tag = 'internal scratch']
  #allocation2 [shape = 'f32[128,128]{1,0:T(8,128)}', space=vmem, size = 0x10000, scoped, tag = 'scratch operand']
  %s0 = inlined_call_operand.hbm [shape: f32[128,128], index: 0, kind: input, shape index: {}]
  %s1 = inlined_call_operand.hbm [shape: f32[2,64], index: 1, kind: input, shape index: {}]
  %s2 = inlined_call_operand.hbm [shape: f32[8,128], index: 2, kind: input, shape index: {}]
  %s3 = inlined_call_operand.hbm [shape: f32[2,16,128], index: 3, kind: input, shape index: {}]
  %s4 = inlined_call_operand.hbm [shape: bf16[2,128,384], index: 4, kind: input, shape index: {}]
  %s5 = inlined_call_operand.hbm [shape: bf16[2,128,128], index: 5, kind: input, shape index: {}]
  %s6 = inlined_call_operand.hbm [shape: bf16[2,128,256], index: 6, kind: input, shape index: {}]
  %s7 = inlined_call_operand.hbm [shape: bf16[2,256,128], index: 7, kind: input, shape index: {}]
  %s8 = inlined_call_operand.hbm [shape: bf16[2,128,128], index: 8, kind: input, shape index: {}]
  %s9 = inlined_call_operand.hbm [shape: f32[8,128], index: 9, kind: output, shape index: {}]
  %s10 = sld [smem:[#allocation0]]
  $region113: #{tpu_custom_call.1} parent=0
    _
  %s12 = ssub.s32 1, %s10
  %s13 = scalar_select 0, %s12, %s10
  $region1: #{tpu_custom_call.1} parent=0
    #allocation3 [shape = 'u8[65536]{0}', space=vmem, size = 0x10000, scoped, tag = 'input window, operand 0, single buffered']
    #allocation4 [shape = 's32[2]{0}', space=sflag, size = 0x8, scoped, tag = 'scoped memory for tpu_custom_call.1']
    #allocation5 [shape = 's32[2]{0}', space=sflag, size = 0x8, scoped, tag = 'scoped memory for tpu_custom_call.1']
    #allocation6 [shape = 'u8[1024]{0}', space=vmem, size = 0x400, scoped, tag = 'input window, operand 1, single buffered']
    #allocation7 [shape = 's32[1]{0}', space=sflag, size = 0x4, scoped, tag = 'scoped memory for tpu_custom_call.1']
    #allocation8 [shape = 'u8[4096]{0}', space=vmem, size = 0x1000, scoped, tag = 'input window, operand 2, single buffered']
    #allocation9 [shape = 'u8[16384]{0}', space=vmem, size = 0x4000, scoped, tag = 'input window, operand 3']
    #allocation10 [shape = 's32[2]{0}', space=sflag, size = 0x8, scoped, tag = 'scoped memory for tpu_custom_call.1']
    #allocation11 [shape = 'u8[196608]{0}', space=vmem, size = 0x30000, scoped, tag = 'input window, operand 4']
    #allocation12 [shape = 'u8[65536]{0}', space=vmem, size = 0x10000, scoped, tag = 'input window, operand 5']
    #allocation13 [shape = 's32[2]{0}', space=sflag, size = 0x8, scoped, tag = 'scoped memory for tpu_custom_call.1']
    #allocation14 [shape = 'u8[131072]{0}', space=vmem, size = 0x20000, scoped, tag = 'input window, operand 6']
    #allocation15 [shape = 'u8[131072]{0}', space=vmem, size = 0x20000, scoped, tag = 'input window, operand 7']
    #allocation16 [shape = 's32[2]{0}', space=sflag, size = 0x8, scoped, tag = 'scoped memory for tpu_custom_call.1']
    #allocation17 [shape = 'u8[65536]{0}', space=vmem, size = 0x10000, scoped, tag = 'input window, operand 8, single buffered']
    #allocation18 [shape = 'u8[4096]{0}', space=vmem, size = 0x1000, scoped, tag = 'output window, operand 0, single buffered']
    %14 = vsyncpa [#allocation4], 0
    %15 = vsyncpa [#allocation7], 0
    %16 = vsyncpa [#allocation10], 0
    %s17 = scalar_lea.sflag [#allocation10], 1
    %18 = vsyncpa %s17, 0
    %19 = vsyncpa [#allocation13], 0
    %s20 = scalar_lea.sflag [#allocation13], 1
    %21 = vsyncpa %s20, 0
    %22 = vsyncpa [#allocation16], 0
    %s23 = scalar_lea.sflag [#allocation16], 1
    %24 = vsyncpa %s23, 0
    %25 = vsyncpa [#allocation5], 0
    loop: start=0, step=1, limit=4
    $region2: #{tpu_custom_call.1} parent=1 // loop_pre_header
      _
    $region3: #{tpu_custom_call.1} parent=1 // loop_header
      %s27 = sphi 0, %s31
      %p28 = scmp.ge.s32.totalorder %s27, 4
      %s35 = sphi 0, %s35
      %s37 = sphi 0, %s35
      %s38 = sphi 0, %s37
      %s52 = sphi 0, %s38
      %s56 = sphi 0, %s56
      %s58 = sphi 0, %s56
      %s59 = sphi 0, %s58
      %s73 = sphi 0, %s59
      %s77 = sphi 0, %s77
      %s79 = sphi 0, %s77
      %s80 = sphi 0, %s79
      %s94 = sphi 0, %s80
      %s100 = sphi 0, %s102
      %s103 = sphi 0, %s100
      %s104 = sphi 0, %s103
      %s120 = sphi 0, %s104
      %s126 = sphi 0, %s128
      %s129 = sphi 0, %s126
      %s130 = sphi 0, %s129
      %s146 = sphi 0, %s130
      %s152 = sphi 0, %s154
      %s155 = sphi 0, %s152
      %s156 = sphi 0, %s155
      %s172 = sphi 0, %s156
      %s178 = sphi 0, %s180
      %s181 = sphi 0, %s178
      %s182 = sphi 0, %s181
      %s198 = sphi 0, %s182
      %s204 = sphi 0, %s206
      %s207 = sphi 0, %s204
      %s208 = sphi 0, %s207
      %s224 = sphi 0, %s208
      %s228 = sphi 0, %s228
      %s230 = sphi 0, %s228
      %s231 = sphi 0, %s230
      %s245 = sphi 0, %s231
      %s249 = sphi 0, %s249
      %s251 = sphi 0, %s249
      %s252 = sphi 0, %s251
      %s266 = sphi 0, %s252
    $region4: #{tpu_custom_call.1} parent=1 // loop_header_branch
      %30 = sbr.rel (%p28) target = $region8
    $region5: #{tpu_custom_call.1} parent=1 // loop_body
      %s32 = ssub.s32 %s27, 1
      %s33 = ssub.s32 %s27, 2
      %s34 = sadd.s32 %s27, 1
      %s36 = sadd.s32 %s35, 1
      %p39 = scmp.eq.s32.totalorder %s27, 1
      %p40 = scmp.ne.s32.totalorder %s35, %s37
      %p41 = scmp.eq.s32.totalorder %s27, 0
      %p42 = por %p40, %p41
      %p43 = scmp.ne.s32.totalorder %s35, %s37
      %p44 = scmp.eq.s32.totalorder %s32, 1
      %p45 = por %p43, %p44
      %p46 = scmp.ne.s32.totalorder %s37, %s38
      %p47 = scmp.eq.s32.totalorder %s32, 0
      %p48 = por %p46, %p47
      %p49 = scmp.ne.s32.totalorder %s37, %s38
      %p50 = scmp.eq.s32.totalorder %s33, 1
      %p51 = por %p49, %p50
      %p53 = scmp.ne.s32.totalorder %s38, %s52
      %p54 = scmp.eq.s32.totalorder %s33, 0
      %p55 = por %p53, %p54
      %s57 = sadd.s32 %s56, 1
      %p60 = scmp.eq.s32.totalorder %s27, 1
      %p61 = scmp.ne.s32.totalorder %s56, %s58
      %p62 = scmp.eq.s32.totalorder %s27, 0
      %p63 = por %p61, %p62
      %p64 = scmp.ne.s32.totalorder %s56, %s58
      %p65 = scmp.eq.s32.totalorder %s32, 1
      %p66 = por %p64, %p65
      %p67 = scmp.ne.s32.totalorder %s58, %s59
      %p68 = scmp.eq.s32.totalorder %s32, 0
      %p69 = por %p67, %p68
      %p70 = scmp.ne.s32.totalorder %s58, %s59
      %p71 = scmp.eq.s32.totalorder %s33, 1
      %p72 = por %p70, %p71
      %p74 = scmp.ne.s32.totalorder %s59, %s73
      %p75 = scmp.eq.s32.totalorder %s33, 0
      %p76 = por %p74, %p75
      %s78 = sadd.s32 %s77, 1
      %p81 = scmp.eq.s32.totalorder %s27, 1
      %p82 = scmp.ne.s32.totalorder %s77, %s79
      %p83 = scmp.eq.s32.totalorder %s27, 0
      %p84 = por %p82, %p83
      %p85 = scmp.ne.s32.totalorder %s77, %s79
      %p86 = scmp.eq.s32.totalorder %s32, 1
      %p87 = por %p85, %p86
      %p88 = scmp.ne.s32.totalorder %s79, %s80
      %p89 = scmp.eq.s32.totalorder %s32, 0
      %p90 = por %p88, %p89
      %p91 = scmp.ne.s32.totalorder %s79, %s80
      %p92 = scmp.eq.s32.totalorder %s33, 1
      %p93 = por %p91, %p92
      %p95 = scmp.ne.s32.totalorder %s80, %s94
      %p96 = scmp.eq.s32.totalorder %s33, 0
      %p97 = por %p95, %p96
      %s98 = ssub.s32 %s27, %s34
      %p99 = scmp.eq.s32.totalorder %s98, 0
      %s101 = sadd.s32 %s100, 1
      %s102 = scalar_select %p99, %s100, %s101
      %p105 = pneg %p99
      %p106 = scmp.eq.s32.totalorder %s27, 1
      %p107 = por %p105, %p106
      %p108 = scmp.ne.s32.totalorder %s100, %s103
      %p109 = scmp.eq.s32.totalorder %s27, 0
      %p110 = por %p108, %p109
      %p111 = scmp.ne.s32.totalorder %s100, %s103
      %p112 = scmp.eq.s32.totalorder %s32, 1
      %p113 = por %p111, %p112
      %p114 = scmp.ne.s32.totalorder %s103, %s104
      %p115 = scmp.eq.s32.totalorder %s32, 0
      %p116 = por %p114, %p115
      %p117 = scmp.ne.s32.totalorder %s103, %s104
      %p118 = scmp.eq.s32.totalorder %s33, 1
      %p119 = por %p117, %p118
      %p121 = scmp.ne.s32.totalorder %s104, %s120
      %p122 = scmp.eq.s32.totalorder %s33, 0
      %p123 = por %p121, %p122
      %s124 = ssub.s32 %s27, %s34
      %p125 = scmp.eq.s32.totalorder %s124, 0
      %s127 = sadd.s32 %s126, 1
      %s128 = scalar_select %p125, %s126, %s127
      %p131 = pneg %p125
      %p132 = scmp.eq.s32.totalorder %s27, 1
      %p133 = por %p131, %p132
      %p134 = scmp.ne.s32.totalorder %s126, %s129
      %p135 = scmp.eq.s32.totalorder %s27, 0
      %p136 = por %p134, %p135
      %p137 = scmp.ne.s32.totalorder %s126, %s129
      %p138 = scmp.eq.s32.totalorder %s32, 1
      %p139 = por %p137, %p138
      %p140 = scmp.ne.s32.totalorder %s129, %s130
      %p141 = scmp.eq.s32.totalorder %s32, 0
      %p142 = por %p140, %p141
      %p143 = scmp.ne.s32.totalorder %s129, %s130
      %p144 = scmp.eq.s32.totalorder %s33, 1
      %p145 = por %p143, %p144
      %p147 = scmp.ne.s32.totalorder %s130, %s146
      %p148 = scmp.eq.s32.totalorder %s33, 0
      %p149 = por %p147, %p148
      %s150 = ssub.s32 %s27, %s34
      %p151 = scmp.eq.s32.totalorder %s150, 0
      %s153 = sadd.s32 %s152, 1
      %s154 = scalar_select %p151, %s152, %s153
      %p157 = pneg %p151
      %p158 = scmp.eq.s32.totalorder %s27, 1
      %p159 = por %p157, %p158
      %p160 = scmp.ne.s32.totalorder %s152, %s155
      %p161 = scmp.eq.s32.totalorder %s27, 0
      %p162 = por %p160, %p161
      %p163 = scmp.ne.s32.totalorder %s152, %s155
      %p164 = scmp.eq.s32.totalorder %s32, 1
      %p165 = por %p163, %p164
      %p166 = scmp.ne.s32.totalorder %s155, %s156
      %p167 = scmp.eq.s32.totalorder %s32, 0
      %p168 = por %p166, %p167
      %p169 = scmp.ne.s32.totalorder %s155, %s156
      %p170 = scmp.eq.s32.totalorder %s33, 1
      %p171 = por %p169, %p170
      %p173 = scmp.ne.s32.totalorder %s156, %s172
      %p174 = scmp.eq.s32.totalorder %s33, 0
      %p175 = por %p173, %p174
      %s176 = ssub.s32 %s27, %s34
      %p177 = scmp.eq.s32.totalorder %s176, 0
      %s179 = sadd.s32 %s178, 1
      %s180 = scalar_select %p177, %s178, %s179
      %p183 = pneg %p177
      %p184 = scmp.eq.s32.totalorder %s27, 1
      %p185 = por %p183, %p184
      %p186 = scmp.ne.s32.totalorder %s178, %s181
      %p187 = scmp.eq.s32.totalorder %s27, 0
      %p188 = por %p186, %p187
      %p189 = scmp.ne.s32.totalorder %s178, %s181
      %p190 = scmp.eq.s32.totalorder %s32, 1
      %p191 = por %p189, %p190
      %p192 = scmp.ne.s32.totalorder %s181, %s182
      %p193 = scmp.eq.s32.totalorder %s32, 0
      %p194 = por %p192, %p193
      %p195 = scmp.ne.s32.totalorder %s181, %s182
      %p196 = scmp.eq.s32.totalorder %s33, 1
      %p197 = por %p195, %p196
      %p199 = scmp.ne.s32.totalorder %s182, %s198
      %p200 = scmp.eq.s32.totalorder %s33, 0
      %p201 = por %p199, %p200
      %s202 = ssub.s32 %s27, %s34
      %p203 = scmp.eq.s32.totalorder %s202, 0
      %s205 = sadd.s32 %s204, 1
      %s206 = scalar_select %p203, %s204, %s205
      %p209 = pneg %p203
      %p210 = scmp.eq.s32.totalorder %s27, 1
      %p211 = por %p209, %p210
      %p212 = scmp.ne.s32.totalorder %s204, %s207
      %p213 = scmp.eq.s32.totalorder %s27, 0
      %p214 = por %p212, %p213
      %p215 = scmp.ne.s32.totalorder %s204, %s207
      %p216 = scmp.eq.s32.totalorder %s32, 1
      %p217 = por %p215, %p216
      %p218 = scmp.ne.s32.totalorder %s207, %s208
      %p219 = scmp.eq.s32.totalorder %s32, 0
      %p220 = por %p218, %p219
      %p221 = scmp.ne.s32.totalorder %s207, %s208
      %p222 = scmp.eq.s32.totalorder %s33, 1
      %p223 = por %p221, %p222
      %p225 = scmp.ne.s32.totalorder %s208, %s224
      %p226 = scmp.eq.s32.totalorder %s33, 0
      %p227 = por %p225, %p226
      %s229 = sadd.s32 %s228, 1
      %p232 = scmp.eq.s32.totalorder %s27, 1
      %p233 = scmp.ne.s32.totalorder %s228, %s230
      %p234 = scmp.eq.s32.totalorder %s27, 0
      %p235 = por %p233, %p234
      %p236 = scmp.ne.s32.totalorder %s228, %s230
      %p237 = scmp.eq.s32.totalorder %s32, 1
      %p238 = por %p236, %p237
      %p239 = scmp.ne.s32.totalorder %s230, %s231
      %p240 = scmp.eq.s32.totalorder %s32, 0
      %p241 = por %p239, %p240
      %p242 = scmp.ne.s32.totalorder %s230, %s231
      %p243 = scmp.eq.s32.totalorder %s33, 1
      %p244 = por %p242, %p243
      %p246 = scmp.ne.s32.totalorder %s231, %s245
      %p247 = scmp.eq.s32.totalorder %s33, 0
      %p248 = por %p246, %p247
      %s250 = sadd.s32 %s249, 1
      %p253 = scmp.eq.s32.totalorder %s27, 1
      %p254 = scmp.ne.s32.totalorder %s249, %s251
      %p255 = scmp.eq.s32.totalorder %s27, 0
      %p256 = por %p254, %p255
      %p257 = scmp.ne.s32.totalorder %s249, %s251
      %p258 = scmp.eq.s32.totalorder %s32, 1
      %p259 = por %p257, %p258
      %p260 = scmp.ne.s32.totalorder %s251, %s252
      %p261 = scmp.eq.s32.totalorder %s32, 0
      %p262 = por %p260, %p261
      %p263 = scmp.ne.s32.totalorder %s251, %s252
      %p264 = scmp.eq.s32.totalorder %s33, 1
      %p265 = por %p263, %p264
      %p267 = scmp.ne.s32.totalorder %s252, %s266
      %p268 = scmp.eq.s32.totalorder %s33, 0
      %p269 = por %p267, %p268
      %p270 = scmp.le.s32.totalorder 1, %s27
      %p271 = scmp.lt.s32.totalorder %s27, 3
      %p272 = pnand %p270, %p271
      %p273 = pneg %p272
      // Predicated region
      $region9: #{tpu_custom_call.1} parent=5 // pred_check
        _
      $region10: #{tpu_custom_call.1} parent=5 // pred_check_branch
        %275 = sbr.rel (%p272) target = $region12
      $region11: #{tpu_custom_call.1} parent=5 // pred_region
        %s276 = ssub.s32 %s27, 1
        // Predicated region
        $region13: #{tpu_custom_call.1} parent=11 // pred_check
          %p277 = pneg %p48
        $region14: #{tpu_custom_call.1} parent=11 // pred_check_branch
          %279 = sbr.rel (%p277) target = $region16
        $region15: #{tpu_custom_call.1} parent=11 // pred_region
          %s281 = ssub.s32 2048, 2048
          %282 = vsyncadd [#allocation4], %s281
          %s283 = sshll.u32 [#allocation3], 4
          %s284 = int_to_ptr.vmem [resolvable:$true] %s283
          %289 = dma.hbm_to_vmem [thread:$0]  %s0, 2048, %s284, [#allocation4], 128, 128, 8
        $region16: #{tpu_custom_call.1} parent=11 // pred_fallthru
          _
        // Predicated region
        $region17: #{tpu_custom_call.1} parent=11 // pred_check
          %p290 = pneg %p69
        $region18: #{tpu_custom_call.1} parent=11 // pred_check_branch
          %292 = sbr.rel (%p290) target = $region20
        $region19: #{tpu_custom_call.1} parent=11 // pred_region
          %s294 = ssub.s32 32, 32
          %295 = vsyncadd [#allocation7], %s294
          %s297 = sshll.u32 [#allocation6], 4
          %s298 = int_to_ptr.vmem [resolvable:$true] %s297
          %300 = dma.hbm_to_vmem [thread:$0]  %s1, 32, %s298, [#allocation7]
        $region20: #{tpu_custom_call.1} parent=11 // pred_fallthru
          _
        // Predicated region
        $region21: #{tpu_custom_call.1} parent=11 // pred_check
          %p301 = pneg %p90
        $region22: #{tpu_custom_call.1} parent=11 // pred_check_branch
          %303 = sbr.rel (%p301) target = $region24
        $region23: #{tpu_custom_call.1} parent=11 // pred_region
          %s305 = ssub.s32 128, 128
          %306 = vsyncadd [#allocation7], %s305
          %s308 = sshll.u32 [#allocation8], 4
          %s309 = int_to_ptr.vmem [resolvable:$true] %s308
          %311 = dma.hbm_to_vmem [thread:$0]  %s2, 128, %s309, [#allocation7]
        $region24: #{tpu_custom_call.1} parent=11 // pred_fallthru
          _
        // Predicated region
        $region25: #{tpu_custom_call.1} parent=11 // pred_check
          %p312 = pneg %p241
        $region26: #{tpu_custom_call.1} parent=11 // pred_check_branch
          %314 = sbr.rel (%p312) target = $region28
        $region27: #{tpu_custom_call.1} parent=11 // pred_region
          %s316 = ssub.s32 2048, 2048
          %317 = vsyncadd [#allocation16], %s316
          %s318 = sshll.u32 [#allocation17], 4
          %s319 = int_to_ptr.vmem [resolvable:$true] %s318
          %324 = dma.hbm_to_vmem [thread:$0]  %s8, 2048, %s319, [#allocation16], 64, 64, 4
        $region28: #{tpu_custom_call.1} parent=11 // pred_fallthru
          _
      $region12: #{tpu_custom_call.1} parent=5 // pred_fallthru
        _
      %p325 = scmp.lt.s32.totalorder %s27, 2
      // Predicated region
      $region29: #{tpu_custom_call.1} parent=5 // pred_check
        %p326 = pneg %p325
      $region30: #{tpu_custom_call.1} parent=5 // pred_check_branch
        %328 = sbr.rel (%p326) target = $region32
      $region31: #{tpu_custom_call.1} parent=5 // pred_region
        // Predicated region
        $region33: #{tpu_custom_call.1} parent=31 // pred_check
          %p329 = pneg %p110
        $region34: #{tpu_custom_call.1} parent=31 // pred_check_branch
          %331 = sbr.rel (%p329) target = $region36
        $region35: #{tpu_custom_call.1} parent=31 // pred_region
          %s332 = sand.u32 %s27, 1
          %s333 = scalar_lea.sflag [#allocation10], %s332
          %s334 = sand.u32 %s100, 1
          %s335 = smul.addr %s334, 16
          %s336 = scalar_lea.vmem [#allocation9], %s335
          %s338 = ssub.s32 256, 256
          %339 = vsyncadd %s333, %s338
          %s340 = smul.addr %s27, 2
          %s341 = smul.addr %s340, 128
          %s342 = scalar_lea.hbm %s3, %s341
          %s343 = sshll.u32 %s336, 4
          %s344 = int_to_ptr.vmem [resolvable:$true] %s343
          %349 = dma.hbm_to_vmem [thread:$0]  %s342, 256, %s344, %s333, 128, 128, 8
        $region36: #{tpu_custom_call.1} parent=31 // pred_fallthru
          _
        // Predicated region
        $region37: #{tpu_custom_call.1} parent=31 // pred_check
          %p350 = pneg %p136
        $region38: #{tpu_custom_call.1} parent=31 // pred_check_branch
          %352 = sbr.rel (%p350) target = $region40
        $region39: #{tpu_custom_call.1} parent=31 // pred_region
          %s353 = sand.u32 %s27, 1
          %s354 = scalar_lea.sflag [#allocation10], %s353
          %s355 = sand.u32 %s126, 1
          %s356 = smul.addr %s355, 192
          %s357 = scalar_lea.vmem [#allocation11], %s356
          %s359 = ssub.s32 3072, 3072
          %360 = vsyncadd %s354, %s359
          %s361 = smul.addr %s27, 48
          %s362 = smul.addr %s361, 64
          %s363 = scalar_lea.hbm %s4, %s362
          %s364 = sshll.u32 %s357, 4
          %s365 = int_to_ptr.vmem [resolvable:$true] %s364
          %370 = dma.hbm_to_vmem [thread:$0]  %s363, 3072, %s365, %s354, 192, 192, 12
        $region40: #{tpu_custom_call.1} parent=31 // pred_fallthru
          _
        // Predicated region
        $region41: #{tpu_custom_call.1} parent=31 // pred_check
          %p371 = pneg %p162
        $region42: #{tpu_custom_call.1} parent=31 // pred_check_branch
          %373 = sbr.rel (%p371) target = $region44
        $region43: #{tpu_custom_call.1} parent=31 // pred_region
          %s374 = sand.u32 %s27, 1
          %s375 = scalar_lea.sflag [#allocation13], %s374
          %s376 = sand.u32 %s152, 1
          %s377 = smul.addr %s376, 64
          %s378 = scalar_lea.vmem [#allocation12], %s377
          %s380 = ssub.s32 1024, 1024
          %381 = vsyncadd %s375, %s380
          %s382 = smul.addr %s27, 16
          %s383 = smul.addr %s382, 64
          %s384 = scalar_lea.hbm %s5, %s383
          %s385 = sshll.u32 %s378, 4
          %s386 = int_to_ptr.vmem [resolvable:$true] %s385
          %391 = dma.hbm_to_vmem [thread:$0]  %s384, 1024, %s386, %s375, 64, 64, 4
        $region44: #{tpu_custom_call.1} parent=31 // pred_fallthru
          _
        // Predicated region
        $region45: #{tpu_custom_call.1} parent=31 // pred_check
          %p392 = pneg %p188
        $region46: #{tpu_custom_call.1} parent=31 // pred_check_branch
          %394 = sbr.rel (%p392) target = $region48
        $region47: #{tpu_custom_call.1} parent=31 // pred_region
          %s395 = sand.u32 %s27, 1
          %s396 = scalar_lea.sflag [#allocation13], %s395
          %s397 = sand.u32 %s178, 1
          %s398 = smul.addr %s397, 128
          %s399 = scalar_lea.vmem [#allocation14], %s398
          %s401 = ssub.s32 2048, 2048
          %402 = vsyncadd %s396, %s401
          %s403 = smul.addr %s27, 32
          %s404 = smul.addr %s403, 64
          %s405 = scalar_lea.hbm %s6, %s404
          %s406 = sshll.u32 %s399, 4
          %s407 = int_to_ptr.vmem [resolvable:$true] %s406
          %412 = dma.hbm_to_vmem [thread:$0]  %s405, 2048, %s407, %s396, 128, 128, 8
        $region48: #{tpu_custom_call.1} parent=31 // pred_fallthru
          _
        // Predicated region
        $region49: #{tpu_custom_call.1} parent=31 // pred_check
          %p413 = pneg %p214
        $region50: #{tpu_custom_call.1} parent=31 // pred_check_branch
          %415 = sbr.rel (%p413) target = $region52
        $region51: #{tpu_custom_call.1} parent=31 // pred_region
          %s416 = sand.u32 %s27, 1
          %s417 = scalar_lea.sflag [#allocation16], %s416
          %s418 = sand.u32 %s204, 1
          %s419 = smul.addr %s418, 128
          %s420 = scalar_lea.vmem [#allocation15], %s419
          %s422 = ssub.s32 2048, 2048
          %423 = vsyncadd %s417, %s422
          %s424 = smul.addr %s27, 32
          %s425 = smul.addr %s424, 64
          %s426 = scalar_lea.hbm %s7, %s425
          %s427 = sshll.u32 %s420, 4
          %s428 = int_to_ptr.vmem [resolvable:$true] %s427
          %433 = dma.hbm_to_vmem [thread:$0]  %s426, 2048, %s428, %s417, 64, 64, 4
        $region52: #{tpu_custom_call.1} parent=31 // pred_fallthru
          _
      $region32: #{tpu_custom_call.1} parent=5 // pred_fallthru
        _
      %p434 = scmp.le.s32.totalorder 1, %s27
      %p435 = scmp.lt.s32.totalorder %s27, 3
      %p436 = pnand %p434, %p435
      %p437 = pneg %p436
      // Predicated region
      $region53: #{tpu_custom_call.1} parent=5 // pred_check
        _
      $region54: #{tpu_custom_call.1} parent=5 // pred_check_branch
        %439 = sbr.rel (%p436) target = $region56
      $region55: #{tpu_custom_call.1} parent=5 // pred_region
        %s440 = ssub.s32 %s27, 1
        // Predicated region
        $region57: #{tpu_custom_call.1} parent=55 // pred_check
          %p441 = pneg %p48
        $region58: #{tpu_custom_call.1} parent=55 // pred_check_branch
          %443 = sbr.rel (%p441) target = $region60
        $region59: #{tpu_custom_call.1} parent=55 // pred_region
          %444 = dma.done [#allocation4], 2048
        $region60: #{tpu_custom_call.1} parent=55 // pred_fallthru
          _
        // Predicated region
        $region61: #{tpu_custom_call.1} parent=55 // pred_check
          %p445 = pneg %p69
        $region62: #{tpu_custom_call.1} parent=55 // pred_check_branch
          %447 = sbr.rel (%p445) target = $region64
        $region63: #{tpu_custom_call.1} parent=55 // pred_region
          %448 = dma.done [#allocation7], 32
        $region64: #{tpu_custom_call.1} parent=55 // pred_fallthru
          _
        // Predicated region
        $region65: #{tpu_custom_call.1} parent=55 // pred_check
          %p449 = pneg %p90
        $region66: #{tpu_custom_call.1} parent=55 // pred_check_branch
          %451 = sbr.rel (%p449) target = $region68
        $region67: #{tpu_custom_call.1} parent=55 // pred_region
          %452 = dma.done [#allocation7], 128
        $region68: #{tpu_custom_call.1} parent=55 // pred_fallthru
          _
        %s453 = sand.u32 %s32, 1
        %s454 = scalar_lea.sflag [#allocation10], %s453
        %s455 = sand.u32 %s103, 1
        %s456 = smul.addr %s455, 16
        %s457 = scalar_lea.vmem [#allocation9], %s456
        // Predicated region
        $region69: #{tpu_custom_call.1} parent=55 // pred_check
          %p458 = pneg %p116
        $region70: #{tpu_custom_call.1} parent=55 // pred_check_branch
          %460 = sbr.rel (%p458) target = $region72
        $region71: #{tpu_custom_call.1} parent=55 // pred_region
          %461 = dma.done %s454, 256
        $region72: #{tpu_custom_call.1} parent=55 // pred_fallthru
          _
        %s462 = sand.u32 %s32, 1
        %s463 = scalar_lea.sflag [#allocation10], %s462
        %s464 = sand.u32 %s129, 1
        %s465 = smul.addr %s464, 192
        %s466 = scalar_lea.vmem [#allocation11], %s465
        // Predicated region
        $region73: #{tpu_custom_call.1} parent=55 // pred_check
          %p467 = pneg %p142
        $region74: #{tpu_custom_call.1} parent=55 // pred_check_branch
          %469 = sbr.rel (%p467) target = $region76
        $region75: #{tpu_custom_call.1} parent=55 // pred_region
          %470 = dma.done %s463, 3072
        $region76: #{tpu_custom_call.1} parent=55 // pred_fallthru
          _
        %s471 = sand.u32 %s32, 1
        %s472 = scalar_lea.sflag [#allocation13], %s471
        %s473 = sand.u32 %s155, 1
        %s474 = smul.addr %s473, 64
        %s475 = scalar_lea.vmem [#allocation12], %s474
        // Predicated region
        $region77: #{tpu_custom_call.1} parent=55 // pred_check
          %p476 = pneg %p168
        $region78: #{tpu_custom_call.1} parent=55 // pred_check_branch
          %478 = sbr.rel (%p476) target = $region80
        $region79: #{tpu_custom_call.1} parent=55 // pred_region
          %479 = dma.done %s472, 1024
        $region80: #{tpu_custom_call.1} parent=55 // pred_fallthru
          _
        %s480 = sand.u32 %s32, 1
        %s481 = scalar_lea.sflag [#allocation13], %s480
        %s482 = sand.u32 %s181, 1
        %s483 = smul.addr %s482, 128
        %s484 = scalar_lea.vmem [#allocation14], %s483
        // Predicated region
        $region81: #{tpu_custom_call.1} parent=55 // pred_check
          %p485 = pneg %p194
        $region82: #{tpu_custom_call.1} parent=55 // pred_check_branch
          %487 = sbr.rel (%p485) target = $region84
        $region83: #{tpu_custom_call.1} parent=55 // pred_region
          %488 = dma.done %s481, 2048
        $region84: #{tpu_custom_call.1} parent=55 // pred_fallthru
          _
        %s489 = sand.u32 %s32, 1
        %s490 = scalar_lea.sflag [#allocation16], %s489
        %s491 = sand.u32 %s207, 1
        %s492 = smul.addr %s491, 128
        %s493 = scalar_lea.vmem [#allocation15], %s492
        // Predicated region
        $region85: #{tpu_custom_call.1} parent=55 // pred_check
          %p494 = pneg %p220
        $region86: #{tpu_custom_call.1} parent=55 // pred_check_branch
          %496 = sbr.rel (%p494) target = $region88
        $region87: #{tpu_custom_call.1} parent=55 // pred_region
          %497 = dma.done %s490, 2048
        $region88: #{tpu_custom_call.1} parent=55 // pred_fallthru
          _
        // Predicated region
        $region89: #{tpu_custom_call.1} parent=55 // pred_check
          %p498 = pneg %p241
        $region90: #{tpu_custom_call.1} parent=55 // pred_check_branch
          %500 = sbr.rel (%p498) target = $region92
        $region91: #{tpu_custom_call.1} parent=55 // pred_region
          %501 = dma.done [#allocation16], 2048
        $region92: #{tpu_custom_call.1} parent=55 // pred_fallthru
          _
        %p502 = pneg %p48
        %p503 = pneg %p45
        %p504 = pneg %p69
        %p505 = pneg %p66
        %p506 = pneg %p90
        %p507 = pneg %p87
        %s508 = sand.u32 %s32, 1
        %s509 = scalar_lea.sflag [#allocation10], %s508
        %s510 = sand.u32 %s103, 1
        %s511 = smul.addr %s510, 16
        %s512 = scalar_lea.vmem [#allocation9], %s511
        %p513 = pneg %p116
        %p514 = pneg %p113
        %s515 = sand.u32 %s32, 1
        %s516 = scalar_lea.sflag [#allocation10], %s515
        %s517 = sand.u32 %s129, 1
        %s518 = smul.addr %s517, 192
        %s519 = scalar_lea.vmem [#allocation11], %s518
        %p520 = pneg %p142
        %p521 = pneg %p139
        %s522 = sand.u32 %s32, 1
        %s523 = scalar_lea.sflag [#allocation13], %s522
        %s524 = sand.u32 %s155, 1
        %s525 = smul.addr %s524, 64
        %s526 = scalar_lea.vmem [#allocation12], %s525
        %p527 = pneg %p168
        %p528 = pneg %p165
        %s529 = sand.u32 %s32, 1
        %s530 = scalar_lea.sflag [#allocation13], %s529
        %s531 = sand.u32 %s181, 1
        %s532 = smul.addr %s531, 128
        %s533 = scalar_lea.vmem [#allocation14], %s532
        %p534 = pneg %p194
        %p535 = pneg %p191
        %s536 = sand.u32 %s32, 1
        %s537 = scalar_lea.sflag [#allocation16], %s536
        %s538 = sand.u32 %s207, 1
        %s539 = smul.addr %s538, 128
        %s540 = scalar_lea.vmem [#allocation15], %s539
        %p541 = pneg %p220
        %p542 = pneg %p217
        %p543 = pneg %p241
        %p544 = pneg %p238
        %p545 = pneg %p262
        %p546 = pneg %p259
        %p548 = scmp.eq.s32.totalorder %s32, 0
        // Predicated region
        $region93: #{tpu_custom_call.1} parent=55 // pred_check
          %p549 = pneg %p548
        $region94: #{tpu_custom_call.1} parent=55 // pred_check_branch
          %551 = sbr.rel (%p549) target = $region96
        $region95: #{tpu_custom_call.1} parent=55 // pred_region
          %v552 = vld [vmem:[#allocation3] sm:$0xff]
          %v553 = vld [vmem:[#allocation3 + $0x8] sm:$0xff]
          %v554 = vld [vmem:[#allocation3 + $0x10] sm:$0xff]
          %v555 = vld [vmem:[#allocation3 + $0x18] sm:$0xff]
          %v556 = vld [vmem:[#allocation3 + $0x20] sm:$0xff]
          %v557 = vld [vmem:[#allocation3 + $0x28] sm:$0xff]
          %v558 = vld [vmem:[#allocation3 + $0x30] sm:$0xff]
          %v559 = vld [vmem:[#allocation3 + $0x38] sm:$0xff]
          %v560 = vld [vmem:[#allocation3 + $0x40] sm:$0xff]
          %v561 = vld [vmem:[#allocation3 + $0x48] sm:$0xff]
          %v562 = vld [vmem:[#allocation3 + $0x50] sm:$0xff]
          %v563 = vld [vmem:[#allocation3 + $0x58] sm:$0xff]
          %v564 = vld [vmem:[#allocation3 + $0x60] sm:$0xff]
          %v565 = vld [vmem:[#allocation3 + $0x68] sm:$0xff]
          %v566 = vld [vmem:[#allocation3 + $0x70] sm:$0xff]
          %v567 = vld [vmem:[#allocation3 + $0x78] sm:$0xff]
          %v568 = vld [vmem:[#allocation8] sm:$0x1]
          %v569 = vld [vmem:[#allocation8 + $0x1] sm:$0x1]
          %570 = vadd.xlane.f32.xlu0 %v552
          %v571 = vpop.xlane.xlu0 %570
          %572 = vadd.xlane.f32.xlu0 %v553
          %v573 = vpop.xlane.xlu0 %572
          %574 = vadd.xlane.f32.xlu0 %v554
          %v575 = vpop.xlane.xlu0 %574
          %576 = vadd.xlane.f32.xlu0 %v555
          %v577 = vpop.xlane.xlu0 %576
          %578 = vadd.xlane.f32.xlu0 %v556
          %v579 = vpop.xlane.xlu0 %578
          %580 = vadd.xlane.f32.xlu0 %v557
          %v581 = vpop.xlane.xlu0 %580
          %582 = vadd.xlane.f32.xlu0 %v558
          %v583 = vpop.xlane.xlu0 %582
          %584 = vadd.xlane.f32.xlu0 %v559
          %v585 = vpop.xlane.xlu0 %584
          %586 = vadd.xlane.f32.xlu0 %v560
          %v587 = vpop.xlane.xlu0 %586
          %588 = vadd.xlane.f32.xlu0 %v561
          %v589 = vpop.xlane.xlu0 %588
          %590 = vadd.xlane.f32.xlu0 %v562
          %v591 = vpop.xlane.xlu0 %590
          %592 = vadd.xlane.f32.xlu0 %v563
          %v593 = vpop.xlane.xlu0 %592
          %594 = vadd.xlane.f32.xlu0 %v564
          %v595 = vpop.xlane.xlu0 %594
          %596 = vadd.xlane.f32.xlu0 %v565
          %v597 = vpop.xlane.xlu0 %596
          %598 = vadd.xlane.f32.xlu0 %v566
          %v599 = vpop.xlane.xlu0 %598
          %600 = vadd.xlane.f32.xlu0 %v567
          %v601 = vpop.xlane.xlu0 %600
          %v602 = vrcp.pop 128.0
          %v603 = vmul.f32 %v571, %v602
          %v604 = vmul.f32 %v573, %v602
          %v605 = vmul.f32 %v575, %v602
          %v606 = vmul.f32 %v577, %v602
          %v607 = vmul.f32 %v579, %v602
          %v608 = vmul.f32 %v581, %v602
          %v609 = vmul.f32 %v583, %v602
          %v610 = vmul.f32 %v585, %v602
          %v611 = vmul.f32 %v587, %v602
          %v612 = vmul.f32 %v589, %v602
          %v613 = vmul.f32 %v591, %v602
          %v614 = vmul.f32 %v593, %v602
          %v615 = vmul.f32 %v595, %v602
          %v616 = vmul.f32 %v597, %v602
          %v617 = vmul.f32 %v599, %v602
          %v618 = vmul.f32 %v601, %v602
          %v619 = vsub.f32 %v552, %v603
          %v620 = vsub.f32 %v553, %v604
          %v621 = vsub.f32 %v554, %v605
          %v622 = vsub.f32 %v555, %v606
          %v623 = vsub.f32 %v556, %v607
          %v624 = vsub.f32 %v557, %v608
          %v625 = vsub.f32 %v558, %v609
          %v626 = vsub.f32 %v559, %v610
          %v627 = vsub.f32 %v560, %v611
          %v628 = vsub.f32 %v561, %v612
          %v629 = vsub.f32 %v562, %v613
          %v630 = vsub.f32 %v563, %v614
          %v631 = vsub.f32 %v564, %v615
          %v632 = vsub.f32 %v565, %v616
          %v633 = vsub.f32 %v566, %v617
          %v634 = vsub.f32 %v567, %v618
          %v635 = vmul.f32 %v619, %v619
          %v636 = vmul.f32 %v620, %v620
          %v637 = vmul.f32 %v621, %v621
          %v638 = vmul.f32 %v622, %v622
          %v639 = vmul.f32 %v623, %v623
          %v640 = vmul.f32 %v624, %v624
          %v641 = vmul.f32 %v625, %v625
          %v642 = vmul.f32 %v626, %v626
          %v643 = vmul.f32 %v627, %v627
          %v644 = vmul.f32 %v628, %v628
          %v645 = vmul.f32 %v629, %v629
          %v646 = vmul.f32 %v630, %v630
          %v647 = vmul.f32 %v631, %v631
          %v648 = vmul.f32 %v632, %v632
          %v649 = vmul.f32 %v633, %v633
          %v650 = vmul.f32 %v634, %v634
          %651 = vadd.xlane.f32.xlu0 %v635
          %v652 = vpop.xlane.xlu0 %651
          %653 = vadd.xlane.f32.xlu0 %v636
          %v654 = vpop.xlane.xlu0 %653
          %655 = vadd.xlane.f32.xlu0 %v637
          %v656 = vpop.xlane.xlu0 %655
          %657 = vadd.xlane.f32.xlu0 %v638
          %v658 = vpop.xlane.xlu0 %657
          %659 = vadd.xlane.f32.xlu0 %v639
          %v660 = vpop.xlane.xlu0 %659
          %661 = vadd.xlane.f32.xlu0 %v640
          %v662 = vpop.xlane.xlu0 %661
          %663 = vadd.xlane.f32.xlu0 %v641
          %v664 = vpop.xlane.xlu0 %663
          %665 = vadd.xlane.f32.xlu0 %v642
          %v666 = vpop.xlane.xlu0 %665
          %667 = vadd.xlane.f32.xlu0 %v643
          %v668 = vpop.xlane.xlu0 %667
          %669 = vadd.xlane.f32.xlu0 %v644
          %v670 = vpop.xlane.xlu0 %669
          %671 = vadd.xlane.f32.xlu0 %v645
          %v672 = vpop.xlane.xlu0 %671
          %673 = vadd.xlane.f32.xlu0 %v646
          %v674 = vpop.xlane.xlu0 %673
          %675 = vadd.xlane.f32.xlu0 %v647
          %v676 = vpop.xlane.xlu0 %675
          %677 = vadd.xlane.f32.xlu0 %v648
          %v678 = vpop.xlane.xlu0 %677
          %679 = vadd.xlane.f32.xlu0 %v649
          %v680 = vpop.xlane.xlu0 %679
          %681 = vadd.xlane.f32.xlu0 %v650
          %v682 = vpop.xlane.xlu0 %681
          %v683 = vmul.f32 %v652, %v602
          %v684 = vmul.f32 %v654, %v602
          %v685 = vmul.f32 %v656, %v602
          %v686 = vmul.f32 %v658, %v602
          %v687 = vmul.f32 %v660, %v602
          %v688 = vmul.f32 %v662, %v602
          %v689 = vmul.f32 %v664, %v602
          %v690 = vmul.f32 %v666, %v602
          %v691 = vmul.f32 %v668, %v602
          %v692 = vmul.f32 %v670, %v602
          %v693 = vmul.f32 %v672, %v602
          %v694 = vmul.f32 %v674, %v602
          %v695 = vmul.f32 %v676, %v602
          %v696 = vmul.f32 %v678, %v602
          %v697 = vmul.f32 %v680, %v602
          %v698 = vmul.f32 %v682, %v602
          %v699 = vadd.f32 %v683, 1e-12
          %v700 = vadd.f32 %v684, 1e-12
          %v701 = vadd.f32 %v685, 1e-12
          %v702 = vadd.f32 %v686, 1e-12
          %v703 = vadd.f32 %v687, 1e-12
          %v704 = vadd.f32 %v688, 1e-12
          %v705 = vadd.f32 %v689, 1e-12
          %v706 = vadd.f32 %v690, 1e-12
          %v707 = vadd.f32 %v691, 1e-12
          %v708 = vadd.f32 %v692, 1e-12
          %v709 = vadd.f32 %v693, 1e-12
          %v710 = vadd.f32 %v694, 1e-12
          %v711 = vadd.f32 %v695, 1e-12
          %v712 = vadd.f32 %v696, 1e-12
          %v713 = vadd.f32 %v697, 1e-12
          %v714 = vadd.f32 %v698, 1e-12
          %v715 = vrsqrt.pop %v699
          %v716 = vrsqrt.pop %v700
          %v717 = vrsqrt.pop %v701
          %v718 = vrsqrt.pop %v702
          %v719 = vrsqrt.pop %v703
          %v720 = vrsqrt.pop %v704
          %v721 = vrsqrt.pop %v705
          %v722 = vrsqrt.pop %v706
          %v723 = vrsqrt.pop %v707
          %v724 = vrsqrt.pop %v708
          %v725 = vrsqrt.pop %v709
          %v726 = vrsqrt.pop %v710
          %v727 = vrsqrt.pop %v711
          %v728 = vrsqrt.pop %v712
          %v729 = vrsqrt.pop %v713
          %v730 = vrsqrt.pop %v714
          %v731 = vmul.f32 %v619, %v715
          %v732 = vmul.f32 %v620, %v716
          %v733 = vmul.f32 %v621, %v717
          %v734 = vmul.f32 %v622, %v718
          %v735 = vmul.f32 %v623, %v719
          %v736 = vmul.f32 %v624, %v720
          %v737 = vmul.f32 %v625, %v721
          %v738 = vmul.f32 %v626, %v722
          %v739 = vmul.f32 %v627, %v723
          %v740 = vmul.f32 %v628, %v724
          %v741 = vmul.f32 %v629, %v725
          %v742 = vmul.f32 %v630, %v726
          %v743 = vmul.f32 %v631, %v727
          %v744 = vmul.f32 %v632, %v728
          %v745 = vmul.f32 %v633, %v729
          %v746 = vmul.f32 %v634, %v730
          %v747 = vlaneseq
          %v748 = vshrl.u32 %v747, 7
          %v749 = vsub.s32 0, %v748
          %v750 = vrot.slane %v568, %v749
          %v751 = vmul.f32 %v731, %v750
          %v752 = vmul.f32 %v732, %v750
          %v753 = vmul.f32 %v733, %v750
          %v754 = vmul.f32 %v734, %v750
          %v755 = vmul.f32 %v735, %v750
          %v756 = vmul.f32 %v736, %v750
          %v757 = vmul.f32 %v737, %v750
          %v758 = vmul.f32 %v738, %v750
          %v759 = vmul.f32 %v739, %v750
          %v760 = vmul.f32 %v740, %v750
          %v761 = vmul.f32 %v741, %v750
          %v762 = vmul.f32 %v742, %v750
          %v763 = vmul.f32 %v743, %v750
          %v764 = vmul.f32 %v744, %v750
          %v765 = vmul.f32 %v745, %v750
          %v766 = vmul.f32 %v746, %v750
          %v767 = vlaneseq
          %v768 = vshrl.u32 %v767, 7
          %v769 = vsub.s32 0, %v768
          %v770 = vrot.slane %v569, %v769
          %v771 = vadd.f32 %v751, %v770
          %v772 = vadd.f32 %v752, %v770
          %v773 = vadd.f32 %v753, %v770
          %v774 = vadd.f32 %v754, %v770
          %v775 = vadd.f32 %v755, %v770
          %v776 = vadd.f32 %v756, %v770
          %v777 = vadd.f32 %v757, %v770
          %v778 = vadd.f32 %v758, %v770
          %v779 = vadd.f32 %v759, %v770
          %v780 = vadd.f32 %v760, %v770
          %v781 = vadd.f32 %v761, %v770
          %v782 = vadd.f32 %v762, %v770
          %v783 = vadd.f32 %v763, %v770
          %v784 = vadd.f32 %v764, %v770
          %v785 = vadd.f32 %v765, %v770
          %v786 = vadd.f32 %v766, %v770
          %787 = vst [vmem:[#allocation2] sm:$0xff] %v771
          %788 = vst [vmem:[#allocation2 + $0x8] sm:$0xff] %v772
          %789 = vst [vmem:[#allocation2 + $0x10] sm:$0xff] %v773
          %790 = vst [vmem:[#allocation2 + $0x18] sm:$0xff] %v774
          %791 = vst [vmem:[#allocation2 + $0x20] sm:$0xff] %v775
          %792 = vst [vmem:[#allocation2 + $0x28] sm:$0xff] %v776
          %793 = vst [vmem:[#allocation2 + $0x30] sm:$0xff] %v777
          %794 = vst [vmem:[#allocation2 + $0x38] sm:$0xff] %v778
          %795 = vst [vmem:[#allocation2 + $0x40] sm:$0xff] %v779
          %796 = vst [vmem:[#allocation2 + $0x48] sm:$0xff] %v780
          %797 = vst [vmem:[#allocation2 + $0x50] sm:$0xff] %v781
          %798 = vst [vmem:[#allocation2 + $0x58] sm:$0xff] %v782
          %799 = vst [vmem:[#allocation2 + $0x60] sm:$0xff] %v783
          %800 = vst [vmem:[#allocation2 + $0x68] sm:$0xff] %v784
          %801 = vst [vmem:[#allocation2 + $0x70] sm:$0xff] %v785
          %802 = vst [vmem:[#allocation2 + $0x78] sm:$0xff] %v786
        $region96: #{tpu_custom_call.1} parent=55 // pred_fallthru
          _
        %v803 = vld [vmem:[#allocation2] sm:$0xff]
        %v804 = vld [vmem:[#allocation2 + $0x8] sm:$0xff]
        %v805 = vld [vmem:[#allocation2 + $0x10] sm:$0xff]
        %v806 = vld [vmem:[#allocation2 + $0x18] sm:$0xff]
        %v807 = vld [vmem:[#allocation2 + $0x20] sm:$0xff]
        %v808 = vld [vmem:[#allocation2 + $0x28] sm:$0xff]
        %v809 = vld [vmem:[#allocation2 + $0x30] sm:$0xff]
        %v810 = vld [vmem:[#allocation2 + $0x38] sm:$0xff]
        %v811 = vld [vmem:[#allocation2 + $0x40] sm:$0xff]
        %v812 = vld [vmem:[#allocation2 + $0x48] sm:$0xff]
        %v813 = vld [vmem:[#allocation2 + $0x50] sm:$0xff]
        %v814 = vld [vmem:[#allocation2 + $0x58] sm:$0xff]
        %v815 = vld [vmem:[#allocation2 + $0x60] sm:$0xff]
        %v816 = vld [vmem:[#allocation2 + $0x68] sm:$0xff]
        %v817 = vld [vmem:[#allocation2 + $0x70] sm:$0xff]
        %v818 = vld [vmem:[#allocation2 + $0x78] sm:$0xff]
        %v819 = vld [vmem:[%s457] sm:$0xff]
        %v820 = vld [vmem:[%s457 + $0x8] sm:$0xff]
        %v821 = vld [vmem:[#allocation6] sm:$0x3]
        %v824 = vunpack.c.l.s4 1966171168
        %v825 = vunpack.c.0.s8 %v824
        %v826 = vlaneseq
        %v827 = vshrl.u32 %v826, 7
        %v828 = vsub.s32 %v825, %v827
        %v829 = vrot.slane %v821, %v828
        %v830 = vcombine.high %v829, %v829
        %v832 = vunpack.c.l.s4 1966171168
        %v833 = vunpack.c.0.s8 %v832
        %v834 = vlaneseq
        %v835 = vshrl.u32 %v834, 7
        %v836 = vsub.s32 %v833, %v835
        %v837 = vrot.slane %v829, %v836
        %v839 = vunpack.c.l.s4 1966171168
        %v840 = vunpack.c.0.s8 %v839
        %v841 = vlaneseq
        %v842 = vshrl.u32 %v841, 7
        %v843 = vsub.s32 %v840, %v842
        %v844 = vrot.slane %v830, %v843
        %v845 = vlaneseq
        %v846 = vshrl.u32 %v845, 7
        %v847 = vsub.s32 0, %v846
        %v848 = vrot.slane %v837, %v847
        %v849 = vlaneseq
        %v850 = vshrl.u32 %v849, 7
        %v851 = vsub.s32 0, %v850
        %v852 = vrot.slane %v844, %v851
        %v855 = vpack.c.bf16 %v804, %v803
        %v856 = vpack.c.bf16 %v806, %v805
        %v857 = vpack.c.bf16 %v808, %v807
        %v858 = vpack.c.bf16 %v810, %v809
        %v859 = vpack.c.bf16 %v812, %v811
        %v860 = vpack.c.bf16 %v814, %v813
        %v861 = vpack.c.bf16 %v816, %v815
        %v862 = vpack.c.bf16 %v818, %v817
        %v863 = vld [vmem:[%s466] sm:$0xff]
        %v864 = vld [vmem:[%s466 + $0x8] sm:$0xf]
        %v865 = vld [vmem:[%s466 + $0xc] sm:$0xff]
        %v866 = vld [vmem:[%s466 + $0x14] sm:$0xf]
        %v867 = vld [vmem:[%s466 + $0x18] sm:$0xff]
        %v868 = vld [vmem:[%s466 + $0x20] sm:$0xf]
        %v869 = vld [vmem:[%s466 + $0x24] sm:$0xff]
        %v870 = vld [vmem:[%s466 + $0x2c] sm:$0xf]
        %v871 = vld [vmem:[%s466 + $0x30] sm:$0xff]
        %v872 = vld [vmem:[%s466 + $0x38] sm:$0xf]
        %v873 = vld [vmem:[%s466 + $0x3c] sm:$0xff]
        %v874 = vld [vmem:[%s466 + $0x44] sm:$0xf]
        %v875 = vld [vmem:[%s466 + $0x48] sm:$0xff]
        %v876 = vld [vmem:[%s466 + $0x50] sm:$0xf]
        %v877 = vld [vmem:[%s466 + $0x54] sm:$0xff]
        %v878 = vld [vmem:[%s466 + $0x5c] sm:$0xf]
        %v879 = vld [vmem:[%s466 + $0x60] sm:$0xff]
        %v880 = vld [vmem:[%s466 + $0x68] sm:$0xf]
        %v881 = vld [vmem:[%s466 + $0x6c] sm:$0xff]
        %v882 = vld [vmem:[%s466 + $0x74] sm:$0xf]
        %v883 = vld [vmem:[%s466 + $0x78] sm:$0xff]
        %v884 = vld [vmem:[%s466 + $0x80] sm:$0xf]
        %v885 = vld [vmem:[%s466 + $0x84] sm:$0xff]
        %v886 = vld [vmem:[%s466 + $0x8c] sm:$0xf]
        %v887 = vld [vmem:[%s466 + $0x90] sm:$0xff]
        %v888 = vld [vmem:[%s466 + $0x98] sm:$0xf]
        %v889 = vld [vmem:[%s466 + $0x9c] sm:$0xff]
        %v890 = vld [vmem:[%s466 + $0xa4] sm:$0xf]
        %v891 = vld [vmem:[%s466 + $0xa8] sm:$0xff]
        %v892 = vld [vmem:[%s466 + $0xb0] sm:$0xf]
        %v893 = vld [vmem:[%s466 + $0xb4] sm:$0xff]
        %v894 = vld [vmem:[%s466 + $0xbc] sm:$0xf]
        %v927 = vunpack.c.l.b16 %v863
        %v928 = vunpack.c.h.b16 %v863
        %v929 = vunpack.c.l.b16 %v864
        %v930 = vunpack.c.l.b16 %v865
        %v931 = vunpack.c.h.b16 %v865
        %v932 = vunpack.c.l.b16 %v866
        %v933 = vunpack.c.l.b16 %v867
        %v934 = vunpack.c.h.b16 %v867
        %v935 = vunpack.c.l.b16 %v868
        %v936 = vunpack.c.l.b16 %v869
        %v937 = vunpack.c.h.b16 %v869
        %v938 = vunpack.c.l.b16 %v870
        %v939 = vunpack.c.l.b16 %v871
        %v940 = vunpack.c.h.b16 %v871
        %v941 = vunpack.c.l.b16 %v872
        %v942 = vunpack.c.l.b16 %v873
        %v943 = vunpack.c.h.b16 %v873
        %v944 = vunpack.c.l.b16 %v874
        %v945 = vunpack.c.l.b16 %v875
        %v946 = vunpack.c.h.b16 %v875
        %v947 = vunpack.c.l.b16 %v876
        %v948 = vunpack.c.l.b16 %v877
        %v949 = vunpack.c.h.b16 %v877
        %v950 = vunpack.c.l.b16 %v878
        %v951 = vunpack.c.l.b16 %v879
        %v952 = vunpack.c.h.b16 %v879
        %v953 = vunpack.c.l.b16 %v880
        %v954 = vunpack.c.l.b16 %v881
        %v955 = vunpack.c.h.b16 %v881
        %v956 = vunpack.c.l.b16 %v882
        %v957 = vunpack.c.l.b16 %v883
        %v958 = vunpack.c.h.b16 %v883
        %v959 = vunpack.c.l.b16 %v884
        %v960 = vunpack.c.l.b16 %v885
        %v961 = vunpack.c.h.b16 %v885
        %v962 = vunpack.c.l.b16 %v886
        %v963 = vunpack.c.l.b16 %v887
        %v964 = vunpack.c.h.b16 %v887
        %v965 = vunpack.c.l.b16 %v888
        %v966 = vunpack.c.l.b16 %v889
        %v967 = vunpack.c.h.b16 %v889
        %v968 = vunpack.c.l.b16 %v890
        %v969 = vunpack.c.l.b16 %v891
        %v970 = vunpack.c.h.b16 %v891
        %v971 = vunpack.c.l.b16 %v892
        %v972 = vunpack.c.l.b16 %v893
        %v973 = vunpack.c.h.b16 %v893
        %v974 = vunpack.c.l.b16 %v894
        %v975 = vpack.c.b16 %v930, %v927
        %v976 = vpack.c.b16 %v931, %v928
        %v977 = vpack.c.b16 %v932, %v929
        %v978 = vpack.c.b16 %v936, %v933
        %v979 = vpack.c.b16 %v937, %v934
        %v980 = vpack.c.b16 %v938, %v935
        %v981 = vpack.c.b16 %v942, %v939
        %v982 = vpack.c.b16 %v943, %v940
        %v983 = vpack.c.b16 %v944, %v941
        %v984 = vpack.c.b16 %v948, %v945
        %v985 = vpack.c.b16 %v949, %v946
        %v986 = vpack.c.b16 %v950, %v947
        %v987 = vpack.c.b16 %v954, %v951
        %v988 = vpack.c.b16 %v955, %v952
        %v989 = vpack.c.b16 %v956, %v953
        %v990 = vpack.c.b16 %v960, %v957
        %v991 = vpack.c.b16 %v961, %v958
        %v992 = vpack.c.b16 %v962, %v959
        %v993 = vpack.c.b16 %v966, %v963
        %v994 = vpack.c.b16 %v967, %v964
        %v995 = vpack.c.b16 %v968, %v965
        %v996 = vpack.c.b16 %v972, %v969
        %v997 = vpack.c.b16 %v973, %v970
        %v998 = vpack.c.b16 %v974, %v971
        %1023 = vmatprep.subr.bf16.mxu0 %v997
        %1024 = vmatpush1.bf16.msra.mxu0 %v996
        %1025 = vmatprep.subr.bf16.mxu0 %v994
        %1026 = vmatpush1.bf16.msra.mxu0 %v993
        %1027 = vmatprep.subr.bf16.mxu0 %v991
        %1028 = vmatpush1.bf16.msra.mxu0 %v990
        %1029 = vmatprep.subr.bf16.mxu0 %v988
        %1030 = vmatpush1.bf16.msra.mxu0 %v987
        %1031 = vmatprep.subr.bf16.mxu0 %v985
        %1032 = vmatpush1.bf16.msra.mxu0 %v984
        %1033 = vmatprep.subr.bf16.mxu0 %v982
        %1034 = vmatpush1.bf16.msra.mxu0 %v981
        %1035 = vmatprep.subr.bf16.mxu0 %v979
        %1036 = vmatpush1.bf16.msra.mxu0 %v978
        %1037 = vmatprep.subr.bf16.mxu0 %v976
        %1038 = vmatpush1.bf16.msra.mxu0 %v975
        %1039 = vmatprep.subr.bf16.mxu0 0
        %1040 = vmatpush2.bf16.msra.mxu0 0
        %1041 = vmatprep.subr.bf16.mxu0 0
        %1042 = vmatpush2.bf16.msra.mxu0 0
        %1043 = vmatprep.subr.bf16.mxu0 0
        %1044 = vmatpush2.bf16.msra.mxu0 0
        %1045 = vmatprep.subr.bf16.mxu0 0
        %1046 = vmatpush2.bf16.msra.mxu0 0
        %1047 = vmatprep.subr.bf16.mxu0 0
        %1048 = vmatpush2.bf16.msra.mxu0 0
        %1049 = vmatprep.subr.bf16.mxu0 0
        %1050 = vmatpush2.bf16.msra.mxu0 0
        %1051 = vmatprep.subr.bf16.mxu0 0
        %1052 = vmatpush2.bf16.msra.mxu0 0
        %1053 = vmatprep.subr.bf16.mxu0 0
        %1054 = vmatpush2.bf16.msra.mxu0 0
        %1055 = vmatprep.mubr.bf16.mxu0 0
        %1056 = vmatmul.mubr.bf16.gmra.mxu0 %v855
        %v1057 = vpop.f32.mrf.mxu0
        %v1058 = vadd.f32 0.0, %v1057
        %v1059 = vpop.f32.mrf.mxu0
        %v1060 = vadd.f32 0.0, %v1059
        %v1061 = vpop.f32.mrf.mxu0
        %v1062 = vadd.f32 0.0, %v1061
        %v1063 = vpop.f32.mrf.mxu0
        %v1064 = vadd.f32 0.0, %v1063
        %1065 = vmatprep.mubr.bf16.mxu0 0
        %1066 = vmatmul.mubr.bf16.gmra.mxu0 %v856
        %v1067 = vpop.f32.mrf.mxu0
        %v1068 = vadd.f32 0.0, %v1067
        %v1069 = vpop.f32.mrf.mxu0
        %v1070 = vadd.f32 0.0, %v1069
        %v1071 = vpop.f32.mrf.mxu0
        %v1072 = vadd.f32 0.0, %v1071
        %v1073 = vpop.f32.mrf.mxu0
        %v1074 = vadd.f32 0.0, %v1073
        %1075 = vmatprep.mubr.bf16.mxu0 0
        %1076 = vmatmul.mubr.bf16.gmra.mxu0 %v857
        %v1077 = vpop.f32.mrf.mxu0
        %v1078 = vadd.f32 0.0, %v1077
        %v1079 = vpop.f32.mrf.mxu0
        %v1080 = vadd.f32 0.0, %v1079
        %v1081 = vpop.f32.mrf.mxu0
        %v1082 = vadd.f32 0.0, %v1081
        %v1083 = vpop.f32.mrf.mxu0
        %v1084 = vadd.f32 0.0, %v1083
        %1085 = vmatprep.mubr.bf16.mxu0 0
        %1086 = vmatmul.mubr.bf16.gmra.mxu0 %v858
        %v1087 = vpop.f32.mrf.mxu0
        %v1088 = vadd.f32 0.0, %v1087
        %v1089 = vpop.f32.mrf.mxu0
        %v1090 = vadd.f32 0.0, %v1089
        %v1091 = vpop.f32.mrf.mxu0
        %v1092 = vadd.f32 0.0, %v1091
        %v1093 = vpop.f32.mrf.mxu0
        %v1094 = vadd.f32 0.0, %v1093
        %1095 = vmatprep.mubr.bf16.mxu0 0
        %1096 = vmatmul.mubr.bf16.gmra.mxu0 %v859
        %v1097 = vpop.f32.mrf.mxu0
        %v1098 = vadd.f32 0.0, %v1097
        %v1099 = vpop.f32.mrf.mxu0
        %v1100 = vadd.f32 0.0, %v1099
        %v1101 = vpop.f32.mrf.mxu0
        %v1102 = vadd.f32 0.0, %v1101
        %v1103 = vpop.f32.mrf.mxu0
        %v1104 = vadd.f32 0.0, %v1103
        %1105 = vmatprep.mubr.bf16.mxu0 0
        %1106 = vmatmul.mubr.bf16.gmra.mxu0 %v860
        %v1107 = vpop.f32.mrf.mxu0
        %v1108 = vadd.f32 0.0, %v1107
        %v1109 = vpop.f32.mrf.mxu0
        %v1110 = vadd.f32 0.0, %v1109
        %v1111 = vpop.f32.mrf.mxu0
        %v1112 = vadd.f32 0.0, %v1111
        %v1113 = vpop.f32.mrf.mxu0
        %v1114 = vadd.f32 0.0, %v1113
        %1115 = vmatprep.mubr.bf16.mxu0 0
        %1116 = vmatmul.mubr.bf16.gmra.mxu0 %v861
        %v1117 = vpop.f32.mrf.mxu0
        %v1118 = vadd.f32 0.0, %v1117
        %v1119 = vpop.f32.mrf.mxu0
        %v1120 = vadd.f32 0.0, %v1119
        %v1121 = vpop.f32.mrf.mxu0
        %v1122 = vadd.f32 0.0, %v1121
        %v1123 = vpop.f32.mrf.mxu0
        %v1124 = vadd.f32 0.0, %v1123
        %1125 = vmatprep.mubr.bf16.mxu0 0
        %1126 = vmatmul.mubr.bf16.gmra.mxu0 %v862
        %v1127 = vpop.f32.mrf.mxu0
        %v1128 = vadd.f32 0.0, %v1127
        %v1129 = vpop.f32.mrf.mxu0
        %v1130 = vadd.f32 0.0, %v1129
        %v1131 = vpop.f32.mrf.mxu0
        %v1132 = vadd.f32 0.0, %v1131
        %v1133 = vpop.f32.mrf.mxu0
        %v1134 = vadd.f32 0.0, %v1133
        %1135 = vdwg.mxu0
        %1136 = vmatprep.subr.bf16.mxu0 0
        %1137 = vmatpush1.bf16.msra.mxu0 %v998
        %1138 = vmatprep.subr.bf16.mxu0 0
        %1139 = vmatpush1.bf16.msra.mxu0 %v995
        %1140 = vmatprep.subr.bf16.mxu0 0
        %1141 = vmatpush1.bf16.msra.mxu0 %v992
        %1142 = vmatprep.subr.bf16.mxu0 0
        %1143 = vmatpush1.bf16.msra.mxu0 %v989
        %1144 = vmatprep.subr.bf16.mxu0 0
        %1145 = vmatpush1.bf16.msra.mxu0 %v986
        %1146 = vmatprep.subr.bf16.mxu0 0
        %1147 = vmatpush1.bf16.msra.mxu0 %v983
        %1148 = vmatprep.subr.bf16.mxu0 0
        %1149 = vmatpush1.bf16.msra.mxu0 %v980
        %1150 = vmatprep.subr.bf16.mxu0 0
        %1151 = vmatpush1.bf16.msra.mxu0 %v977
        %1152 = vmatprep.subr.bf16.mxu0 0
        %1153 = vmatpush2.bf16.msra.mxu0 0
        %1154 = vmatprep.subr.bf16.mxu0 0
        %1155 = vmatpush2.bf16.msra.mxu0 0
        %1156 = vmatprep.subr.bf16.mxu0 0
        %1157 = vmatpush2.bf16.msra.mxu0 0
        %1158 = vmatprep.subr.bf16.mxu0 0
        %1159 = vmatpush2.bf16.msra.mxu0 0
        %1160 = vmatprep.subr.bf16.mxu0 0
        %1161 = vmatpush2.bf16.msra.mxu0 0
        %1162 = vmatprep.subr.bf16.mxu0 0
        %1163 = vmatpush2.bf16.msra.mxu0 0
        %1164 = vmatprep.subr.bf16.mxu0 0
        %1165 = vmatpush2.bf16.msra.mxu0 0
        %1166 = vmatprep.subr.bf16.mxu0 0
        %1167 = vmatpush2.bf16.msra.mxu0 0
        %1168 = vmatprep.mubr.bf16.mxu0 0
        %1169 = vmatmul.mubr.bf16.gmra.mxu0 %v855
        %v1170 = vpop.f32.mrf.mxu0
        %v1171 = vadd.f32 0.0, %v1170
        %v1172 = vpop.f32.mrf.mxu0
        %v1173 = vpop.f32.mrf.mxu0
        %v1174 = vadd.f32 0.0, %v1173
        %v1175 = vpop.f32.mrf.mxu0
        %1176 = vmatprep.mubr.bf16.mxu0 0
        %1177 = vmatmul.mubr.bf16.gmra.mxu0 %v856
        %v1178 = vpop.f32.mrf.mxu0
        %v1179 = vadd.f32 0.0, %v1178
        %v1180 = vpop.f32.mrf.mxu0
        %v1181 = vpop.f32.mrf.mxu0
        %v1182 = vadd.f32 0.0, %v1181
        %v1183 = vpop.f32.mrf.mxu0
        %1184 = vmatprep.mubr.bf16.mxu0 0
        %1185 = vmatmul.mubr.bf16.gmra.mxu0 %v857
        %v1186 = vpop.f32.mrf.mxu0
        %v1187 = vadd.f32 0.0, %v1186
        %v1188 = vpop.f32.mrf.mxu0
        %v1189 = vpop.f32.mrf.mxu0
        %v1190 = vadd.f32 0.0, %v1189
        %v1191 = vpop.f32.mrf.mxu0
        %1192 = vmatprep.mubr.bf16.mxu0 0
        %1193 = vmatmul.mubr.bf16.gmra.mxu0 %v858
        %v1194 = vpop.f32.mrf.mxu0
        %v1195 = vadd.f32 0.0, %v1194
        %v1196 = vpop.f32.mrf.mxu0
        %v1197 = vpop.f32.mrf.mxu0
        %v1198 = vadd.f32 0.0, %v1197
        %v1199 = vpop.f32.mrf.mxu0
        %1200 = vmatprep.mubr.bf16.mxu0 0
        %1201 = vmatmul.mubr.bf16.gmra.mxu0 %v859
        %v1202 = vpop.f32.mrf.mxu0
        %v1203 = vadd.f32 0.0, %v1202
        %v1204 = vpop.f32.mrf.mxu0
        %v1205 = vpop.f32.mrf.mxu0
        %v1206 = vadd.f32 0.0, %v1205
        %v1207 = vpop.f32.mrf.mxu0
        %1208 = vmatprep.mubr.bf16.mxu0 0
        %1209 = vmatmul.mubr.bf16.gmra.mxu0 %v860
        %v1210 = vpop.f32.mrf.mxu0
        %v1211 = vadd.f32 0.0, %v1210
        %v1212 = vpop.f32.mrf.mxu0
        %v1213 = vpop.f32.mrf.mxu0
        %v1214 = vadd.f32 0.0, %v1213
        %v1215 = vpop.f32.mrf.mxu0
        %1216 = vmatprep.mubr.bf16.mxu0 0
        %1217 = vmatmul.mubr.bf16.gmra.mxu0 %v861
        %v1218 = vpop.f32.mrf.mxu0
        %v1219 = vadd.f32 0.0, %v1218
        %v1220 = vpop.f32.mrf.mxu0
        %v1221 = vpop.f32.mrf.mxu0
        %v1222 = vadd.f32 0.0, %v1221
        %v1223 = vpop.f32.mrf.mxu0
        %1224 = vmatprep.mubr.bf16.mxu0 0
        %1225 = vmatmul.mubr.bf16.gmra.mxu0 %v862
        %v1226 = vpop.f32.mrf.mxu0
        %v1227 = vadd.f32 0.0, %v1226
        %v1228 = vpop.f32.mrf.mxu0
        %v1229 = vpop.f32.mrf.mxu0
        %v1230 = vadd.f32 0.0, %v1229
        %v1231 = vpop.f32.mrf.mxu0
        %1232 = vdwg.mxu0
        %v1233 = vlaneseq
        %v1234 = vshrl.u32 %v1233, 7
        %v1235 = vsub.s32 0, %v1234
        %v1236 = vrot.slane %v819, %v1235
        %v1237 = vadd.f32 %v1058, %v1236
        %v1238 = vadd.f32 %v1062, %v1236
        %v1239 = vadd.f32 %v1068, %v1236
        %v1240 = vadd.f32 %v1072, %v1236
        %v1241 = vadd.f32 %v1078, %v1236
        %v1242 = vadd.f32 %v1082, %v1236
        %v1243 = vadd.f32 %v1088, %v1236
        %v1244 = vadd.f32 %v1092, %v1236
        %v1245 = vadd.f32 %v1098, %v1236
        %v1246 = vadd.f32 %v1102, %v1236
        %v1247 = vadd.f32 %v1108, %v1236
        %v1248 = vadd.f32 %v1112, %v1236
        %v1249 = vadd.f32 %v1118, %v1236
        %v1250 = vadd.f32 %v1122, %v1236
        %v1251 = vadd.f32 %v1128, %v1236
        %v1252 = vadd.f32 %v1132, %v1236
        %v1253 = vlaneseq
        %v1254 = vshrl.u32 %v1253, 7
        %v1255 = vsub.s32 1, %v1254
        %v1256 = vrot.slane %v819, %v1255
        %v1257 = vadd.f32 %v1060, %v1256
        %v1258 = vadd.f32 %v1064, %v1256
        %v1259 = vadd.f32 %v1070, %v1256
        %v1260 = vadd.f32 %v1074, %v1256
        %v1261 = vadd.f32 %v1080, %v1256
        %v1262 = vadd.f32 %v1084, %v1256
        %v1263 = vadd.f32 %v1090, %v1256
        %v1264 = vadd.f32 %v1094, %v1256
        %v1265 = vadd.f32 %v1100, %v1256
        %v1266 = vadd.f32 %v1104, %v1256
        %v1267 = vadd.f32 %v1110, %v1256
        %v1268 = vadd.f32 %v1114, %v1256
        %v1269 = vadd.f32 %v1120, %v1256
        %v1270 = vadd.f32 %v1124, %v1256
        %v1271 = vadd.f32 %v1130, %v1256
        %v1272 = vadd.f32 %v1134, %v1256
        %v1273 = vlaneseq
        %v1274 = vshrl.u32 %v1273, 7
        %v1275 = vsub.s32 2, %v1274
        %v1276 = vrot.slane %v819, %v1275
        %v1277 = vadd.f32 %v1171, %v1276
        %v1278 = vadd.f32 %v1174, %v1276
        %v1279 = vadd.f32 %v1179, %v1276
        %v1280 = vadd.f32 %v1182, %v1276
        %v1281 = vadd.f32 %v1187, %v1276
        %v1282 = vadd.f32 %v1190, %v1276
        %v1283 = vadd.f32 %v1195, %v1276
        %v1284 = vadd.f32 %v1198, %v1276
        %v1285 = vadd.f32 %v1203, %v1276
        %v1286 = vadd.f32 %v1206, %v1276
        %v1287 = vadd.f32 %v1211, %v1276
        %v1288 = vadd.f32 %v1214, %v1276
        %v1289 = vadd.f32 %v1219, %v1276
        %v1290 = vadd.f32 %v1222, %v1276
        %v1291 = vadd.f32 %v1227, %v1276
        %v1292 = vadd.f32 %v1230, %v1276
        %v1293 = vpack.c.bf16 %v1238, %v1237
        %v1294 = vpack.c.bf16 %v1240, %v1239
        %v1295 = vpack.c.bf16 %v1242, %v1241
        %v1296 = vpack.c.bf16 %v1244, %v1243
        %v1297 = vpack.c.bf16 %v1246, %v1245
        %v1298 = vpack.c.bf16 %v1248, %v1247
        %v1299 = vpack.c.bf16 %v1250, %v1249
        %v1300 = vpack.c.bf16 %v1252, %v1251
        %v1301 = vpack.c.bf16 %v1258, %v1257
        %v1302 = vpack.c.bf16 %v1260, %v1259
        %v1303 = vpack.c.bf16 %v1262, %v1261
        %v1304 = vpack.c.bf16 %v1264, %v1263
        %v1305 = vpack.c.bf16 %v1266, %v1265
        %v1306 = vpack.c.bf16 %v1268, %v1267
        %v1307 = vpack.c.bf16 %v1270, %v1269
        %v1308 = vpack.c.bf16 %v1272, %v1271
        %v1309 = vpack.c.bf16 %v1278, %v1277
        %v1310 = vpack.c.bf16 %v1280, %v1279
        %v1311 = vpack.c.bf16 %v1282, %v1281
        %v1312 = vpack.c.bf16 %v1284, %v1283
        %v1313 = vpack.c.bf16 %v1286, %v1285
        %v1314 = vpack.c.bf16 %v1288, %v1287
        %v1315 = vpack.c.bf16 %v1290, %v1289
        %v1316 = vpack.c.bf16 %v1292, %v1291
        %vm1317 = vcmask 261120
        %v1319 = vsel %vm1317, %v1293, 0
        %v1322 = vsel %vm1317, %v1294, 0
        %v1325 = vsel %vm1317, %v1295, 0
        %v1328 = vsel %vm1317, %v1296, 0
        %v1331 = vsel %vm1317, %v1301, 0
        %v1334 = vsel %vm1317, %v1302, 0
        %v1337 = vsel %vm1317, %v1303, 0
        %v1340 = vsel %vm1317, %v1304, 0
        %1342 = vmatprep.subr.bf16.mxu0 0
        %1343 = vmatpush1.bf16.xpose.msra.mxu0 0
        %1344 = vmatprep.subr.bf16.mxu0 0
        %1345 = vmatpush1.bf16.xpose.msra.mxu0 0
        %1346 = vmatprep.subr.bf16.mxu0 0
        %1347 = vmatpush1.bf16.xpose.msra.mxu0 0
        %1348 = vmatprep.subr.bf16.mxu0 0
        %1349 = vmatpush1.bf16.xpose.msra.mxu0 0
        %1350 = vmatprep.subr.bf16.mxu0 0
        %1351 = vmatpush1.bf16.xpose.msra.mxu0 %v1340
        %1352 = vmatprep.subr.bf16.mxu0 0
        %1353 = vmatpush1.bf16.xpose.msra.mxu0 %v1337
        %1354 = vmatprep.subr.bf16.mxu0 0
        %1355 = vmatpush1.bf16.xpose.msra.mxu0 %v1334
        %1356 = vmatprep.subr.bf16.mxu0 0
        %1357 = vmatpush1.bf16.xpose.msra.mxu0 %v1331
        %1358 = vmatprep.subr.bf16.mxu0 0
        %1359 = vmatpush2.bf16.xpose.msra.mxu0 0
        %1360 = vmatprep.subr.bf16.mxu0 0
        %1361 = vmatpush2.bf16.xpose.msra.mxu0 0
        %1362 = vmatprep.subr.bf16.mxu0 0
        %1363 = vmatpush2.bf16.xpose.msra.mxu0 0
        %1364 = vmatprep.subr.bf16.mxu0 0
        %1365 = vmatpush2.bf16.xpose.msra.mxu0 0
        %1366 = vmatprep.subr.bf16.mxu0 0
        %1367 = vmatpush2.bf16.xpose.msra.mxu0 0
        %1368 = vmatprep.subr.bf16.mxu0 0
        %1369 = vmatpush2.bf16.xpose.msra.mxu0 0
        %1370 = vmatprep.subr.bf16.mxu0 0
        %1371 = vmatpush2.bf16.xpose.msra.mxu0 0
        %1372 = vmatprep.subr.bf16.mxu0 0
        %1373 = vmatpush2.bf16.xpose.msra.mxu0 0
        %1374 = vmatprep.mubr.bf16.mxu0 0
        %1375 = vmatmul.mubr.bf16.gmra.mxu0 %v1319
        %v1376 = vpop.f32.mrf.mxu0
        %v1377 = vadd.f32 0.0, %v1376
        %v1378 = vpop.f32.mrf.mxu0
        %v1379 = vpop.f32.mrf.mxu0
        %v1380 = vadd.f32 0.0, %v1379
        %v1381 = vpop.f32.mrf.mxu0
        %1382 = vmatprep.mubr.bf16.mxu0 0
        %1383 = vmatmul.mubr.bf16.gmra.mxu0 %v1322
        %v1384 = vpop.f32.mrf.mxu0
        %v1385 = vadd.f32 0.0, %v1384
        %v1386 = vpop.f32.mrf.mxu0
        %v1387 = vpop.f32.mrf.mxu0
        %v1388 = vadd.f32 0.0, %v1387
        %v1389 = vpop.f32.mrf.mxu0
        %1390 = vmatprep.mubr.bf16.mxu0 0
        %1391 = vmatmul.mubr.bf16.gmra.mxu0 %v1325
        %v1392 = vpop.f32.mrf.mxu0
        %v1393 = vadd.f32 0.0, %v1392
        %v1394 = vpop.f32.mrf.mxu0
        %v1395 = vpop.f32.mrf.mxu0
        %v1396 = vadd.f32 0.0, %v1395
        %v1397 = vpop.f32.mrf.mxu0
        %1398 = vmatprep.mubr.bf16.mxu0 0
        %1399 = vmatmul.mubr.bf16.gmra.mxu0 %v1328
        %v1400 = vpop.f32.mrf.mxu0
        %v1401 = vadd.f32 0.0, %v1400
        %v1402 = vpop.f32.mrf.mxu0
        %v1403 = vpop.f32.mrf.mxu0
        %v1404 = vadd.f32 0.0, %v1403
        %v1405 = vpop.f32.mrf.mxu0
        %1406 = vdwg.mxu0
        %v1408 = vsel %vm1317, %v1297, 0
        %v1411 = vsel %vm1317, %v1298, 0
        %v1414 = vsel %vm1317, %v1299, 0
        %v1417 = vsel %vm1317, %v1300, 0
        %v1420 = vsel %vm1317, %v1305, 0
        %v1423 = vsel %vm1317, %v1306, 0
        %v1426 = vsel %vm1317, %v1307, 0
        %v1429 = vsel %vm1317, %v1308, 0
        %1431 = vmatprep.subr.bf16.mxu0 0
        %1432 = vmatpush1.bf16.xpose.msra.mxu0 0
        %1433 = vmatprep.subr.bf16.mxu0 0
        %1434 = vmatpush1.bf16.xpose.msra.mxu0 0
        %1435 = vmatprep.subr.bf16.mxu0 0
        %1436 = vmatpush1.bf16.xpose.msra.mxu0 0
        %1437 = vmatprep.subr.bf16.mxu0 0
        %1438 = vmatpush1.bf16.xpose.msra.mxu0 0
        %1439 = vmatprep.subr.bf16.mxu0 0
        %1440 = vmatpush1.bf16.xpose.msra.mxu0 %v1429
        %1441 = vmatprep.subr.bf16.mxu0 0
        %1442 = vmatpush1.bf16.xpose.msra.mxu0 %v1426
        %1443 = vmatprep.subr.bf16.mxu0 0
        %1444 = vmatpush1.bf16.xpose.msra.mxu0 %v1423
        %1445 = vmatprep.subr.bf16.mxu0 0
        %1446 = vmatpush1.bf16.xpose.msra.mxu0 %v1420
        %1447 = vmatprep.subr.bf16.mxu0 0
        %1448 = vmatpush2.bf16.xpose.msra.mxu0 0
        %1449 = vmatprep.subr.bf16.mxu0 0
        %1450 = vmatpush2.bf16.xpose.msra.mxu0 0
        %1451 = vmatprep.subr.bf16.mxu0 0
        %1452 = vmatpush2.bf16.xpose.msra.mxu0 0
        %1453 = vmatprep.subr.bf16.mxu0 0
        %1454 = vmatpush2.bf16.xpose.msra.mxu0 0
        %1455 = vmatprep.subr.bf16.mxu0 0
        %1456 = vmatpush2.bf16.xpose.msra.mxu0 0
        %1457 = vmatprep.subr.bf16.mxu0 0
        %1458 = vmatpush2.bf16.xpose.msra.mxu0 0
        %1459 = vmatprep.subr.bf16.mxu0 0
        %1460 = vmatpush2.bf16.xpose.msra.mxu0 0
        %1461 = vmatprep.subr.bf16.mxu0 0
        %1462 = vmatpush2.bf16.xpose.msra.mxu0 0
        %1463 = vmatprep.mubr.bf16.mxu0 0
        %1464 = vmatmul.mubr.bf16.gmra.mxu0 %v1408
        %v1465 = vpop.f32.mrf.mxu0
        %v1466 = vadd.f32 0.0, %v1465
        %v1467 = vpop.f32.mrf.mxu0
        %v1468 = vpop.f32.mrf.mxu0
        %v1469 = vadd.f32 0.0, %v1468
        %v1470 = vpop.f32.mrf.mxu0
        %1471 = vmatprep.mubr.bf16.mxu0 0
        %1472 = vmatmul.mubr.bf16.gmra.mxu0 %v1411
        %v1473 = vpop.f32.mrf.mxu0
        %v1474 = vadd.f32 0.0, %v1473
        %v1475 = vpop.f32.mrf.mxu0
        %v1476 = vpop.f32.mrf.mxu0
        %v1477 = vadd.f32 0.0, %v1476
        %v1478 = vpop.f32.mrf.mxu0
        %1479 = vmatprep.mubr.bf16.mxu0 0
        %1480 = vmatmul.mubr.bf16.gmra.mxu0 %v1414
        %v1481 = vpop.f32.mrf.mxu0
        %v1482 = vadd.f32 0.0, %v1481
        %v1483 = vpop.f32.mrf.mxu0
        %v1484 = vpop.f32.mrf.mxu0
        %v1485 = vadd.f32 0.0, %v1484
        %v1486 = vpop.f32.mrf.mxu0
        %1487 = vmatprep.mubr.bf16.mxu0 0
        %1488 = vmatmul.mubr.bf16.gmra.mxu0 %v1417
        %v1489 = vpop.f32.mrf.mxu0
        %v1490 = vadd.f32 0.0, %v1489
        %v1491 = vpop.f32.mrf.mxu0
        %v1492 = vpop.f32.mrf.mxu0
        %v1493 = vadd.f32 0.0, %v1492
        %v1494 = vpop.f32.mrf.mxu0
        %1495 = vdwg.mxu0
        %v1496 = vmul.f32 %v1377, 0.17677669
        %v1497 = vmul.f32 %v1380, 0.17677669
        %v1498 = vmul.f32 %v1385, 0.17677669
        %v1499 = vmul.f32 %v1388, 0.17677669
        %v1500 = vmul.f32 %v1393, 0.17677669
        %v1501 = vmul.f32 %v1396, 0.17677669
        %v1502 = vmul.f32 %v1401, 0.17677669
        %v1503 = vmul.f32 %v1404, 0.17677669
        %v1504 = vmul.f32 %v1466, 0.17677669
        %v1505 = vmul.f32 %v1469, 0.17677669
        %v1506 = vmul.f32 %v1474, 0.17677669
        %v1507 = vmul.f32 %v1477, 0.17677669
        %v1508 = vmul.f32 %v1482, 0.17677669
        %v1509 = vmul.f32 %v1485, 0.17677669
        %v1510 = vmul.f32 %v1490, 0.17677669
        %v1511 = vmul.f32 %v1493, 0.17677669
        %v1512 = vadd.f32 %v1496, %v848
        %v1513 = vadd.f32 %v1497, %v848
        %v1514 = vadd.f32 %v1498, %v848
        %v1515 = vadd.f32 %v1499, %v848
        %v1516 = vadd.f32 %v1500, %v848
        %v1517 = vadd.f32 %v1501, %v848
        %v1518 = vadd.f32 %v1502, %v848
        %v1519 = vadd.f32 %v1503, %v848
        %v1520 = vadd.f32 %v1504, %v852
        %v1521 = vadd.f32 %v1505, %v852
        %v1522 = vadd.f32 %v1506, %v852
        %v1523 = vadd.f32 %v1507, %v852
        %v1524 = vadd.f32 %v1508, %v852
        %v1525 = vadd.f32 %v1509, %v852
        %v1526 = vadd.f32 %v1510, %v852
        %v1527 = vadd.f32 %v1511, %v852
        %vm1528 = vcmask 523264
        %v1529 = vsel %vm1528, %v1512, -inf
        %1530 = vmax.xlane.f32.xlu0 %v1529
        %v1531 = vpop.xlane.xlu0 %1530
        %v1532 = vsel %vm1528, %v1513, -inf
        %1533 = vmax.xlane.f32.xlu0 %v1532
        %v1534 = vpop.xlane.xlu0 %1533
        %v1535 = vsel %vm1528, %v1514, -inf
        %1536 = vmax.xlane.f32.xlu0 %v1535
        %v1537 = vpop.xlane.xlu0 %1536
        %v1538 = vsel %vm1528, %v1515, -inf
        %1539 = vmax.xlane.f32.xlu0 %v1538
        %v1540 = vpop.xlane.xlu0 %1539
        %v1541 = vsel %vm1528, %v1516, -inf
        %1542 = vmax.xlane.f32.xlu0 %v1541
        %v1543 = vpop.xlane.xlu0 %1542
        %v1544 = vsel %vm1528, %v1517, -inf
        %1545 = vmax.xlane.f32.xlu0 %v1544
        %v1546 = vpop.xlane.xlu0 %1545
        %v1547 = vsel %vm1528, %v1518, -inf
        %1548 = vmax.xlane.f32.xlu0 %v1547
        %v1549 = vpop.xlane.xlu0 %1548
        %v1550 = vsel %vm1528, %v1519, -inf
        %1551 = vmax.xlane.f32.xlu0 %v1550
        %v1552 = vpop.xlane.xlu0 %1551
        %v1553 = vsel %vm1528, %v1520, -inf
        %1554 = vmax.xlane.f32.xlu0 %v1553
        %v1555 = vpop.xlane.xlu0 %1554
        %v1556 = vsel %vm1528, %v1521, -inf
        %1557 = vmax.xlane.f32.xlu0 %v1556
        %v1558 = vpop.xlane.xlu0 %1557
        %v1559 = vsel %vm1528, %v1522, -inf
        %1560 = vmax.xlane.f32.xlu0 %v1559
        %v1561 = vpop.xlane.xlu0 %1560
        %v1562 = vsel %vm1528, %v1523, -inf
        %1563 = vmax.xlane.f32.xlu0 %v1562
        %v1564 = vpop.xlane.xlu0 %1563
        %v1565 = vsel %vm1528, %v1524, -inf
        %1566 = vmax.xlane.f32.xlu0 %v1565
        %v1567 = vpop.xlane.xlu0 %1566
        %v1568 = vsel %vm1528, %v1525, -inf
        %1569 = vmax.xlane.f32.xlu0 %v1568
        %v1570 = vpop.xlane.xlu0 %1569
        %v1571 = vsel %vm1528, %v1526, -inf
        %1572 = vmax.xlane.f32.xlu0 %v1571
        %v1573 = vpop.xlane.xlu0 %1572
        %v1574 = vsel %vm1528, %v1527, -inf
        %1575 = vmax.xlane.f32.xlu0 %v1574
        %v1576 = vpop.xlane.xlu0 %1575
        %v1577 = vsub.f32 %v1512, %v1531
        %v1578 = vsub.f32 %v1513, %v1534
        %v1579 = vsub.f32 %v1514, %v1537
        %v1580 = vsub.f32 %v1515, %v1540
        %v1581 = vsub.f32 %v1516, %v1543
        %v1582 = vsub.f32 %v1517, %v1546
        %v1583 = vsub.f32 %v1518, %v1549
        %v1584 = vsub.f32 %v1519, %v1552
        %v1585 = vsub.f32 %v1520, %v1555
        %v1586 = vsub.f32 %v1521, %v1558
        %v1587 = vsub.f32 %v1522, %v1561
        %v1588 = vsub.f32 %v1523, %v1564
        %v1589 = vsub.f32 %v1524, %v1567
        %v1590 = vsub.f32 %v1525, %v1570
        %v1591 = vsub.f32 %v1526, %v1573
        %v1592 = vsub.f32 %v1527, %v1576
        %v1593 = vmul.f32 %v1577, 1.442695
        %v1594 = vpow.pop %v1593
        %v1595 = vmul.f32 %v1578, 1.442695
        %v1596 = vpow.pop %v1595
        %v1597 = vmul.f32 %v1579, 1.442695
        %v1598 = vpow.pop %v1597
        %v1599 = vmul.f32 %v1580, 1.442695
        %v1600 = vpow.pop %v1599
        %v1601 = vmul.f32 %v1581, 1.442695
        %v1602 = vpow.pop %v1601
        %v1603 = vmul.f32 %v1582, 1.442695
        %v1604 = vpow.pop %v1603
        %v1605 = vmul.f32 %v1583, 1.442695
        %v1606 = vpow.pop %v1605
        %v1607 = vmul.f32 %v1584, 1.442695
        %v1608 = vpow.pop %v1607
        %v1609 = vmul.f32 %v1585, 1.442695
        %v1610 = vpow.pop %v1609
        %v1611 = vmul.f32 %v1586, 1.442695
        %v1612 = vpow.pop %v1611
        %v1613 = vmul.f32 %v1587, 1.442695
        %v1614 = vpow.pop %v1613
        %v1615 = vmul.f32 %v1588, 1.442695
        %v1616 = vpow.pop %v1615
        %v1617 = vmul.f32 %v1589, 1.442695
        %v1618 = vpow.pop %v1617
        %v1619 = vmul.f32 %v1590, 1.442695
        %v1620 = vpow.pop %v1619
        %v1621 = vmul.f32 %v1591, 1.442695
        %v1622 = vpow.pop %v1621
        %v1623 = vmul.f32 %v1592, 1.442695
        %v1624 = vpow.pop %v1623
        %v1625 = vsel %vm1528, %v1594, 0.0
        %1626 = vadd.xlane.f32.xlu0 %v1625
        %v1627 = vpop.xlane.xlu0 %1626
        %v1628 = vsel %vm1528, %v1596, 0.0
        %1629 = vadd.xlane.f32.xlu0 %v1628
        %v1630 = vpop.xlane.xlu0 %1629
        %v1631 = vsel %vm1528, %v1598, 0.0
        %1632 = vadd.xlane.f32.xlu0 %v1631
        %v1633 = vpop.xlane.xlu0 %1632
        %v1634 = vsel %vm1528, %v1600, 0.0
        %1635 = vadd.xlane.f32.xlu0 %v1634
        %v1636 = vpop.xlane.xlu0 %1635
        %v1637 = vsel %vm1528, %v1602, 0.0
        %1638 = vadd.xlane.f32.xlu0 %v1637
        %v1639 = vpop.xlane.xlu0 %1638
        %v1640 = vsel %vm1528, %v1604, 0.0
        %1641 = vadd.xlane.f32.xlu0 %v1640
        %v1642 = vpop.xlane.xlu0 %1641
        %v1643 = vsel %vm1528, %v1606, 0.0
        %1644 = vadd.xlane.f32.xlu0 %v1643
        %v1645 = vpop.xlane.xlu0 %1644
        %v1646 = vsel %vm1528, %v1608, 0.0
        %1647 = vadd.xlane.f32.xlu0 %v1646
        %v1648 = vpop.xlane.xlu0 %1647
        %v1649 = vsel %vm1528, %v1610, 0.0
        %1650 = vadd.xlane.f32.xlu0 %v1649
        %v1651 = vpop.xlane.xlu0 %1650
        %v1652 = vsel %vm1528, %v1612, 0.0
        %1653 = vadd.xlane.f32.xlu0 %v1652
        %v1654 = vpop.xlane.xlu0 %1653
        %v1655 = vsel %vm1528, %v1614, 0.0
        %1656 = vadd.xlane.f32.xlu0 %v1655
        %v1657 = vpop.xlane.xlu0 %1656
        %v1658 = vsel %vm1528, %v1616, 0.0
        %1659 = vadd.xlane.f32.xlu0 %v1658
        %v1660 = vpop.xlane.xlu0 %1659
        %v1661 = vsel %vm1528, %v1618, 0.0
        %1662 = vadd.xlane.f32.xlu0 %v1661
        %v1663 = vpop.xlane.xlu0 %1662
        %v1664 = vsel %vm1528, %v1620, 0.0
        %1665 = vadd.xlane.f32.xlu0 %v1664
        %v1666 = vpop.xlane.xlu0 %1665
        %v1667 = vsel %vm1528, %v1622, 0.0
        %1668 = vadd.xlane.f32.xlu0 %v1667
        %v1669 = vpop.xlane.xlu0 %1668
        %v1670 = vsel %vm1528, %v1624, 0.0
        %1671 = vadd.xlane.f32.xlu0 %v1670
        %v1672 = vpop.xlane.xlu0 %1671
        %v1673 = vrcp.pop %v1627
        %v1674 = vrcp.pop %v1630
        %v1675 = vrcp.pop %v1633
        %v1676 = vrcp.pop %v1636
        %v1677 = vrcp.pop %v1639
        %v1678 = vrcp.pop %v1642
        %v1679 = vrcp.pop %v1645
        %v1680 = vrcp.pop %v1648
        %v1681 = vrcp.pop %v1651
        %v1682 = vrcp.pop %v1654
        %v1683 = vrcp.pop %v1657
        %v1684 = vrcp.pop %v1660
        %v1685 = vrcp.pop %v1663
        %v1686 = vrcp.pop %v1666
        %v1687 = vrcp.pop %v1669
        %v1688 = vrcp.pop %v1672
        %v1689 = vmul.f32 %v1594, %v1673
        %v1690 = vmul.f32 %v1596, %v1674
        %v1691 = vmul.f32 %v1598, %v1675
        %v1692 = vmul.f32 %v1600, %v1676
        %v1693 = vmul.f32 %v1602, %v1677
        %v1694 = vmul.f32 %v1604, %v1678
        %v1695 = vmul.f32 %v1606, %v1679
        %v1696 = vmul.f32 %v1608, %v1680
        %v1697 = vmul.f32 %v1610, %v1681
        %v1698 = vmul.f32 %v1612, %v1682
        %v1699 = vmul.f32 %v1614, %v1683
        %v1700 = vmul.f32 %v1616, %v1684
        %v1701 = vmul.f32 %v1618, %v1685
        %v1702 = vmul.f32 %v1620, %v1686
        %v1703 = vmul.f32 %v1622, %v1687
        %v1704 = vmul.f32 %v1624, %v1688
        %v1705 = vpack.c.bf16 %v1690, %v1689
        %v1706 = vpack.c.bf16 %v1692, %v1691
        %v1707 = vpack.c.bf16 %v1694, %v1693
        %v1708 = vpack.c.bf16 %v1696, %v1695
        %v1709 = vpack.c.bf16 %v1698, %v1697
        %v1710 = vpack.c.bf16 %v1700, %v1699
        %v1711 = vpack.c.bf16 %v1702, %v1701
        %v1712 = vpack.c.bf16 %v1704, %v1703
        %v1714 = vsel %vm1528, %v1705, 0
        %v1717 = vsel %vm1528, %v1706, 0
        %v1720 = vsel %vm1528, %v1707, 0
        %v1723 = vsel %vm1528, %v1708, 0
        %1725 = vmatprep.subr.bf16.mxu0 0
        %1726 = vmatpush1.bf16.msra.mxu0 0
        %1727 = vmatprep.subr.bf16.mxu0 0
        %1728 = vmatpush1.bf16.msra.mxu0 0
        %1729 = vmatprep.subr.bf16.mxu0 0
        %1730 = vmatpush1.bf16.msra.mxu0 0
        %1731 = vmatprep.subr.bf16.mxu0 0
        %1732 = vmatpush1.bf16.msra.mxu0 0
        %1733 = vmatprep.subr.bf16.mxu0 0
        %1734 = vmatpush1.bf16.msra.mxu0 %v1312
        %1735 = vmatprep.subr.bf16.mxu0 0
        %1736 = vmatpush1.bf16.msra.mxu0 %v1311
        %1737 = vmatprep.subr.bf16.mxu0 0
        %1738 = vmatpush1.bf16.msra.mxu0 %v1310
        %1739 = vmatprep.subr.bf16.mxu0 0
        %1740 = vmatpush1.bf16.msra.mxu0 %v1309
        %1741 = vmatprep.subr.bf16.mxu0 0
        %1742 = vmatpush2.bf16.msra.mxu0 0
        %1743 = vmatprep.subr.bf16.mxu0 0
        %1744 = vmatpush2.bf16.msra.mxu0 0
        %1745 = vmatprep.subr.bf16.mxu0 0
        %1746 = vmatpush2.bf16.msra.mxu0 0
        %1747 = vmatprep.subr.bf16.mxu0 0
        %1748 = vmatpush2.bf16.msra.mxu0 0
        %1749 = vmatprep.subr.bf16.mxu0 0
        %1750 = vmatpush2.bf16.msra.mxu0 0
        %1751 = vmatprep.subr.bf16.mxu0 0
        %1752 = vmatpush2.bf16.msra.mxu0 0
        %1753 = vmatprep.subr.bf16.mxu0 0
        %1754 = vmatpush2.bf16.msra.mxu0 0
        %1755 = vmatprep.subr.bf16.mxu0 0
        %1756 = vmatpush2.bf16.msra.mxu0 0
        %1757 = vmatprep.mubr.bf16.mxu0 0
        %1758 = vmatmul.mubr.bf16.gmra.mxu0 %v1714
        %v1759 = vpop.f32.mrf.mxu0
        %v1760 = vadd.f32 0.0, %v1759
        %v1761 = vpop.f32.mrf.mxu0
        %v1762 = vpop.f32.mrf.mxu0
        %v1763 = vadd.f32 0.0, %v1762
        %v1764 = vpop.f32.mrf.mxu0
        %1765 = vmatprep.mubr.bf16.mxu0 0
        %1766 = vmatmul.mubr.bf16.gmra.mxu0 %v1717
        %v1767 = vpop.f32.mrf.mxu0
        %v1768 = vadd.f32 0.0, %v1767
        %v1769 = vpop.f32.mrf.mxu0
        %v1770 = vpop.f32.mrf.mxu0
        %v1771 = vadd.f32 0.0, %v1770
        %v1772 = vpop.f32.mrf.mxu0
        %1773 = vmatprep.mubr.bf16.mxu0 0
        %1774 = vmatmul.mubr.bf16.gmra.mxu0 %v1720
        %v1775 = vpop.f32.mrf.mxu0
        %v1776 = vadd.f32 0.0, %v1775
        %v1777 = vpop.f32.mrf.mxu0
        %v1778 = vpop.f32.mrf.mxu0
        %v1779 = vadd.f32 0.0, %v1778
        %v1780 = vpop.f32.mrf.mxu0
        %1781 = vmatprep.mubr.bf16.mxu0 0
        %1782 = vmatmul.mubr.bf16.gmra.mxu0 %v1723
        %v1783 = vpop.f32.mrf.mxu0
        %v1784 = vadd.f32 0.0, %v1783
        %v1785 = vpop.f32.mrf.mxu0
        %v1786 = vpop.f32.mrf.mxu0
        %v1787 = vadd.f32 0.0, %v1786
        %v1788 = vpop.f32.mrf.mxu0
        %1789 = vdwg.mxu0
        %v1791 = vsel %vm1528, %v1709, 0
        %v1794 = vsel %vm1528, %v1710, 0
        %v1797 = vsel %vm1528, %v1711, 0
        %v1800 = vsel %vm1528, %v1712, 0
        %1802 = vmatprep.subr.bf16.mxu0 0
        %1803 = vmatpush1.bf16.msra.mxu0 0
        %1804 = vmatprep.subr.bf16.mxu0 0
        %1805 = vmatpush1.bf16.msra.mxu0 0
        %1806 = vmatprep.subr.bf16.mxu0 0
        %1807 = vmatpush1.bf16.msra.mxu0 0
        %1808 = vmatprep.subr.bf16.mxu0 0
        %1809 = vmatpush1.bf16.msra.mxu0 0
        %1810 = vmatprep.subr.bf16.mxu0 0
        %1811 = vmatpush1.bf16.msra.mxu0 %v1316
        %1812 = vmatprep.subr.bf16.mxu0 0
        %1813 = vmatpush1.bf16.msra.mxu0 %v1315
        %1814 = vmatprep.subr.bf16.mxu0 0
        %1815 = vmatpush1.bf16.msra.mxu0 %v1314
        %1816 = vmatprep.subr.bf16.mxu0 0
        %1817 = vmatpush1.bf16.msra.mxu0 %v1313
        %1818 = vmatprep.subr.bf16.mxu0 0
        %1819 = vmatpush2.bf16.msra.mxu0 0
        %1820 = vmatprep.subr.bf16.mxu0 0
        %1821 = vmatpush2.bf16.msra.mxu0 0
        %1822 = vmatprep.subr.bf16.mxu0 0
        %1823 = vmatpush2.bf16.msra.mxu0 0
        %1824 = vmatprep.subr.bf16.mxu0 0
        %1825 = vmatpush2.bf16.msra.mxu0 0
        %1826 = vmatprep.subr.bf16.mxu0 0
        %1827 = vmatpush2.bf16.msra.mxu0 0
        %1828 = vmatprep.subr.bf16.mxu0 0
        %1829 = vmatpush2.bf16.msra.mxu0 0
        %1830 = vmatprep.subr.bf16.mxu0 0
        %1831 = vmatpush2.bf16.msra.mxu0 0
        %1832 = vmatprep.subr.bf16.mxu0 0
        %1833 = vmatpush2.bf16.msra.mxu0 0
        %1834 = vmatprep.mubr.bf16.mxu0 0
        %1835 = vmatmul.mubr.bf16.gmra.mxu0 %v1791
        %v1836 = vpop.f32.mrf.mxu0
        %v1837 = vadd.f32 0.0, %v1836
        %v1838 = vpop.f32.mrf.mxu0
        %v1839 = vpop.f32.mrf.mxu0
        %v1840 = vadd.f32 0.0, %v1839
        %v1841 = vpop.f32.mrf.mxu0
        %1842 = vmatprep.mubr.bf16.mxu0 0
        %1843 = vmatmul.mubr.bf16.gmra.mxu0 %v1794
        %v1844 = vpop.f32.mrf.mxu0
        %v1845 = vadd.f32 0.0, %v1844
        %v1846 = vpop.f32.mrf.mxu0
        %v1847 = vpop.f32.mrf.mxu0
        %v1848 = vadd.f32 0.0, %v1847
        %v1849 = vpop.f32.mrf.mxu0
        %1850 = vmatprep.mubr.bf16.mxu0 0
        %1851 = vmatmul.mubr.bf16.gmra.mxu0 %v1797
        %v1852 = vpop.f32.mrf.mxu0
        %v1853 = vadd.f32 0.0, %v1852
        %v1854 = vpop.f32.mrf.mxu0
        %v1855 = vpop.f32.mrf.mxu0
        %v1856 = vadd.f32 0.0, %v1855
        %v1857 = vpop.f32.mrf.mxu0
        %1858 = vmatprep.mubr.bf16.mxu0 0
        %1859 = vmatmul.mubr.bf16.gmra.mxu0 %v1800
        %v1860 = vpop.f32.mrf.mxu0
        %v1861 = vadd.f32 0.0, %v1860
        %v1862 = vpop.f32.mrf.mxu0
        %v1863 = vpop.f32.mrf.mxu0
        %v1864 = vadd.f32 0.0, %v1863
        %v1865 = vpop.f32.mrf.mxu0
        %1866 = vdwg.mxu0
        %v1867 = vpack.c.bf16 %v1763, %v1760
        %v1868 = vpack.c.bf16 %v1771, %v1768
        %v1869 = vpack.c.bf16 %v1779, %v1776
        %v1870 = vpack.c.bf16 %v1787, %v1784
        %v1871 = vpack.c.bf16 %v1840, %v1837
        %v1872 = vpack.c.bf16 %v1848, %v1845
        %v1873 = vpack.c.bf16 %v1856, %v1853
        %v1874 = vpack.c.bf16 %v1864, %v1861
        %v1875 = vld [vmem:[%s475] sm:$0xf]
        %v1876 = vld [vmem:[%s475 + $0x4] sm:$0xf]
        %v1877 = vld [vmem:[%s475 + $0x8] sm:$0xf]
        %v1878 = vld [vmem:[%s475 + $0xc] sm:$0xf]
        %1883 = vrot.lane.b32.xlu0 %v1293, 96
        %v1884 = vpop.permute.xlu0 %1883
        %1885 = vrot.lane.b32.xlu0 %v1294, 96
        %v1886 = vpop.permute.xlu0 %1885
        %1887 = vrot.lane.b32.xlu0 %v1295, 96
        %v1888 = vpop.permute.xlu0 %1887
        %1889 = vrot.lane.b32.xlu0 %v1296, 96
        %v1890 = vpop.permute.xlu0 %1889
        %1895 = vrot.lane.b32.xlu0 %v1301, 96
        %v1896 = vpop.permute.xlu0 %1895
        %1897 = vrot.lane.b32.xlu0 %v1302, 96
        %v1898 = vpop.permute.xlu0 %1897
        %1899 = vrot.lane.b32.xlu0 %v1303, 96
        %v1900 = vpop.permute.xlu0 %1899
        %1901 = vrot.lane.b32.xlu0 %v1304, 96
        %v1902 = vpop.permute.xlu0 %1901
        %v1904 = vsel %vm1317, %v1884, 0
        %v1907 = vsel %vm1317, %v1886, 0
        %v1910 = vsel %vm1317, %v1888, 0
        %v1913 = vsel %vm1317, %v1890, 0
        %v1916 = vsel %vm1317, %v1896, 0
        %v1919 = vsel %vm1317, %v1898, 0
        %v1922 = vsel %vm1317, %v1900, 0
        %v1925 = vsel %vm1317, %v1902, 0
        %1927 = vmatprep.subr.bf16.mxu0 0
        %1928 = vmatpush1.bf16.xpose.msra.mxu0 0
        %1929 = vmatprep.subr.bf16.mxu0 0
        %1930 = vmatpush1.bf16.xpose.msra.mxu0 0
        %1931 = vmatprep.subr.bf16.mxu0 0
        %1932 = vmatpush1.bf16.xpose.msra.mxu0 0
        %1933 = vmatprep.subr.bf16.mxu0 0
        %1934 = vmatpush1.bf16.xpose.msra.mxu0 0
        %1935 = vmatprep.subr.bf16.mxu0 0
        %1936 = vmatpush1.bf16.xpose.msra.mxu0 %v1925
        %1937 = vmatprep.subr.bf16.mxu0 0
        %1938 = vmatpush1.bf16.xpose.msra.mxu0 %v1922
        %1939 = vmatprep.subr.bf16.mxu0 0
        %1940 = vmatpush1.bf16.xpose.msra.mxu0 %v1919
        %1941 = vmatprep.subr.bf16.mxu0 0
        %1942 = vmatpush1.bf16.xpose.msra.mxu0 %v1916
        %1943 = vmatprep.subr.bf16.mxu0 0
        %1944 = vmatpush2.bf16.xpose.msra.mxu0 0
        %1945 = vmatprep.subr.bf16.mxu0 0
        %1946 = vmatpush2.bf16.xpose.msra.mxu0 0
        %1947 = vmatprep.subr.bf16.mxu0 0
        %1948 = vmatpush2.bf16.xpose.msra.mxu0 0
        %1949 = vmatprep.subr.bf16.mxu0 0
        %1950 = vmatpush2.bf16.xpose.msra.mxu0 0
        %1951 = vmatprep.subr.bf16.mxu0 0
        %1952 = vmatpush2.bf16.xpose.msra.mxu0 0
        %1953 = vmatprep.subr.bf16.mxu0 0
        %1954 = vmatpush2.bf16.xpose.msra.mxu0 0
        %1955 = vmatprep.subr.bf16.mxu0 0
        %1956 = vmatpush2.bf16.xpose.msra.mxu0 0
        %1957 = vmatprep.subr.bf16.mxu0 0
        %1958 = vmatpush2.bf16.xpose.msra.mxu0 0
        %1959 = vmatprep.mubr.bf16.mxu0 0
        %1960 = vmatmul.mubr.bf16.gmra.mxu0 %v1904
        %v1961 = vpop.f32.mrf.mxu0
        %v1962 = vadd.f32 0.0, %v1961
        %v1963 = vpop.f32.mrf.mxu0
        %v1964 = vpop.f32.mrf.mxu0
        %v1965 = vadd.f32 0.0, %v1964
        %v1966 = vpop.f32.mrf.mxu0
        %1967 = vmatprep.mubr.bf16.mxu0 0
        %1968 = vmatmul.mubr.bf16.gmra.mxu0 %v1907
        %v1969 = vpop.f32.mrf.mxu0
        %v1970 = vadd.f32 0.0, %v1969
        %v1971 = vpop.f32.mrf.mxu0
        %v1972 = vpop.f32.mrf.mxu0
        %v1973 = vadd.f32 0.0, %v1972
        %v1974 = vpop.f32.mrf.mxu0
        %1975 = vmatprep.mubr.bf16.mxu0 0
        %1976 = vmatmul.mubr.bf16.gmra.mxu0 %v1910
        %v1977 = vpop.f32.mrf.mxu0
        %v1978 = vadd.f32 0.0, %v1977
        %v1979 = vpop.f32.mrf.mxu0
        %v1980 = vpop.f32.mrf.mxu0
        %v1981 = vadd.f32 0.0, %v1980
        %v1982 = vpop.f32.mrf.mxu0
        %1983 = vmatprep.mubr.bf16.mxu0 0
        %1984 = vmatmul.mubr.bf16.gmra.mxu0 %v1913
        %v1985 = vpop.f32.mrf.mxu0
        %v1986 = vadd.f32 0.0, %v1985
        %v1987 = vpop.f32.mrf.mxu0
        %v1988 = vpop.f32.mrf.mxu0
        %v1989 = vadd.f32 0.0, %v1988
        %v1990 = vpop.f32.mrf.mxu0
        %1991 = vdwg.mxu0
        %1996 = vrot.lane.b32.xlu0 %v1297, 96
        %v1997 = vpop.permute.xlu0 %1996
        %1998 = vrot.lane.b32.xlu0 %v1298, 96
        %v1999 = vpop.permute.xlu0 %1998
        %2000 = vrot.lane.b32.xlu0 %v1299, 96
        %v2001 = vpop.permute.xlu0 %2000
        %2002 = vrot.lane.b32.xlu0 %v1300, 96
        %v2003 = vpop.permute.xlu0 %2002
        %2008 = vrot.lane.b32.xlu0 %v1305, 96
        %v2009 = vpop.permute.xlu0 %2008
        %2010 = vrot.lane.b32.xlu0 %v1306, 96
        %v2011 = vpop.permute.xlu0 %2010
        %2012 = vrot.lane.b32.xlu0 %v1307, 96
        %v2013 = vpop.permute.xlu0 %2012
        %2014 = vrot.lane.b32.xlu0 %v1308, 96
        %v2015 = vpop.permute.xlu0 %2014
        %v2017 = vsel %vm1317, %v1997, 0
        %v2020 = vsel %vm1317, %v1999, 0
        %v2023 = vsel %vm1317, %v2001, 0
        %v2026 = vsel %vm1317, %v2003, 0
        %v2029 = vsel %vm1317, %v2009, 0
        %v2032 = vsel %vm1317, %v2011, 0
        %v2035 = vsel %vm1317, %v2013, 0
        %v2038 = vsel %vm1317, %v2015, 0
        %2040 = vmatprep.subr.bf16.mxu0 0
        %2041 = vmatpush1.bf16.xpose.msra.mxu0 0
        %2042 = vmatprep.subr.bf16.mxu0 0
        %2043 = vmatpush1.bf16.xpose.msra.mxu0 0
        %2044 = vmatprep.subr.bf16.mxu0 0
        %2045 = vmatpush1.bf16.xpose.msra.mxu0 0
        %2046 = vmatprep.subr.bf16.mxu0 0
        %2047 = vmatpush1.bf16.xpose.msra.mxu0 0
        %2048 = vmatprep.subr.bf16.mxu0 0
        %2049 = vmatpush1.bf16.xpose.msra.mxu0 %v2038
        %2050 = vmatprep.subr.bf16.mxu0 0
        %2051 = vmatpush1.bf16.xpose.msra.mxu0 %v2035
        %2052 = vmatprep.subr.bf16.mxu0 0
        %2053 = vmatpush1.bf16.xpose.msra.mxu0 %v2032
        %2054 = vmatprep.subr.bf16.mxu0 0
        %2055 = vmatpush1.bf16.xpose.msra.mxu0 %v2029
        %2056 = vmatprep.subr.bf16.mxu0 0
        %2057 = vmatpush2.bf16.xpose.msra.mxu0 0
        %2058 = vmatprep.subr.bf16.mxu0 0
        %2059 = vmatpush2.bf16.xpose.msra.mxu0 0
        %2060 = vmatprep.subr.bf16.mxu0 0
        %2061 = vmatpush2.bf16.xpose.msra.mxu0 0
        %2062 = vmatprep.subr.bf16.mxu0 0
        %2063 = vmatpush2.bf16.xpose.msra.mxu0 0
        %2064 = vmatprep.subr.bf16.mxu0 0
        %2065 = vmatpush2.bf16.xpose.msra.mxu0 0
        %2066 = vmatprep.subr.bf16.mxu0 0
        %2067 = vmatpush2.bf16.xpose.msra.mxu0 0
        %2068 = vmatprep.subr.bf16.mxu0 0
        %2069 = vmatpush2.bf16.xpose.msra.mxu0 0
        %2070 = vmatprep.subr.bf16.mxu0 0
        %2071 = vmatpush2.bf16.xpose.msra.mxu0 0
        %2072 = vmatprep.mubr.bf16.mxu0 0
        %2073 = vmatmul.mubr.bf16.gmra.mxu0 %v2017
        %v2074 = vpop.f32.mrf.mxu0
        %v2075 = vadd.f32 0.0, %v2074
        %v2076 = vpop.f32.mrf.mxu0
        %v2077 = vpop.f32.mrf.mxu0
        %v2078 = vadd.f32 0.0, %v2077
        %v2079 = vpop.f32.mrf.mxu0
        %2080 = vmatprep.mubr.bf16.mxu0 0
        %2081 = vmatmul.mubr.bf16.gmra.mxu0 %v2020
        %v2082 = vpop.f32.mrf.mxu0
        %v2083 = vadd.f32 0.0, %v2082
        %v2084 = vpop.f32.mrf.mxu0
        %v2085 = vpop.f32.mrf.mxu0
        %v2086 = vadd.f32 0.0, %v2085
        %v2087 = vpop.f32.mrf.mxu0
        %2088 = vmatprep.mubr.bf16.mxu0 0
        %2089 = vmatmul.mubr.bf16.gmra.mxu0 %v2023
        %v2090 = vpop.f32.mrf.mxu0
        %v2091 = vadd.f32 0.0, %v2090
        %v2092 = vpop.f32.mrf.mxu0
        %v2093 = vpop.f32.mrf.mxu0
        %v2094 = vadd.f32 0.0, %v2093
        %v2095 = vpop.f32.mrf.mxu0
        %2096 = vmatprep.mubr.bf16.mxu0 0
        %2097 = vmatmul.mubr.bf16.gmra.mxu0 %v2026
        %v2098 = vpop.f32.mrf.mxu0
        %v2099 = vadd.f32 0.0, %v2098
        %v2100 = vpop.f32.mrf.mxu0
        %v2101 = vpop.f32.mrf.mxu0
        %v2102 = vadd.f32 0.0, %v2101
        %v2103 = vpop.f32.mrf.mxu0
        %2104 = vdwg.mxu0
        %v2105 = vmul.f32 %v1962, 0.17677669
        %v2106 = vmul.f32 %v1965, 0.17677669
        %v2107 = vmul.f32 %v1970, 0.17677669
        %v2108 = vmul.f32 %v1973, 0.17677669
        %v2109 = vmul.f32 %v1978, 0.17677669
        %v2110 = vmul.f32 %v1981, 0.17677669
        %v2111 = vmul.f32 %v1986, 0.17677669
        %v2112 = vmul.f32 %v1989, 0.17677669
        %v2113 = vmul.f32 %v2075, 0.17677669
        %v2114 = vmul.f32 %v2078, 0.17677669
        %v2115 = vmul.f32 %v2083, 0.17677669
        %v2116 = vmul.f32 %v2086, 0.17677669
        %v2117 = vmul.f32 %v2091, 0.17677669
        %v2118 = vmul.f32 %v2094, 0.17677669
        %v2119 = vmul.f32 %v2099, 0.17677669
        %v2120 = vmul.f32 %v2102, 0.17677669
        %v2121 = vadd.f32 %v2105, %v848
        %v2122 = vadd.f32 %v2106, %v848
        %v2123 = vadd.f32 %v2107, %v848
        %v2124 = vadd.f32 %v2108, %v848
        %v2125 = vadd.f32 %v2109, %v848
        %v2126 = vadd.f32 %v2110, %v848
        %v2127 = vadd.f32 %v2111, %v848
        %v2128 = vadd.f32 %v2112, %v848
        %v2129 = vadd.f32 %v2113, %v852
        %v2130 = vadd.f32 %v2114, %v852
        %v2131 = vadd.f32 %v2115, %v852
        %v2132 = vadd.f32 %v2116, %v852
        %v2133 = vadd.f32 %v2117, %v852
        %v2134 = vadd.f32 %v2118, %v852
        %v2135 = vadd.f32 %v2119, %v852
        %v2136 = vadd.f32 %v2120, %v852
        %v2137 = vsel %vm1528, %v2121, -inf
        %2138 = vmax.xlane.f32.xlu0 %v2137
        %v2139 = vpop.xlane.xlu0 %2138
        %v2140 = vsel %vm1528, %v2122, -inf
        %2141 = vmax.xlane.f32.xlu0 %v2140
        %v2142 = vpop.xlane.xlu0 %2141
        %v2143 = vsel %vm1528, %v2123, -inf
        %2144 = vmax.xlane.f32.xlu0 %v2143
        %v2145 = vpop.xlane.xlu0 %2144
        %v2146 = vsel %vm1528, %v2124, -inf
        %2147 = vmax.xlane.f32.xlu0 %v2146
        %v2148 = vpop.xlane.xlu0 %2147
        %v2149 = vsel %vm1528, %v2125, -inf
        %2150 = vmax.xlane.f32.xlu0 %v2149
        %v2151 = vpop.xlane.xlu0 %2150
        %v2152 = vsel %vm1528, %v2126, -inf
        %2153 = vmax.xlane.f32.xlu0 %v2152
        %v2154 = vpop.xlane.xlu0 %2153
        %v2155 = vsel %vm1528, %v2127, -inf
        %2156 = vmax.xlane.f32.xlu0 %v2155
        %v2157 = vpop.xlane.xlu0 %2156
        %v2158 = vsel %vm1528, %v2128, -inf
        %2159 = vmax.xlane.f32.xlu0 %v2158
        %v2160 = vpop.xlane.xlu0 %2159
        %v2161 = vsel %vm1528, %v2129, -inf
        %2162 = vmax.xlane.f32.xlu0 %v2161
        %v2163 = vpop.xlane.xlu0 %2162
        %v2164 = vsel %vm1528, %v2130, -inf
        %2165 = vmax.xlane.f32.xlu0 %v2164
        %v2166 = vpop.xlane.xlu0 %2165
        %v2167 = vsel %vm1528, %v2131, -inf
        %2168 = vmax.xlane.f32.xlu0 %v2167
        %v2169 = vpop.xlane.xlu0 %2168
        %v2170 = vsel %vm1528, %v2132, -inf
        %2171 = vmax.xlane.f32.xlu0 %v2170
        %v2172 = vpop.xlane.xlu0 %2171
        %v2173 = vsel %vm1528, %v2133, -inf
        %2174 = vmax.xlane.f32.xlu0 %v2173
        %v2175 = vpop.xlane.xlu0 %2174
        %v2176 = vsel %vm1528, %v2134, -inf
        %2177 = vmax.xlane.f32.xlu0 %v2176
        %v2178 = vpop.xlane.xlu0 %2177
        %v2179 = vsel %vm1528, %v2135, -inf
        %2180 = vmax.xlane.f32.xlu0 %v2179
        %v2181 = vpop.xlane.xlu0 %2180
        %v2182 = vsel %vm1528, %v2136, -inf
        %2183 = vmax.xlane.f32.xlu0 %v2182
        %v2184 = vpop.xlane.xlu0 %2183
        %v2185 = vsub.f32 %v2121, %v2139
        %v2186 = vsub.f32 %v2122, %v2142
        %v2187 = vsub.f32 %v2123, %v2145
        %v2188 = vsub.f32 %v2124, %v2148
        %v2189 = vsub.f32 %v2125, %v2151
        %v2190 = vsub.f32 %v2126, %v2154
        %v2191 = vsub.f32 %v2127, %v2157
        %v2192 = vsub.f32 %v2128, %v2160
        %v2193 = vsub.f32 %v2129, %v2163
        %v2194 = vsub.f32 %v2130, %v2166
        %v2195 = vsub.f32 %v2131, %v2169
        %v2196 = vsub.f32 %v2132, %v2172
        %v2197 = vsub.f32 %v2133, %v2175
        %v2198 = vsub.f32 %v2134, %v2178
        %v2199 = vsub.f32 %v2135, %v2181
        %v2200 = vsub.f32 %v2136, %v2184
        %v2201 = vmul.f32 %v2185, 1.442695
        %v2202 = vpow.pop %v2201
        %v2203 = vmul.f32 %v2186, 1.442695
        %v2204 = vpow.pop %v2203
        %v2205 = vmul.f32 %v2187, 1.442695
        %v2206 = vpow.pop %v2205
        %v2207 = vmul.f32 %v2188, 1.442695
        %v2208 = vpow.pop %v2207
        %v2209 = vmul.f32 %v2189, 1.442695
        %v2210 = vpow.pop %v2209
        %v2211 = vmul.f32 %v2190, 1.442695
        %v2212 = vpow.pop %v2211
        %v2213 = vmul.f32 %v2191, 1.442695
        %v2214 = vpow.pop %v2213
        %v2215 = vmul.f32 %v2192, 1.442695
        %v2216 = vpow.pop %v2215
        %v2217 = vmul.f32 %v2193, 1.442695
        %v2218 = vpow.pop %v2217
        %v2219 = vmul.f32 %v2194, 1.442695
        %v2220 = vpow.pop %v2219
        %v2221 = vmul.f32 %v2195, 1.442695
        %v2222 = vpow.pop %v2221
        %v2223 = vmul.f32 %v2196, 1.442695
        %v2224 = vpow.pop %v2223
        %v2225 = vmul.f32 %v2197, 1.442695
        %v2226 = vpow.pop %v2225
        %v2227 = vmul.f32 %v2198, 1.442695
        %v2228 = vpow.pop %v2227
        %v2229 = vmul.f32 %v2199, 1.442695
        %v2230 = vpow.pop %v2229
        %v2231 = vmul.f32 %v2200, 1.442695
        %v2232 = vpow.pop %v2231
        %v2233 = vsel %vm1528, %v2202, 0.0
        %2234 = vadd.xlane.f32.xlu0 %v2233
        %v2235 = vpop.xlane.xlu0 %2234
        %v2236 = vsel %vm1528, %v2204, 0.0
        %2237 = vadd.xlane.f32.xlu0 %v2236
        %v2238 = vpop.xlane.xlu0 %2237
        %v2239 = vsel %vm1528, %v2206, 0.0
        %2240 = vadd.xlane.f32.xlu0 %v2239
        %v2241 = vpop.xlane.xlu0 %2240
        %v2242 = vsel %vm1528, %v2208, 0.0
        %2243 = vadd.xlane.f32.xlu0 %v2242
        %v2244 = vpop.xlane.xlu0 %2243
        %v2245 = vsel %vm1528, %v2210, 0.0
        %2246 = vadd.xlane.f32.xlu0 %v2245
        %v2247 = vpop.xlane.xlu0 %2246
        %v2248 = vsel %vm1528, %v2212, 0.0
        %2249 = vadd.xlane.f32.xlu0 %v2248
        %v2250 = vpop.xlane.xlu0 %2249
        %v2251 = vsel %vm1528, %v2214, 0.0
        %2252 = vadd.xlane.f32.xlu0 %v2251
        %v2253 = vpop.xlane.xlu0 %2252
        %v2254 = vsel %vm1528, %v2216, 0.0
        %2255 = vadd.xlane.f32.xlu0 %v2254
        %v2256 = vpop.xlane.xlu0 %2255
        %v2257 = vsel %vm1528, %v2218, 0.0
        %2258 = vadd.xlane.f32.xlu0 %v2257
        %v2259 = vpop.xlane.xlu0 %2258
        %v2260 = vsel %vm1528, %v2220, 0.0
        %2261 = vadd.xlane.f32.xlu0 %v2260
        %v2262 = vpop.xlane.xlu0 %2261
        %v2263 = vsel %vm1528, %v2222, 0.0
        %2264 = vadd.xlane.f32.xlu0 %v2263
        %v2265 = vpop.xlane.xlu0 %2264
        %v2266 = vsel %vm1528, %v2224, 0.0
        %2267 = vadd.xlane.f32.xlu0 %v2266
        %v2268 = vpop.xlane.xlu0 %2267
        %v2269 = vsel %vm1528, %v2226, 0.0
        %2270 = vadd.xlane.f32.xlu0 %v2269
        %v2271 = vpop.xlane.xlu0 %2270
        %v2272 = vsel %vm1528, %v2228, 0.0
        %2273 = vadd.xlane.f32.xlu0 %v2272
        %v2274 = vpop.xlane.xlu0 %2273
        %v2275 = vsel %vm1528, %v2230, 0.0
        %2276 = vadd.xlane.f32.xlu0 %v2275
        %v2277 = vpop.xlane.xlu0 %2276
        %v2278 = vsel %vm1528, %v2232, 0.0
        %2279 = vadd.xlane.f32.xlu0 %v2278
        %v2280 = vpop.xlane.xlu0 %2279
        %v2281 = vrcp.pop %v2235
        %v2282 = vrcp.pop %v2238
        %v2283 = vrcp.pop %v2241
        %v2284 = vrcp.pop %v2244
        %v2285 = vrcp.pop %v2247
        %v2286 = vrcp.pop %v2250
        %v2287 = vrcp.pop %v2253
        %v2288 = vrcp.pop %v2256
        %v2289 = vrcp.pop %v2259
        %v2290 = vrcp.pop %v2262
        %v2291 = vrcp.pop %v2265
        %v2292 = vrcp.pop %v2268
        %v2293 = vrcp.pop %v2271
        %v2294 = vrcp.pop %v2274
        %v2295 = vrcp.pop %v2277
        %v2296 = vrcp.pop %v2280
        %v2297 = vmul.f32 %v2202, %v2281
        %v2298 = vmul.f32 %v2204, %v2282
        %v2299 = vmul.f32 %v2206, %v2283
        %v2300 = vmul.f32 %v2208, %v2284
        %v2301 = vmul.f32 %v2210, %v2285
        %v2302 = vmul.f32 %v2212, %v2286
        %v2303 = vmul.f32 %v2214, %v2287
        %v2304 = vmul.f32 %v2216, %v2288
        %v2305 = vmul.f32 %v2218, %v2289
        %v2306 = vmul.f32 %v2220, %v2290
        %v2307 = vmul.f32 %v2222, %v2291
        %v2308 = vmul.f32 %v2224, %v2292
        %v2309 = vmul.f32 %v2226, %v2293
        %v2310 = vmul.f32 %v2228, %v2294
        %v2311 = vmul.f32 %v2230, %v2295
        %v2312 = vmul.f32 %v2232, %v2296
        %v2313 = vpack.c.bf16 %v2298, %v2297
        %v2314 = vpack.c.bf16 %v2300, %v2299
        %v2315 = vpack.c.bf16 %v2302, %v2301
        %v2316 = vpack.c.bf16 %v2304, %v2303
        %v2317 = vpack.c.bf16 %v2306, %v2305
        %v2318 = vpack.c.bf16 %v2308, %v2307
        %v2319 = vpack.c.bf16 %v2310, %v2309
        %v2320 = vpack.c.bf16 %v2312, %v2311
        %2325 = vrot.lane.b32.xlu0 %v1309, 96
        %v2326 = vpop.permute.xlu0 %2325
        %2327 = vrot.lane.b32.xlu0 %v1310, 96
        %v2328 = vpop.permute.xlu0 %2327
        %2329 = vrot.lane.b32.xlu0 %v1311, 96
        %v2330 = vpop.permute.xlu0 %2329
        %2331 = vrot.lane.b32.xlu0 %v1312, 96
        %v2332 = vpop.permute.xlu0 %2331
        %v2338 = vsel %vm1528, %v2313, 0
        %v2341 = vsel %vm1528, %v2314, 0
        %v2344 = vsel %vm1528, %v2315, 0
        %v2347 = vsel %vm1528, %v2316, 0
        %2349 = vmatprep.subr.bf16.mxu0 0
        %2350 = vmatpush1.bf16.msra.mxu0 0
        %2351 = vmatprep.subr.bf16.mxu0 0
        %2352 = vmatpush1.bf16.msra.mxu0 0
        %2353 = vmatprep.subr.bf16.mxu0 0
        %2354 = vmatpush1.bf16.msra.mxu0 0
        %2355 = vmatprep.subr.bf16.mxu0 0
        %2356 = vmatpush1.bf16.msra.mxu0 0
        %2357 = vmatprep.subr.bf16.mxu0 0
        %2358 = vmatpush1.bf16.msra.mxu0 %v2332
        %2359 = vmatprep.subr.bf16.mxu0 0
        %2360 = vmatpush1.bf16.msra.mxu0 %v2330
        %2361 = vmatprep.subr.bf16.mxu0 0
        %2362 = vmatpush1.bf16.msra.mxu0 %v2328
        %2363 = vmatprep.subr.bf16.mxu0 0
        %2364 = vmatpush1.bf16.msra.mxu0 %v2326
        %2365 = vmatprep.subr.bf16.mxu0 0
        %2366 = vmatpush2.bf16.msra.mxu0 0
        %2367 = vmatprep.subr.bf16.mxu0 0
        %2368 = vmatpush2.bf16.msra.mxu0 0
        %2369 = vmatprep.subr.bf16.mxu0 0
        %2370 = vmatpush2.bf16.msra.mxu0 0
        %2371 = vmatprep.subr.bf16.mxu0 0
        %2372 = vmatpush2.bf16.msra.mxu0 0
        %2373 = vmatprep.subr.bf16.mxu0 0
        %2374 = vmatpush2.bf16.msra.mxu0 0
        %2375 = vmatprep.subr.bf16.mxu0 0
        %2376 = vmatpush2.bf16.msra.mxu0 0
        %2377 = vmatprep.subr.bf16.mxu0 0
        %2378 = vmatpush2.bf16.msra.mxu0 0
        %2379 = vmatprep.subr.bf16.mxu0 0
        %2380 = vmatpush2.bf16.msra.mxu0 0
        %2381 = vmatprep.mubr.bf16.mxu0 0
        %2382 = vmatmul.mubr.bf16.gmra.mxu0 %v2338
        %v2383 = vpop.f32.mrf.mxu0
        %v2384 = vadd.f32 0.0, %v2383
        %v2385 = vpop.f32.mrf.mxu0
        %v2386 = vpop.f32.mrf.mxu0
        %v2387 = vadd.f32 0.0, %v2386
        %v2388 = vpop.f32.mrf.mxu0
        %2389 = vmatprep.mubr.bf16.mxu0 0
        %2390 = vmatmul.mubr.bf16.gmra.mxu0 %v2341
        %v2391 = vpop.f32.mrf.mxu0
        %v2392 = vadd.f32 0.0, %v2391
        %v2393 = vpop.f32.mrf.mxu0
        %v2394 = vpop.f32.mrf.mxu0
        %v2395 = vadd.f32 0.0, %v2394
        %v2396 = vpop.f32.mrf.mxu0
        %2397 = vmatprep.mubr.bf16.mxu0 0
        %2398 = vmatmul.mubr.bf16.gmra.mxu0 %v2344
        %v2399 = vpop.f32.mrf.mxu0
        %v2400 = vadd.f32 0.0, %v2399
        %v2401 = vpop.f32.mrf.mxu0
        %v2402 = vpop.f32.mrf.mxu0
        %v2403 = vadd.f32 0.0, %v2402
        %v2404 = vpop.f32.mrf.mxu0
        %2405 = vmatprep.mubr.bf16.mxu0 0
        %2406 = vmatmul.mubr.bf16.gmra.mxu0 %v2347
        %v2407 = vpop.f32.mrf.mxu0
        %v2408 = vadd.f32 0.0, %v2407
        %v2409 = vpop.f32.mrf.mxu0
        %v2410 = vpop.f32.mrf.mxu0
        %v2411 = vadd.f32 0.0, %v2410
        %v2412 = vpop.f32.mrf.mxu0
        %2413 = vdwg.mxu0
        %2418 = vrot.lane.b32.xlu0 %v1313, 96
        %v2419 = vpop.permute.xlu0 %2418
        %2420 = vrot.lane.b32.xlu0 %v1314, 96
        %v2421 = vpop.permute.xlu0 %2420
        %2422 = vrot.lane.b32.xlu0 %v1315, 96
        %v2423 = vpop.permute.xlu0 %2422
        %2424 = vrot.lane.b32.xlu0 %v1316, 96
        %v2425 = vpop.permute.xlu0 %2424
        %v2431 = vsel %vm1528, %v2317, 0
        %v2434 = vsel %vm1528, %v2318, 0
        %v2437 = vsel %vm1528, %v2319, 0
        %v2440 = vsel %vm1528, %v2320, 0
        %2442 = vmatprep.subr.bf16.mxu0 0
        %2443 = vmatpush1.bf16.msra.mxu0 0
        %2444 = vmatprep.subr.bf16.mxu0 0
        %2445 = vmatpush1.bf16.msra.mxu0 0
        %2446 = vmatprep.subr.bf16.mxu0 0
        %2447 = vmatpush1.bf16.msra.mxu0 0
        %2448 = vmatprep.subr.bf16.mxu0 0
        %2449 = vmatpush1.bf16.msra.mxu0 0
        %2450 = vmatprep.subr.bf16.mxu0 0
        %2451 = vmatpush1.bf16.msra.mxu0 %v2425
        %2452 = vmatprep.subr.bf16.mxu0 0
        %2453 = vmatpush1.bf16.msra.mxu0 %v2423
        %2454 = vmatprep.subr.bf16.mxu0 0
        %2455 = vmatpush1.bf16.msra.mxu0 %v2421
        %2456 = vmatprep.subr.bf16.mxu0 0
        %2457 = vmatpush1.bf16.msra.mxu0 %v2419
        %2458 = vmatprep.subr.bf16.mxu0 0
        %2459 = vmatpush2.bf16.msra.mxu0 0
        %2460 = vmatprep.subr.bf16.mxu0 0
        %2461 = vmatpush2.bf16.msra.mxu0 0
        %2462 = vmatprep.subr.bf16.mxu0 0
        %2463 = vmatpush2.bf16.msra.mxu0 0
        %2464 = vmatprep.subr.bf16.mxu0 0
        %2465 = vmatpush2.bf16.msra.mxu0 0
        %2466 = vmatprep.subr.bf16.mxu0 0
        %2467 = vmatpush2.bf16.msra.mxu0 0
        %2468 = vmatprep.subr.bf16.mxu0 0
        %2469 = vmatpush2.bf16.msra.mxu0 0
        %2470 = vmatprep.subr.bf16.mxu0 0
        %2471 = vmatpush2.bf16.msra.mxu0 0
        %2472 = vmatprep.subr.bf16.mxu0 0
        %2473 = vmatpush2.bf16.msra.mxu0 0
        %2474 = vmatprep.mubr.bf16.mxu0 0
        %2475 = vmatmul.mubr.bf16.gmra.mxu0 %v2431
        %v2476 = vpop.f32.mrf.mxu0
        %v2477 = vadd.f32 0.0, %v2476
        %v2478 = vpop.f32.mrf.mxu0
        %v2479 = vpop.f32.mrf.mxu0
        %v2480 = vadd.f32 0.0, %v2479
        %v2481 = vpop.f32.mrf.mxu0
        %2482 = vmatprep.mubr.bf16.mxu0 0
        %2483 = vmatmul.mubr.bf16.gmra.mxu0 %v2434
        %v2484 = vpop.f32.mrf.mxu0
        %v2485 = vadd.f32 0.0, %v2484
        %v2486 = vpop.f32.mrf.mxu0
        %v2487 = vpop.f32.mrf.mxu0
        %v2488 = vadd.f32 0.0, %v2487
        %v2489 = vpop.f32.mrf.mxu0
        %2490 = vmatprep.mubr.bf16.mxu0 0
        %2491 = vmatmul.mubr.bf16.gmra.mxu0 %v2437
        %v2492 = vpop.f32.mrf.mxu0
        %v2493 = vadd.f32 0.0, %v2492
        %v2494 = vpop.f32.mrf.mxu0
        %v2495 = vpop.f32.mrf.mxu0
        %v2496 = vadd.f32 0.0, %v2495
        %v2497 = vpop.f32.mrf.mxu0
        %2498 = vmatprep.mubr.bf16.mxu0 0
        %2499 = vmatmul.mubr.bf16.gmra.mxu0 %v2440
        %v2500 = vpop.f32.mrf.mxu0
        %v2501 = vadd.f32 0.0, %v2500
        %v2502 = vpop.f32.mrf.mxu0
        %v2503 = vpop.f32.mrf.mxu0
        %v2504 = vadd.f32 0.0, %v2503
        %v2505 = vpop.f32.mrf.mxu0
        %2506 = vdwg.mxu0
        %v2507 = vpack.c.bf16 %v2387, %v2384
        %v2508 = vpack.c.bf16 %v2395, %v2392
        %v2509 = vpack.c.bf16 %v2403, %v2400
        %v2510 = vpack.c.bf16 %v2411, %v2408
        %v2511 = vpack.c.bf16 %v2480, %v2477
        %v2512 = vpack.c.bf16 %v2488, %v2485
        %v2513 = vpack.c.bf16 %v2496, %v2493
        %v2514 = vpack.c.bf16 %v2504, %v2501
        %v2515 = vld [vmem:[%s475 + $0x10] sm:$0xf]
        %v2516 = vld [vmem:[%s475 + $0x14] sm:$0xf]
        %v2517 = vld [vmem:[%s475 + $0x18] sm:$0xf]
        %v2518 = vld [vmem:[%s475 + $0x1c] sm:$0xf]
        %v2523 = vunpack.c.l.b16 %v2515
        %v2524 = vunpack.c.l.b16 %v2516
        %v2525 = vunpack.c.l.b16 %v2517
        %v2526 = vunpack.c.l.b16 %v2518
        %v2527 = vpack.c.b16 %v2524, %v2523
        %v2528 = vpack.c.b16 %v2526, %v2525
        %v2532 = vsel %vm1317, %v2507, 0
        %v2535 = vsel %vm1317, %v2508, 0
        %v2538 = vsel %vm1317, %v2509, 0
        %v2541 = vsel %vm1317, %v2510, 0
        %v2544 = vsel %vm1317, %v2511, 0
        %v2547 = vsel %vm1317, %v2512, 0
        %v2550 = vsel %vm1317, %v2513, 0
        %v2553 = vsel %vm1317, %v2514, 0
        %2555 = vmatprep.subr.bf16.mxu0 0
        %2556 = vmatpush1.bf16.msra.mxu0 0
        %2557 = vmatprep.subr.bf16.mxu0 0
        %2558 = vmatpush1.bf16.msra.mxu0 0
        %2559 = vmatprep.subr.bf16.mxu0 0
        %2560 = vmatpush1.bf16.msra.mxu0 0
        %2561 = vmatprep.subr.bf16.mxu0 0
        %2562 = vmatpush1.bf16.msra.mxu0 0
        %2563 = vmatprep.subr.bf16.mxu0 0
        %2564 = vmatpush1.bf16.msra.mxu0 0
        %2565 = vmatprep.subr.bf16.mxu0 0
        %2566 = vmatpush1.bf16.msra.mxu0 0
        %2567 = vmatprep.subr.bf16.mxu0 0
        %2568 = vmatpush1.bf16.msra.mxu0 %v2528
        %2569 = vmatprep.subr.bf16.mxu0 0
        %2570 = vmatpush1.bf16.msra.mxu0 %v2527
        %2571 = vmatprep.subr.bf16.mxu0 0
        %2572 = vmatpush2.bf16.msra.mxu0 0
        %2573 = vmatprep.subr.bf16.mxu0 0
        %2574 = vmatpush2.bf16.msra.mxu0 0
        %2575 = vmatprep.subr.bf16.mxu0 0
        %2576 = vmatpush2.bf16.msra.mxu0 0
        %2577 = vmatprep.subr.bf16.mxu0 0
        %2578 = vmatpush2.bf16.msra.mxu0 0
        %2579 = vmatprep.subr.bf16.mxu0 0
        %2580 = vmatpush2.bf16.msra.mxu0 0
        %2581 = vmatprep.subr.bf16.mxu0 0
        %2582 = vmatpush2.bf16.msra.mxu0 0
        %2583 = vmatprep.subr.bf16.mxu0 0
        %2584 = vmatpush2.bf16.msra.mxu0 0
        %2585 = vmatprep.subr.bf16.mxu0 0
        %2586 = vmatpush2.bf16.msra.mxu0 0
        %2587 = vmatprep.mubr.bf16.mxu0 0
        %2588 = vmatmul.mubr.bf16.gmra.mxu0 %v2532
        %v2589 = vpop.f32.mrf.mxu0
        %v2590 = vadd.f32 0.0, %v2589
        %v2591 = vpop.f32.mrf.mxu0
        %v2592 = vpop.f32.mrf.mxu0
        %v2593 = vadd.f32 0.0, %v2592
        %v2594 = vpop.f32.mrf.mxu0
        %2595 = vmatprep.mubr.bf16.mxu0 0
        %2596 = vmatmul.mubr.bf16.gmra.mxu0 %v2535
        %v2597 = vpop.f32.mrf.mxu0
        %v2598 = vadd.f32 0.0, %v2597
        %v2599 = vpop.f32.mrf.mxu0
        %v2600 = vpop.f32.mrf.mxu0
        %v2601 = vadd.f32 0.0, %v2600
        %v2602 = vpop.f32.mrf.mxu0
        %2603 = vmatprep.mubr.bf16.mxu0 0
        %2604 = vmatmul.mubr.bf16.gmra.mxu0 %v2538
        %v2605 = vpop.f32.mrf.mxu0
        %v2606 = vadd.f32 0.0, %v2605
        %v2607 = vpop.f32.mrf.mxu0
        %v2608 = vpop.f32.mrf.mxu0
        %v2609 = vadd.f32 0.0, %v2608
        %v2610 = vpop.f32.mrf.mxu0
        %2611 = vmatprep.mubr.bf16.mxu0 0
        %2612 = vmatmul.mubr.bf16.gmra.mxu0 %v2541
        %v2613 = vpop.f32.mrf.mxu0
        %v2614 = vadd.f32 0.0, %v2613
        %v2615 = vpop.f32.mrf.mxu0
        %v2616 = vpop.f32.mrf.mxu0
        %v2617 = vadd.f32 0.0, %v2616
        %v2618 = vpop.f32.mrf.mxu0
        %2619 = vmatprep.mubr.bf16.mxu0 0
        %2620 = vmatmul.mubr.bf16.gmra.mxu0 %v2544
        %v2621 = vpop.f32.mrf.mxu0
        %v2622 = vadd.f32 0.0, %v2621
        %v2623 = vpop.f32.mrf.mxu0
        %v2624 = vpop.f32.mrf.mxu0
        %v2625 = vadd.f32 0.0, %v2624
        %v2626 = vpop.f32.mrf.mxu0
        %2627 = vmatprep.mubr.bf16.mxu0 0
        %2628 = vmatmul.mubr.bf16.gmra.mxu0 %v2547
        %v2629 = vpop.f32.mrf.mxu0
        %v2630 = vadd.f32 0.0, %v2629
        %v2631 = vpop.f32.mrf.mxu0
        %v2632 = vpop.f32.mrf.mxu0
        %v2633 = vadd.f32 0.0, %v2632
        %v2634 = vpop.f32.mrf.mxu0
        %2635 = vmatprep.mubr.bf16.mxu0 0
        %2636 = vmatmul.mubr.bf16.gmra.mxu0 %v2550
        %v2637 = vpop.f32.mrf.mxu0
        %v2638 = vadd.f32 0.0, %v2637
        %v2639 = vpop.f32.mrf.mxu0
        %v2640 = vpop.f32.mrf.mxu0
        %v2641 = vadd.f32 0.0, %v2640
        %v2642 = vpop.f32.mrf.mxu0
        %2643 = vmatprep.mubr.bf16.mxu0 0
        %2644 = vmatmul.mubr.bf16.gmra.mxu0 %v2553
        %v2645 = vpop.f32.mrf.mxu0
        %v2646 = vadd.f32 0.0, %v2645
        %v2647 = vpop.f32.mrf.mxu0
        %v2648 = vpop.f32.mrf.mxu0
        %v2649 = vadd.f32 0.0, %v2648
        %v2650 = vpop.f32.mrf.mxu0
        %2651 = vdwg.mxu0
        %v2656 = vunpack.c.l.b16 %v1875
        %v2657 = vunpack.c.l.b16 %v1876
        %v2658 = vunpack.c.l.b16 %v1877
        %v2659 = vunpack.c.l.b16 %v1878
        %v2660 = vpack.c.b16 %v2657, %v2656
        %v2661 = vpack.c.b16 %v2659, %v2658
        %v2665 = vsel %vm1317, %v1867, 0
        %v2668 = vsel %vm1317, %v1868, 0
        %v2671 = vsel %vm1317, %v1869, 0
        %v2674 = vsel %vm1317, %v1870, 0
        %v2677 = vsel %vm1317, %v1871, 0
        %v2680 = vsel %vm1317, %v1872, 0
        %v2683 = vsel %vm1317, %v1873, 0
        %v2686 = vsel %vm1317, %v1874, 0
        %2688 = vmatprep.subr.bf16.mxu0 0
        %2689 = vmatpush1.bf16.msra.mxu0 0
        %2690 = vmatprep.subr.bf16.mxu0 0
        %2691 = vmatpush1.bf16.msra.mxu0 0
        %2692 = vmatprep.subr.bf16.mxu0 0
        %2693 = vmatpush1.bf16.msra.mxu0 0
        %2694 = vmatprep.subr.bf16.mxu0 0
        %2695 = vmatpush1.bf16.msra.mxu0 0
        %2696 = vmatprep.subr.bf16.mxu0 0
        %2697 = vmatpush1.bf16.msra.mxu0 0
        %2698 = vmatprep.subr.bf16.mxu0 0
        %2699 = vmatpush1.bf16.msra.mxu0 0
        %2700 = vmatprep.subr.bf16.mxu0 0
        %2701 = vmatpush1.bf16.msra.mxu0 %v2661
        %2702 = vmatprep.subr.bf16.mxu0 0
        %2703 = vmatpush1.bf16.msra.mxu0 %v2660
        %2704 = vmatprep.subr.bf16.mxu0 0
        %2705 = vmatpush2.bf16.msra.mxu0 0
        %2706 = vmatprep.subr.bf16.mxu0 0
        %2707 = vmatpush2.bf16.msra.mxu0 0
        %2708 = vmatprep.subr.bf16.mxu0 0
        %2709 = vmatpush2.bf16.msra.mxu0 0
        %2710 = vmatprep.subr.bf16.mxu0 0
        %2711 = vmatpush2.bf16.msra.mxu0 0
        %2712 = vmatprep.subr.bf16.mxu0 0
        %2713 = vmatpush2.bf16.msra.mxu0 0
        %2714 = vmatprep.subr.bf16.mxu0 0
        %2715 = vmatpush2.bf16.msra.mxu0 0
        %2716 = vmatprep.subr.bf16.mxu0 0
        %2717 = vmatpush2.bf16.msra.mxu0 0
        %2718 = vmatprep.subr.bf16.mxu0 0
        %2719 = vmatpush2.bf16.msra.mxu0 0
        %2720 = vmatprep.mubr.bf16.mxu0 0
        %2721 = vmatmul.mubr.bf16.gmra.mxu0 %v2665
        %v2722 = vpop.f32.mrf.mxu0
        %v2723 = vadd.f32 %v2590, %v2722
        %v2724 = vpop.f32.mrf.mxu0
        %v2725 = vpop.f32.mrf.mxu0
        %v2726 = vadd.f32 %v2593, %v2725
        %v2727 = vpop.f32.mrf.mxu0
        %2728 = vmatprep.mubr.bf16.mxu0 0
        %2729 = vmatmul.mubr.bf16.gmra.mxu0 %v2668
        %v2730 = vpop.f32.mrf.mxu0
        %v2731 = vadd.f32 %v2598, %v2730
        %v2732 = vpop.f32.mrf.mxu0
        %v2733 = vpop.f32.mrf.mxu0
        %v2734 = vadd.f32 %v2601, %v2733
        %v2735 = vpop.f32.mrf.mxu0
        %2736 = vmatprep.mubr.bf16.mxu0 0
        %2737 = vmatmul.mubr.bf16.gmra.mxu0 %v2671
        %v2738 = vpop.f32.mrf.mxu0
        %v2739 = vadd.f32 %v2606, %v2738
        %v2740 = vpop.f32.mrf.mxu0
        %v2741 = vpop.f32.mrf.mxu0
        %v2742 = vadd.f32 %v2609, %v2741
        %v2743 = vpop.f32.mrf.mxu0
        %2744 = vmatprep.mubr.bf16.mxu0 0
        %2745 = vmatmul.mubr.bf16.gmra.mxu0 %v2674
        %v2746 = vpop.f32.mrf.mxu0
        %v2747 = vadd.f32 %v2614, %v2746
        %v2748 = vpop.f32.mrf.mxu0
        %v2749 = vpop.f32.mrf.mxu0
        %v2750 = vadd.f32 %v2617, %v2749
        %v2751 = vpop.f32.mrf.mxu0
        %2752 = vmatprep.mubr.bf16.mxu0 0
        %2753 = vmatmul.mubr.bf16.gmra.mxu0 %v2677
        %v2754 = vpop.f32.mrf.mxu0
        %v2755 = vadd.f32 %v2622, %v2754
        %v2756 = vpop.f32.mrf.mxu0
        %v2757 = vpop.f32.mrf.mxu0
        %v2758 = vadd.f32 %v2625, %v2757
        %v2759 = vpop.f32.mrf.mxu0
        %2760 = vmatprep.mubr.bf16.mxu0 0
        %2761 = vmatmul.mubr.bf16.gmra.mxu0 %v2680
        %v2762 = vpop.f32.mrf.mxu0
        %v2763 = vadd.f32 %v2630, %v2762
        %v2764 = vpop.f32.mrf.mxu0
        %v2765 = vpop.f32.mrf.mxu0
        %v2766 = vadd.f32 %v2633, %v2765
        %v2767 = vpop.f32.mrf.mxu0
        %2768 = vmatprep.mubr.bf16.mxu0 0
        %2769 = vmatmul.mubr.bf16.gmra.mxu0 %v2683
        %v2770 = vpop.f32.mrf.mxu0
        %v2771 = vadd.f32 %v2638, %v2770
        %v2772 = vpop.f32.mrf.mxu0
        %v2773 = vpop.f32.mrf.mxu0
        %v2774 = vadd.f32 %v2641, %v2773
        %v2775 = vpop.f32.mrf.mxu0
        %2776 = vmatprep.mubr.bf16.mxu0 0
        %2777 = vmatmul.mubr.bf16.gmra.mxu0 %v2686
        %v2778 = vpop.f32.mrf.mxu0
        %v2779 = vadd.f32 %v2646, %v2778
        %v2780 = vpop.f32.mrf.mxu0
        %v2781 = vpop.f32.mrf.mxu0
        %v2782 = vadd.f32 %v2649, %v2781
        %v2783 = vpop.f32.mrf.mxu0
        %2784 = vdwg.mxu0
        %2785 = vrot.lane.b32.xlu0 %v1293, 64
        %v2786 = vpop.permute.xlu0 %2785
        %2787 = vrot.lane.b32.xlu0 %v1294, 64
        %v2788 = vpop.permute.xlu0 %2787
        %2789 = vrot.lane.b32.xlu0 %v1295, 64
        %v2790 = vpop.permute.xlu0 %2789
        %2791 = vrot.lane.b32.xlu0 %v1296, 64
        %v2792 = vpop.permute.xlu0 %2791
        %2793 = vrot.lane.b32.xlu0 %v1301, 64
        %v2794 = vpop.permute.xlu0 %2793
        %2795 = vrot.lane.b32.xlu0 %v1302, 64
        %v2796 = vpop.permute.xlu0 %2795
        %2797 = vrot.lane.b32.xlu0 %v1303, 64
        %v2798 = vpop.permute.xlu0 %2797
        %2799 = vrot.lane.b32.xlu0 %v1304, 64
        %v2800 = vpop.permute.xlu0 %2799
        %v2802 = vsel %vm1317, %v2786, 0
        %v2805 = vsel %vm1317, %v2788, 0
        %v2808 = vsel %vm1317, %v2790, 0
        %v2811 = vsel %vm1317, %v2792, 0
        %v2814 = vsel %vm1317, %v2794, 0
        %v2817 = vsel %vm1317, %v2796, 0
        %v2820 = vsel %vm1317, %v2798, 0
        %v2823 = vsel %vm1317, %v2800, 0
        %2825 = vmatprep.subr.bf16.mxu0 0
        %2826 = vmatpush1.bf16.xpose.msra.mxu0 0
        %2827 = vmatprep.subr.bf16.mxu0 0
        %2828 = vmatpush1.bf16.xpose.msra.mxu0 0
        %2829 = vmatprep.subr.bf16.mxu0 0
        %2830 = vmatpush1.bf16.xpose.msra.mxu0 0
        %2831 = vmatprep.subr.bf16.mxu0 0
        %2832 = vmatpush1.bf16.xpose.msra.mxu0 0
        %2833 = vmatprep.subr.bf16.mxu0 0
        %2834 = vmatpush1.bf16.xpose.msra.mxu0 %v2823
        %2835 = vmatprep.subr.bf16.mxu0 0
        %2836 = vmatpush1.bf16.xpose.msra.mxu0 %v2820
        %2837 = vmatprep.subr.bf16.mxu0 0
        %2838 = vmatpush1.bf16.xpose.msra.mxu0 %v2817
        %2839 = vmatprep.subr.bf16.mxu0 0
        %2840 = vmatpush1.bf16.xpose.msra.mxu0 %v2814
        %2841 = vmatprep.subr.bf16.mxu0 0
        %2842 = vmatpush2.bf16.xpose.msra.mxu0 0
        %2843 = vmatprep.subr.bf16.mxu0 0
        %2844 = vmatpush2.bf16.xpose.msra.mxu0 0
        %2845 = vmatprep.subr.bf16.mxu0 0
        %2846 = vmatpush2.bf16.xpose.msra.mxu0 0
        %2847 = vmatprep.subr.bf16.mxu0 0
        %2848 = vmatpush2.bf16.xpose.msra.mxu0 0
        %2849 = vmatprep.subr.bf16.mxu0 0
        %2850 = vmatpush2.bf16.xpose.msra.mxu0 0
        %2851 = vmatprep.subr.bf16.mxu0 0
        %2852 = vmatpush2.bf16.xpose.msra.mxu0 0
        %2853 = vmatprep.subr.bf16.mxu0 0
        %2854 = vmatpush2.bf16.xpose.msra.mxu0 0
        %2855 = vmatprep.subr.bf16.mxu0 0
        %2856 = vmatpush2.bf16.xpose.msra.mxu0 0
        %2857 = vmatprep.mubr.bf16.mxu0 0
        %2858 = vmatmul.mubr.bf16.gmra.mxu0 %v2802
        %v2859 = vpop.f32.mrf.mxu0
        %v2860 = vadd.f32 0.0, %v2859
        %v2861 = vpop.f32.mrf.mxu0
        %v2862 = vpop.f32.mrf.mxu0
        %v2863 = vadd.f32 0.0, %v2862
        %v2864 = vpop.f32.mrf.mxu0
        %2865 = vmatprep.mubr.bf16.mxu0 0
        %2866 = vmatmul.mubr.bf16.gmra.mxu0 %v2805
        %v2867 = vpop.f32.mrf.mxu0
        %v2868 = vadd.f32 0.0, %v2867
        %v2869 = vpop.f32.mrf.mxu0
        %v2870 = vpop.f32.mrf.mxu0
        %v2871 = vadd.f32 0.0, %v2870
        %v2872 = vpop.f32.mrf.mxu0
        %2873 = vmatprep.mubr.bf16.mxu0 0
        %2874 = vmatmul.mubr.bf16.gmra.mxu0 %v2808
        %v2875 = vpop.f32.mrf.mxu0
        %v2876 = vadd.f32 0.0, %v2875
        %v2877 = vpop.f32.mrf.mxu0
        %v2878 = vpop.f32.mrf.mxu0
        %v2879 = vadd.f32 0.0, %v2878
        %v2880 = vpop.f32.mrf.mxu0
        %2881 = vmatprep.mubr.bf16.mxu0 0
        %2882 = vmatmul.mubr.bf16.gmra.mxu0 %v2811
        %v2883 = vpop.f32.mrf.mxu0
        %v2884 = vadd.f32 0.0, %v2883
        %v2885 = vpop.f32.mrf.mxu0
        %v2886 = vpop.f32.mrf.mxu0
        %v2887 = vadd.f32 0.0, %v2886
        %v2888 = vpop.f32.mrf.mxu0
        %2889 = vdwg.mxu0
        %2890 = vrot.lane.b32.xlu0 %v1297, 64
        %v2891 = vpop.permute.xlu0 %2890
        %2892 = vrot.lane.b32.xlu0 %v1298, 64
        %v2893 = vpop.permute.xlu0 %2892
        %2894 = vrot.lane.b32.xlu0 %v1299, 64
        %v2895 = vpop.permute.xlu0 %2894
        %2896 = vrot.lane.b32.xlu0 %v1300, 64
        %v2897 = vpop.permute.xlu0 %2896
        %2898 = vrot.lane.b32.xlu0 %v1305, 64
        %v2899 = vpop.permute.xlu0 %2898
        %2900 = vrot.lane.b32.xlu0 %v1306, 64
        %v2901 = vpop.permute.xlu0 %2900
        %2902 = vrot.lane.b32.xlu0 %v1307, 64
        %v2903 = vpop.permute.xlu0 %2902
        %2904 = vrot.lane.b32.xlu0 %v1308, 64
        %v2905 = vpop.permute.xlu0 %2904
        %v2907 = vsel %vm1317, %v2891, 0
        %v2910 = vsel %vm1317, %v2893, 0
        %v2913 = vsel %vm1317, %v2895, 0
        %v2916 = vsel %vm1317, %v2897, 0
        %v2919 = vsel %vm1317, %v2899, 0
        %v2922 = vsel %vm1317, %v2901, 0
        %v2925 = vsel %vm1317, %v2903, 0
        %v2928 = vsel %vm1317, %v2905, 0
        %2930 = vmatprep.subr.bf16.mxu0 0
        %2931 = vmatpush1.bf16.xpose.msra.mxu0 0
        %2932 = vmatprep.subr.bf16.mxu0 0
        %2933 = vmatpush1.bf16.xpose.msra.mxu0 0
        %2934 = vmatprep.subr.bf16.mxu0 0
        %2935 = vmatpush1.bf16.xpose.msra.mxu0 0
        %2936 = vmatprep.subr.bf16.mxu0 0
        %2937 = vmatpush1.bf16.xpose.msra.mxu0 0
        %2938 = vmatprep.subr.bf16.mxu0 0
        %2939 = vmatpush1.bf16.xpose.msra.mxu0 %v2928
        %2940 = vmatprep.subr.bf16.mxu0 0
        %2941 = vmatpush1.bf16.xpose.msra.mxu0 %v2925
        %2942 = vmatprep.subr.bf16.mxu0 0
        %2943 = vmatpush1.bf16.xpose.msra.mxu0 %v2922
        %2944 = vmatprep.subr.bf16.mxu0 0
        %2945 = vmatpush1.bf16.xpose.msra.mxu0 %v2919
        %2946 = vmatprep.subr.bf16.mxu0 0
        %2947 = vmatpush2.bf16.xpose.msra.mxu0 0
        %2948 = vmatprep.subr.bf16.mxu0 0
        %2949 = vmatpush2.bf16.xpose.msra.mxu0 0
        %2950 = vmatprep.subr.bf16.mxu0 0
        %2951 = vmatpush2.bf16.xpose.msra.mxu0 0
        %2952 = vmatprep.subr.bf16.mxu0 0
        %2953 = vmatpush2.bf16.xpose.msra.mxu0 0
        %2954 = vmatprep.subr.bf16.mxu0 0
        %2955 = vmatpush2.bf16.xpose.msra.mxu0 0
        %2956 = vmatprep.subr.bf16.mxu0 0
        %2957 = vmatpush2.bf16.xpose.msra.mxu0 0
        %2958 = vmatprep.subr.bf16.mxu0 0
        %2959 = vmatpush2.bf16.xpose.msra.mxu0 0
        %2960 = vmatprep.subr.bf16.mxu0 0
        %2961 = vmatpush2.bf16.xpose.msra.mxu0 0
        %2962 = vmatprep.mubr.bf16.mxu0 0
        %2963 = vmatmul.mubr.bf16.gmra.mxu0 %v2907
        %v2964 = vpop.f32.mrf.mxu0
        %v2965 = vadd.f32 0.0, %v2964
        %v2966 = vpop.f32.mrf.mxu0
        %v2967 = vpop.f32.mrf.mxu0
        %v2968 = vadd.f32 0.0, %v2967
        %v2969 = vpop.f32.mrf.mxu0
        %2970 = vmatprep.mubr.bf16.mxu0 0
        %2971 = vmatmul.mubr.bf16.gmra.mxu0 %v2910
        %v2972 = vpop.f32.mrf.mxu0
        %v2973 = vadd.f32 0.0, %v2972
        %v2974 = vpop.f32.mrf.mxu0
        %v2975 = vpop.f32.mrf.mxu0
        %v2976 = vadd.f32 0.0, %v2975
        %v2977 = vpop.f32.mrf.mxu0
        %2978 = vmatprep.mubr.bf16.mxu0 0
        %2979 = vmatmul.mubr.bf16.gmra.mxu0 %v2913
        %v2980 = vpop.f32.mrf.mxu0
        %v2981 = vadd.f32 0.0, %v2980
        %v2982 = vpop.f32.mrf.mxu0
        %v2983 = vpop.f32.mrf.mxu0
        %v2984 = vadd.f32 0.0, %v2983
        %v2985 = vpop.f32.mrf.mxu0
        %2986 = vmatprep.mubr.bf16.mxu0 0
        %2987 = vmatmul.mubr.bf16.gmra.mxu0 %v2916
        %v2988 = vpop.f32.mrf.mxu0
        %v2989 = vadd.f32 0.0, %v2988
        %v2990 = vpop.f32.mrf.mxu0
        %v2991 = vpop.f32.mrf.mxu0
        %v2992 = vadd.f32 0.0, %v2991
        %v2993 = vpop.f32.mrf.mxu0
        %2994 = vdwg.mxu0
        %v2995 = vmul.f32 %v2860, 0.17677669
        %v2996 = vmul.f32 %v2863, 0.17677669
        %v2997 = vmul.f32 %v2868, 0.17677669
        %v2998 = vmul.f32 %v2871, 0.17677669
        %v2999 = vmul.f32 %v2876, 0.17677669
        %v3000 = vmul.f32 %v2879, 0.17677669
        %v3001 = vmul.f32 %v2884, 0.17677669
        %v3002 = vmul.f32 %v2887, 0.17677669
        %v3003 = vmul.f32 %v2965, 0.17677669
        %v3004 = vmul.f32 %v2968, 0.17677669
        %v3005 = vmul.f32 %v2973, 0.17677669
        %v3006 = vmul.f32 %v2976, 0.17677669
        %v3007 = vmul.f32 %v2981, 0.17677669
        %v3008 = vmul.f32 %v2984, 0.17677669
        %v3009 = vmul.f32 %v2989, 0.17677669
        %v3010 = vmul.f32 %v2992, 0.17677669
        %v3011 = vadd.f32 %v2995, %v848
        %v3012 = vadd.f32 %v2996, %v848
        %v3013 = vadd.f32 %v2997, %v848
        %v3014 = vadd.f32 %v2998, %v848
        %v3015 = vadd.f32 %v2999, %v848
        %v3016 = vadd.f32 %v3000, %v848
        %v3017 = vadd.f32 %v3001, %v848
        %v3018 = vadd.f32 %v3002, %v848
        %v3019 = vadd.f32 %v3003, %v852
        %v3020 = vadd.f32 %v3004, %v852
        %v3021 = vadd.f32 %v3005, %v852
        %v3022 = vadd.f32 %v3006, %v852
        %v3023 = vadd.f32 %v3007, %v852
        %v3024 = vadd.f32 %v3008, %v852
        %v3025 = vadd.f32 %v3009, %v852
        %v3026 = vadd.f32 %v3010, %v852
        %v3027 = vsel %vm1528, %v3011, -inf
        %3028 = vmax.xlane.f32.xlu0 %v3027
        %v3029 = vpop.xlane.xlu0 %3028
        %v3030 = vsel %vm1528, %v3012, -inf
        %3031 = vmax.xlane.f32.xlu0 %v3030
        %v3032 = vpop.xlane.xlu0 %3031
        %v3033 = vsel %vm1528, %v3013, -inf
        %3034 = vmax.xlane.f32.xlu0 %v3033
        %v3035 = vpop.xlane.xlu0 %3034
        %v3036 = vsel %vm1528, %v3014, -inf
        %3037 = vmax.xlane.f32.xlu0 %v3036
        %v3038 = vpop.xlane.xlu0 %3037
        %v3039 = vsel %vm1528, %v3015, -inf
        %3040 = vmax.xlane.f32.xlu0 %v3039
        %v3041 = vpop.xlane.xlu0 %3040
        %v3042 = vsel %vm1528, %v3016, -inf
        %3043 = vmax.xlane.f32.xlu0 %v3042
        %v3044 = vpop.xlane.xlu0 %3043
        %v3045 = vsel %vm1528, %v3017, -inf
        %3046 = vmax.xlane.f32.xlu0 %v3045
        %v3047 = vpop.xlane.xlu0 %3046
        %v3048 = vsel %vm1528, %v3018, -inf
        %3049 = vmax.xlane.f32.xlu0 %v3048
        %v3050 = vpop.xlane.xlu0 %3049
        %v3051 = vsel %vm1528, %v3019, -inf
        %3052 = vmax.xlane.f32.xlu0 %v3051
        %v3053 = vpop.xlane.xlu0 %3052
        %v3054 = vsel %vm1528, %v3020, -inf
        %3055 = vmax.xlane.f32.xlu0 %v3054
        %v3056 = vpop.xlane.xlu0 %3055
        %v3057 = vsel %vm1528, %v3021, -inf
        %3058 = vmax.xlane.f32.xlu0 %v3057
        %v3059 = vpop.xlane.xlu0 %3058
        %v3060 = vsel %vm1528, %v3022, -inf
        %3061 = vmax.xlane.f32.xlu0 %v3060
        %v3062 = vpop.xlane.xlu0 %3061
        %v3063 = vsel %vm1528, %v3023, -inf
        %3064 = vmax.xlane.f32.xlu0 %v3063
        %v3065 = vpop.xlane.xlu0 %3064
        %v3066 = vsel %vm1528, %v3024, -inf
        %3067 = vmax.xlane.f32.xlu0 %v3066
        %v3068 = vpop.xlane.xlu0 %3067
        %v3069 = vsel %vm1528, %v3025, -inf
        %3070 = vmax.xlane.f32.xlu0 %v3069
        %v3071 = vpop.xlane.xlu0 %3070
        %v3072 = vsel %vm1528, %v3026, -inf
        %3073 = vmax.xlane.f32.xlu0 %v3072
        %v3074 = vpop.xlane.xlu0 %3073
        %v3075 = vsub.f32 %v3011, %v3029
        %v3076 = vsub.f32 %v3012, %v3032
        %v3077 = vsub.f32 %v3013, %v3035
        %v3078 = vsub.f32 %v3014, %v3038
        %v3079 = vsub.f32 %v3015, %v3041
        %v3080 = vsub.f32 %v3016, %v3044
        %v3081 = vsub.f32 %v3017, %v3047
        %v3082 = vsub.f32 %v3018, %v3050
        %v3083 = vsub.f32 %v3019, %v3053
        %v3084 = vsub.f32 %v3020, %v3056
        %v3085 = vsub.f32 %v3021, %v3059
        %v3086 = vsub.f32 %v3022, %v3062
        %v3087 = vsub.f32 %v3023, %v3065
        %v3088 = vsub.f32 %v3024, %v3068
        %v3089 = vsub.f32 %v3025, %v3071
        %v3090 = vsub.f32 %v3026, %v3074
        %v3091 = vmul.f32 %v3075, 1.442695
        %v3092 = vpow.pop %v3091
        %v3093 = vmul.f32 %v3076, 1.442695
        %v3094 = vpow.pop %v3093
        %v3095 = vmul.f32 %v3077, 1.442695
        %v3096 = vpow.pop %v3095
        %v3097 = vmul.f32 %v3078, 1.442695
        %v3098 = vpow.pop %v3097
        %v3099 = vmul.f32 %v3079, 1.442695
        %v3100 = vpow.pop %v3099
        %v3101 = vmul.f32 %v3080, 1.442695
        %v3102 = vpow.pop %v3101
        %v3103 = vmul.f32 %v3081, 1.442695
        %v3104 = vpow.pop %v3103
        %v3105 = vmul.f32 %v3082, 1.442695
        %v3106 = vpow.pop %v3105
        %v3107 = vmul.f32 %v3083, 1.442695
        %v3108 = vpow.pop %v3107
        %v3109 = vmul.f32 %v3084, 1.442695
        %v3110 = vpow.pop %v3109
        %v3111 = vmul.f32 %v3085, 1.442695
        %v3112 = vpow.pop %v3111
        %v3113 = vmul.f32 %v3086, 1.442695
        %v3114 = vpow.pop %v3113
        %v3115 = vmul.f32 %v3087, 1.442695
        %v3116 = vpow.pop %v3115
        %v3117 = vmul.f32 %v3088, 1.442695
        %v3118 = vpow.pop %v3117
        %v3119 = vmul.f32 %v3089, 1.442695
        %v3120 = vpow.pop %v3119
        %v3121 = vmul.f32 %v3090, 1.442695
        %v3122 = vpow.pop %v3121
        %v3123 = vsel %vm1528, %v3092, 0.0
        %3124 = vadd.xlane.f32.xlu0 %v3123
        %v3125 = vpop.xlane.xlu0 %3124
        %v3126 = vsel %vm1528, %v3094, 0.0
        %3127 = vadd.xlane.f32.xlu0 %v3126
        %v3128 = vpop.xlane.xlu0 %3127
        %v3129 = vsel %vm1528, %v3096, 0.0
        %3130 = vadd.xlane.f32.xlu0 %v3129
        %v3131 = vpop.xlane.xlu0 %3130
        %v3132 = vsel %vm1528, %v3098, 0.0
        %3133 = vadd.xlane.f32.xlu0 %v3132
        %v3134 = vpop.xlane.xlu0 %3133
        %v3135 = vsel %vm1528, %v3100, 0.0
        %3136 = vadd.xlane.f32.xlu0 %v3135
        %v3137 = vpop.xlane.xlu0 %3136
        %v3138 = vsel %vm1528, %v3102, 0.0
        %3139 = vadd.xlane.f32.xlu0 %v3138
        %v3140 = vpop.xlane.xlu0 %3139
        %v3141 = vsel %vm1528, %v3104, 0.0
        %3142 = vadd.xlane.f32.xlu0 %v3141
        %v3143 = vpop.xlane.xlu0 %3142
        %v3144 = vsel %vm1528, %v3106, 0.0
        %3145 = vadd.xlane.f32.xlu0 %v3144
        %v3146 = vpop.xlane.xlu0 %3145
        %v3147 = vsel %vm1528, %v3108, 0.0
        %3148 = vadd.xlane.f32.xlu0 %v3147
        %v3149 = vpop.xlane.xlu0 %3148
        %v3150 = vsel %vm1528, %v3110, 0.0
        %3151 = vadd.xlane.f32.xlu0 %v3150
        %v3152 = vpop.xlane.xlu0 %3151
        %v3153 = vsel %vm1528, %v3112, 0.0
        %3154 = vadd.xlane.f32.xlu0 %v3153
        %v3155 = vpop.xlane.xlu0 %3154
        %v3156 = vsel %vm1528, %v3114, 0.0
        %3157 = vadd.xlane.f32.xlu0 %v3156
        %v3158 = vpop.xlane.xlu0 %3157
        %v3159 = vsel %vm1528, %v3116, 0.0
        %3160 = vadd.xlane.f32.xlu0 %v3159
        %v3161 = vpop.xlane.xlu0 %3160
        %v3162 = vsel %vm1528, %v3118, 0.0
        %3163 = vadd.xlane.f32.xlu0 %v3162
        %v3164 = vpop.xlane.xlu0 %3163
        %v3165 = vsel %vm1528, %v3120, 0.0
        %3166 = vadd.xlane.f32.xlu0 %v3165
        %v3167 = vpop.xlane.xlu0 %3166
        %v3168 = vsel %vm1528, %v3122, 0.0
        %3169 = vadd.xlane.f32.xlu0 %v3168
        %v3170 = vpop.xlane.xlu0 %3169
        %v3171 = vrcp.pop %v3125
        %v3172 = vrcp.pop %v3128
        %v3173 = vrcp.pop %v3131
        %v3174 = vrcp.pop %v3134
        %v3175 = vrcp.pop %v3137
        %v3176 = vrcp.pop %v3140
        %v3177 = vrcp.pop %v3143
        %v3178 = vrcp.pop %v3146
        %v3179 = vrcp.pop %v3149
        %v3180 = vrcp.pop %v3152
        %v3181 = vrcp.pop %v3155
        %v3182 = vrcp.pop %v3158
        %v3183 = vrcp.pop %v3161
        %v3184 = vrcp.pop %v3164
        %v3185 = vrcp.pop %v3167
        %v3186 = vrcp.pop %v3170
        %v3187 = vmul.f32 %v3092, %v3171
        %v3188 = vmul.f32 %v3094, %v3172
        %v3189 = vmul.f32 %v3096, %v3173
        %v3190 = vmul.f32 %v3098, %v3174
        %v3191 = vmul.f32 %v3100, %v3175
        %v3192 = vmul.f32 %v3102, %v3176
        %v3193 = vmul.f32 %v3104, %v3177
        %v3194 = vmul.f32 %v3106, %v3178
        %v3195 = vmul.f32 %v3108, %v3179
        %v3196 = vmul.f32 %v3110, %v3180
        %v3197 = vmul.f32 %v3112, %v3181
        %v3198 = vmul.f32 %v3114, %v3182
        %v3199 = vmul.f32 %v3116, %v3183
        %v3200 = vmul.f32 %v3118, %v3184
        %v3201 = vmul.f32 %v3120, %v3185
        %v3202 = vmul.f32 %v3122, %v3186
        %v3203 = vpack.c.bf16 %v3188, %v3187
        %v3204 = vpack.c.bf16 %v3190, %v3189
        %v3205 = vpack.c.bf16 %v3192, %v3191
        %v3206 = vpack.c.bf16 %v3194, %v3193
        %v3207 = vpack.c.bf16 %v3196, %v3195
        %v3208 = vpack.c.bf16 %v3198, %v3197
        %v3209 = vpack.c.bf16 %v3200, %v3199
        %v3210 = vpack.c.bf16 %v3202, %v3201
        %3211 = vrot.lane.b32.xlu0 %v1309, 64
        %v3212 = vpop.permute.xlu0 %3211
        %3213 = vrot.lane.b32.xlu0 %v1310, 64
        %v3214 = vpop.permute.xlu0 %3213
        %3215 = vrot.lane.b32.xlu0 %v1311, 64
        %v3216 = vpop.permute.xlu0 %3215
        %3217 = vrot.lane.b32.xlu0 %v1312, 64
        %v3218 = vpop.permute.xlu0 %3217
        %v3224 = vsel %vm1528, %v3203, 0
        %v3227 = vsel %vm1528, %v3204, 0
        %v3230 = vsel %vm1528, %v3205, 0
        %v3233 = vsel %vm1528, %v3206, 0
        %3235 = vmatprep.subr.bf16.mxu0 0
        %3236 = vmatpush1.bf16.msra.mxu0 0
        %3237 = vmatprep.subr.bf16.mxu0 0
        %3238 = vmatpush1.bf16.msra.mxu0 0
        %3239 = vmatprep.subr.bf16.mxu0 0
        %3240 = vmatpush1.bf16.msra.mxu0 0
        %3241 = vmatprep.subr.bf16.mxu0 0
        %3242 = vmatpush1.bf16.msra.mxu0 0
        %3243 = vmatprep.subr.bf16.mxu0 0
        %3244 = vmatpush1.bf16.msra.mxu0 %v3218
        %3245 = vmatprep.subr.bf16.mxu0 0
        %3246 = vmatpush1.bf16.msra.mxu0 %v3216
        %3247 = vmatprep.subr.bf16.mxu0 0
        %3248 = vmatpush1.bf16.msra.mxu0 %v3214
        %3249 = vmatprep.subr.bf16.mxu0 0
        %3250 = vmatpush1.bf16.msra.mxu0 %v3212
        %3251 = vmatprep.subr.bf16.mxu0 0
        %3252 = vmatpush2.bf16.msra.mxu0 0
        %3253 = vmatprep.subr.bf16.mxu0 0
        %3254 = vmatpush2.bf16.msra.mxu0 0
        %3255 = vmatprep.subr.bf16.mxu0 0
        %3256 = vmatpush2.bf16.msra.mxu0 0
        %3257 = vmatprep.subr.bf16.mxu0 0
        %3258 = vmatpush2.bf16.msra.mxu0 0
        %3259 = vmatprep.subr.bf16.mxu0 0
        %3260 = vmatpush2.bf16.msra.mxu0 0
        %3261 = vmatprep.subr.bf16.mxu0 0
        %3262 = vmatpush2.bf16.msra.mxu0 0
        %3263 = vmatprep.subr.bf16.mxu0 0
        %3264 = vmatpush2.bf16.msra.mxu0 0
        %3265 = vmatprep.subr.bf16.mxu0 0
        %3266 = vmatpush2.bf16.msra.mxu0 0
        %3267 = vmatprep.mubr.bf16.mxu0 0
        %3268 = vmatmul.mubr.bf16.gmra.mxu0 %v3224
        %v3269 = vpop.f32.mrf.mxu0
        %v3270 = vadd.f32 0.0, %v3269
        %v3271 = vpop.f32.mrf.mxu0
        %v3272 = vpop.f32.mrf.mxu0
        %v3273 = vadd.f32 0.0, %v3272
        %v3274 = vpop.f32.mrf.mxu0
        %3275 = vmatprep.mubr.bf16.mxu0 0
        %3276 = vmatmul.mubr.bf16.gmra.mxu0 %v3227
        %v3277 = vpop.f32.mrf.mxu0
        %v3278 = vadd.f32 0.0, %v3277
        %v3279 = vpop.f32.mrf.mxu0
        %v3280 = vpop.f32.mrf.mxu0
        %v3281 = vadd.f32 0.0, %v3280
        %v3282 = vpop.f32.mrf.mxu0
        %3283 = vmatprep.mubr.bf16.mxu0 0
        %3284 = vmatmul.mubr.bf16.gmra.mxu0 %v3230
        %v3285 = vpop.f32.mrf.mxu0
        %v3286 = vadd.f32 0.0, %v3285
        %v3287 = vpop.f32.mrf.mxu0
        %v3288 = vpop.f32.mrf.mxu0
        %v3289 = vadd.f32 0.0, %v3288
        %v3290 = vpop.f32.mrf.mxu0
        %3291 = vmatprep.mubr.bf16.mxu0 0
        %3292 = vmatmul.mubr.bf16.gmra.mxu0 %v3233
        %v3293 = vpop.f32.mrf.mxu0
        %v3294 = vadd.f32 0.0, %v3293
        %v3295 = vpop.f32.mrf.mxu0
        %v3296 = vpop.f32.mrf.mxu0
        %v3297 = vadd.f32 0.0, %v3296
        %v3298 = vpop.f32.mrf.mxu0
        %3299 = vdwg.mxu0
        %3300 = vrot.lane.b32.xlu0 %v1313, 64
        %v3301 = vpop.permute.xlu0 %3300
        %3302 = vrot.lane.b32.xlu0 %v1314, 64
        %v3303 = vpop.permute.xlu0 %3302
        %3304 = vrot.lane.b32.xlu0 %v1315, 64
        %v3305 = vpop.permute.xlu0 %3304
        %3306 = vrot.lane.b32.xlu0 %v1316, 64
        %v3307 = vpop.permute.xlu0 %3306
        %v3313 = vsel %vm1528, %v3207, 0
        %v3316 = vsel %vm1528, %v3208, 0
        %v3319 = vsel %vm1528, %v3209, 0
        %v3322 = vsel %vm1528, %v3210, 0
        %3324 = vmatprep.subr.bf16.mxu0 0
        %3325 = vmatpush1.bf16.msra.mxu0 0
        %3326 = vmatprep.subr.bf16.mxu0 0
        %3327 = vmatpush1.bf16.msra.mxu0 0
        %3328 = vmatprep.subr.bf16.mxu0 0
        %3329 = vmatpush1.bf16.msra.mxu0 0
        %3330 = vmatprep.subr.bf16.mxu0 0
        %3331 = vmatpush1.bf16.msra.mxu0 0
        %3332 = vmatprep.subr.bf16.mxu0 0
        %3333 = vmatpush1.bf16.msra.mxu0 %v3307
        %3334 = vmatprep.subr.bf16.mxu0 0
        %3335 = vmatpush1.bf16.msra.mxu0 %v3305
        %3336 = vmatprep.subr.bf16.mxu0 0
        %3337 = vmatpush1.bf16.msra.mxu0 %v3303
        %3338 = vmatprep.subr.bf16.mxu0 0
        %3339 = vmatpush1.bf16.msra.mxu0 %v3301
        %3340 = vmatprep.subr.bf16.mxu0 0
        %3341 = vmatpush2.bf16.msra.mxu0 0
        %3342 = vmatprep.subr.bf16.mxu0 0
        %3343 = vmatpush2.bf16.msra.mxu0 0
        %3344 = vmatprep.subr.bf16.mxu0 0
        %3345 = vmatpush2.bf16.msra.mxu0 0
        %3346 = vmatprep.subr.bf16.mxu0 0
        %3347 = vmatpush2.bf16.msra.mxu0 0
        %3348 = vmatprep.subr.bf16.mxu0 0
        %3349 = vmatpush2.bf16.msra.mxu0 0
        %3350 = vmatprep.subr.bf16.mxu0 0
        %3351 = vmatpush2.bf16.msra.mxu0 0
        %3352 = vmatprep.subr.bf16.mxu0 0
        %3353 = vmatpush2.bf16.msra.mxu0 0
        %3354 = vmatprep.subr.bf16.mxu0 0
        %3355 = vmatpush2.bf16.msra.mxu0 0
        %3356 = vmatprep.mubr.bf16.mxu0 0
        %3357 = vmatmul.mubr.bf16.gmra.mxu0 %v3313
        %v3358 = vpop.f32.mrf.mxu0
        %v3359 = vadd.f32 0.0, %v3358
        %v3360 = vpop.f32.mrf.mxu0
        %v3361 = vpop.f32.mrf.mxu0
        %v3362 = vadd.f32 0.0, %v3361
        %v3363 = vpop.f32.mrf.mxu0
        %3364 = vmatprep.mubr.bf16.mxu0 0
        %3365 = vmatmul.mubr.bf16.gmra.mxu0 %v3316
        %v3366 = vpop.f32.mrf.mxu0
        %v3367 = vadd.f32 0.0, %v3366
        %v3368 = vpop.f32.mrf.mxu0
        %v3369 = vpop.f32.mrf.mxu0
        %v3370 = vadd.f32 0.0, %v3369
        %v3371 = vpop.f32.mrf.mxu0
        %3372 = vmatprep.mubr.bf16.mxu0 0
        %3373 = vmatmul.mubr.bf16.gmra.mxu0 %v3319
        %v3374 = vpop.f32.mrf.mxu0
        %v3375 = vadd.f32 0.0, %v3374
        %v3376 = vpop.f32.mrf.mxu0
        %v3377 = vpop.f32.mrf.mxu0
        %v3378 = vadd.f32 0.0, %v3377
        %v3379 = vpop.f32.mrf.mxu0
        %3380 = vmatprep.mubr.bf16.mxu0 0
        %3381 = vmatmul.mubr.bf16.gmra.mxu0 %v3322
        %v3382 = vpop.f32.mrf.mxu0
        %v3383 = vadd.f32 0.0, %v3382
        %v3384 = vpop.f32.mrf.mxu0
        %v3385 = vpop.f32.mrf.mxu0
        %v3386 = vadd.f32 0.0, %v3385
        %v3387 = vpop.f32.mrf.mxu0
        %3388 = vdwg.mxu0
        %v3389 = vpack.c.bf16 %v3273, %v3270
        %v3390 = vpack.c.bf16 %v3281, %v3278
        %v3391 = vpack.c.bf16 %v3289, %v3286
        %v3392 = vpack.c.bf16 %v3297, %v3294
        %v3393 = vpack.c.bf16 %v3362, %v3359
        %v3394 = vpack.c.bf16 %v3370, %v3367
        %v3395 = vpack.c.bf16 %v3378, %v3375
        %v3396 = vpack.c.bf16 %v3386, %v3383
        %v3397 = vld [vmem:[%s475 + $0x20] sm:$0xf]
        %v3398 = vld [vmem:[%s475 + $0x24] sm:$0xf]
        %v3399 = vld [vmem:[%s475 + $0x28] sm:$0xf]
        %v3400 = vld [vmem:[%s475 + $0x2c] sm:$0xf]
        %v3405 = vunpack.c.l.b16 %v3397
        %v3406 = vunpack.c.l.b16 %v3398
        %v3407 = vunpack.c.l.b16 %v3399
        %v3408 = vunpack.c.l.b16 %v3400
        %v3409 = vpack.c.b16 %v3406, %v3405
        %v3410 = vpack.c.b16 %v3408, %v3407
        %v3414 = vsel %vm1317, %v3389, 0
        %v3417 = vsel %vm1317, %v3390, 0
        %v3420 = vsel %vm1317, %v3391, 0
        %v3423 = vsel %vm1317, %v3392, 0
        %v3426 = vsel %vm1317, %v3393, 0
        %v3429 = vsel %vm1317, %v3394, 0
        %v3432 = vsel %vm1317, %v3395, 0
        %v3435 = vsel %vm1317, %v3396, 0
        %3437 = vmatprep.subr.bf16.mxu0 0
        %3438 = vmatpush1.bf16.msra.mxu0 0
        %3439 = vmatprep.subr.bf16.mxu0 0
        %3440 = vmatpush1.bf16.msra.mxu0 0
        %3441 = vmatprep.subr.bf16.mxu0 0
        %3442 = vmatpush1.bf16.msra.mxu0 0
        %3443 = vmatprep.subr.bf16.mxu0 0
        %3444 = vmatpush1.bf16.msra.mxu0 0
        %3445 = vmatprep.subr.bf16.mxu0 0
        %3446 = vmatpush1.bf16.msra.mxu0 0
        %3447 = vmatprep.subr.bf16.mxu0 0
        %3448 = vmatpush1.bf16.msra.mxu0 0
        %3449 = vmatprep.subr.bf16.mxu0 0
        %3450 = vmatpush1.bf16.msra.mxu0 %v3410
        %3451 = vmatprep.subr.bf16.mxu0 0
        %3452 = vmatpush1.bf16.msra.mxu0 %v3409
        %3453 = vmatprep.subr.bf16.mxu0 0
        %3454 = vmatpush2.bf16.msra.mxu0 0
        %3455 = vmatprep.subr.bf16.mxu0 0
        %3456 = vmatpush2.bf16.msra.mxu0 0
        %3457 = vmatprep.subr.bf16.mxu0 0
        %3458 = vmatpush2.bf16.msra.mxu0 0
        %3459 = vmatprep.subr.bf16.mxu0 0
        %3460 = vmatpush2.bf16.msra.mxu0 0
        %3461 = vmatprep.subr.bf16.mxu0 0
        %3462 = vmatpush2.bf16.msra.mxu0 0
        %3463 = vmatprep.subr.bf16.mxu0 0
        %3464 = vmatpush2.bf16.msra.mxu0 0
        %3465 = vmatprep.subr.bf16.mxu0 0
        %3466 = vmatpush2.bf16.msra.mxu0 0
        %3467 = vmatprep.subr.bf16.mxu0 0
        %3468 = vmatpush2.bf16.msra.mxu0 0
        %3469 = vmatprep.mubr.bf16.mxu0 0
        %3470 = vmatmul.mubr.bf16.gmra.mxu0 %v3414
        %v3471 = vpop.f32.mrf.mxu0
        %v3472 = vadd.f32 0.0, %v3471
        %v3473 = vpop.f32.mrf.mxu0
        %v3474 = vpop.f32.mrf.mxu0
        %v3475 = vadd.f32 0.0, %v3474
        %v3476 = vpop.f32.mrf.mxu0
        %3477 = vmatprep.mubr.bf16.mxu0 0
        %3478 = vmatmul.mubr.bf16.gmra.mxu0 %v3417
        %v3479 = vpop.f32.mrf.mxu0
        %v3480 = vadd.f32 0.0, %v3479
        %v3481 = vpop.f32.mrf.mxu0
        %v3482 = vpop.f32.mrf.mxu0
        %v3483 = vadd.f32 0.0, %v3482
        %v3484 = vpop.f32.mrf.mxu0
        %3485 = vmatprep.mubr.bf16.mxu0 0
        %3486 = vmatmul.mubr.bf16.gmra.mxu0 %v3420
        %v3487 = vpop.f32.mrf.mxu0
        %v3488 = vadd.f32 0.0, %v3487
        %v3489 = vpop.f32.mrf.mxu0
        %v3490 = vpop.f32.mrf.mxu0
        %v3491 = vadd.f32 0.0, %v3490
        %v3492 = vpop.f32.mrf.mxu0
        %3493 = vmatprep.mubr.bf16.mxu0 0
        %3494 = vmatmul.mubr.bf16.gmra.mxu0 %v3423
        %v3495 = vpop.f32.mrf.mxu0
        %v3496 = vadd.f32 0.0, %v3495
        %v3497 = vpop.f32.mrf.mxu0
        %v3498 = vpop.f32.mrf.mxu0
        %v3499 = vadd.f32 0.0, %v3498
        %v3500 = vpop.f32.mrf.mxu0
        %3501 = vmatprep.mubr.bf16.mxu0 0
        %3502 = vmatmul.mubr.bf16.gmra.mxu0 %v3426
        %v3503 = vpop.f32.mrf.mxu0
        %v3504 = vadd.f32 0.0, %v3503
        %v3505 = vpop.f32.mrf.mxu0
        %v3506 = vpop.f32.mrf.mxu0
        %v3507 = vadd.f32 0.0, %v3506
        %v3508 = vpop.f32.mrf.mxu0
        %3509 = vmatprep.mubr.bf16.mxu0 0
        %3510 = vmatmul.mubr.bf16.gmra.mxu0 %v3429
        %v3511 = vpop.f32.mrf.mxu0
        %v3512 = vadd.f32 0.0, %v3511
        %v3513 = vpop.f32.mrf.mxu0
        %v3514 = vpop.f32.mrf.mxu0
        %v3515 = vadd.f32 0.0, %v3514
        %v3516 = vpop.f32.mrf.mxu0
        %3517 = vmatprep.mubr.bf16.mxu0 0
        %3518 = vmatmul.mubr.bf16.gmra.mxu0 %v3432
        %v3519 = vpop.f32.mrf.mxu0
        %v3520 = vadd.f32 0.0, %v3519
        %v3521 = vpop.f32.mrf.mxu0
        %v3522 = vpop.f32.mrf.mxu0
        %v3523 = vadd.f32 0.0, %v3522
        %v3524 = vpop.f32.mrf.mxu0
        %3525 = vmatprep.mubr.bf16.mxu0 0
        %3526 = vmatmul.mubr.bf16.gmra.mxu0 %v3435
        %v3527 = vpop.f32.mrf.mxu0
        %v3528 = vadd.f32 0.0, %v3527
        %v3529 = vpop.f32.mrf.mxu0
        %v3530 = vpop.f32.mrf.mxu0
        %v3531 = vadd.f32 0.0, %v3530
        %v3532 = vpop.f32.mrf.mxu0
        %3533 = vdwg.mxu0
        %v3534 = vadd.f32 %v2723, %v3472
        %v3535 = vadd.f32 %v2726, %v3475
        %v3536 = vadd.f32 %v2731, %v3480
        %v3537 = vadd.f32 %v2734, %v3483
        %v3538 = vadd.f32 %v2739, %v3488
        %v3539 = vadd.f32 %v2742, %v3491
        %v3540 = vadd.f32 %v2747, %v3496
        %v3541 = vadd.f32 %v2750, %v3499
        %v3542 = vadd.f32 %v2755, %v3504
        %v3543 = vadd.f32 %v2758, %v3507
        %v3544 = vadd.f32 %v2763, %v3512
        %v3545 = vadd.f32 %v2766, %v3515
        %v3546 = vadd.f32 %v2771, %v3520
        %v3547 = vadd.f32 %v2774, %v3523
        %v3548 = vadd.f32 %v2779, %v3528
        %v3549 = vadd.f32 %v2782, %v3531
        %3550 = vrot.lane.b32.xlu0 %v1293, 32
        %v3551 = vpop.permute.xlu0 %3550
        %3552 = vrot.lane.b32.xlu0 %v1294, 32
        %v3553 = vpop.permute.xlu0 %3552
        %3554 = vrot.lane.b32.xlu0 %v1295, 32
        %v3555 = vpop.permute.xlu0 %3554
        %3556 = vrot.lane.b32.xlu0 %v1296, 32
        %v3557 = vpop.permute.xlu0 %3556
        %3558 = vrot.lane.b32.xlu0 %v1301, 32
        %v3559 = vpop.permute.xlu0 %3558
        %3560 = vrot.lane.b32.xlu0 %v1302, 32
        %v3561 = vpop.permute.xlu0 %3560
        %3562 = vrot.lane.b32.xlu0 %v1303, 32
        %v3563 = vpop.permute.xlu0 %3562
        %3564 = vrot.lane.b32.xlu0 %v1304, 32
        %v3565 = vpop.permute.xlu0 %3564
        %v3567 = vsel %vm1317, %v3551, 0
        %v3570 = vsel %vm1317, %v3553, 0
        %v3573 = vsel %vm1317, %v3555, 0
        %v3576 = vsel %vm1317, %v3557, 0
        %v3579 = vsel %vm1317, %v3559, 0
        %v3582 = vsel %vm1317, %v3561, 0
        %v3585 = vsel %vm1317, %v3563, 0
        %v3588 = vsel %vm1317, %v3565, 0
        %3590 = vmatprep.subr.bf16.mxu0 0
        %3591 = vmatpush1.bf16.xpose.msra.mxu0 0
        %3592 = vmatprep.subr.bf16.mxu0 0
        %3593 = vmatpush1.bf16.xpose.msra.mxu0 0
        %3594 = vmatprep.subr.bf16.mxu0 0
        %3595 = vmatpush1.bf16.xpose.msra.mxu0 0
        %3596 = vmatprep.subr.bf16.mxu0 0
        %3597 = vmatpush1.bf16.xpose.msra.mxu0 0
        %3598 = vmatprep.subr.bf16.mxu0 0
        %3599 = vmatpush1.bf16.xpose.msra.mxu0 %v3588
        %3600 = vmatprep.subr.bf16.mxu0 0
        %3601 = vmatpush1.bf16.xpose.msra.mxu0 %v3585
        %3602 = vmatprep.subr.bf16.mxu0 0
        %3603 = vmatpush1.bf16.xpose.msra.mxu0 %v3582
        %3604 = vmatprep.subr.bf16.mxu0 0
        %3605 = vmatpush1.bf16.xpose.msra.mxu0 %v3579
        %3606 = vmatprep.subr.bf16.mxu0 0
        %3607 = vmatpush2.bf16.xpose.msra.mxu0 0
        %3608 = vmatprep.subr.bf16.mxu0 0
        %3609 = vmatpush2.bf16.xpose.msra.mxu0 0
        %3610 = vmatprep.subr.bf16.mxu0 0
        %3611 = vmatpush2.bf16.xpose.msra.mxu0 0
        %3612 = vmatprep.subr.bf16.mxu0 0
        %3613 = vmatpush2.bf16.xpose.msra.mxu0 0
        %3614 = vmatprep.subr.bf16.mxu0 0
        %3615 = vmatpush2.bf16.xpose.msra.mxu0 0
        %3616 = vmatprep.subr.bf16.mxu0 0
        %3617 = vmatpush2.bf16.xpose.msra.mxu0 0
        %3618 = vmatprep.subr.bf16.mxu0 0
        %3619 = vmatpush2.bf16.xpose.msra.mxu0 0
        %3620 = vmatprep.subr.bf16.mxu0 0
        %3621 = vmatpush2.bf16.xpose.msra.mxu0 0
        %3622 = vmatprep.mubr.bf16.mxu0 0
        %3623 = vmatmul.mubr.bf16.gmra.mxu0 %v3567
        %v3624 = vpop.f32.mrf.mxu0
        %v3625 = vadd.f32 0.0, %v3624
        %v3626 = vpop.f32.mrf.mxu0
        %v3627 = vpop.f32.mrf.mxu0
        %v3628 = vadd.f32 0.0, %v3627
        %v3629 = vpop.f32.mrf.mxu0
        %3630 = vmatprep.mubr.bf16.mxu0 0
        %3631 = vmatmul.mubr.bf16.gmra.mxu0 %v3570
        %v3632 = vpop.f32.mrf.mxu0
        %v3633 = vadd.f32 0.0, %v3632
        %v3634 = vpop.f32.mrf.mxu0
        %v3635 = vpop.f32.mrf.mxu0
        %v3636 = vadd.f32 0.0, %v3635
        %v3637 = vpop.f32.mrf.mxu0
        %3638 = vmatprep.mubr.bf16.mxu0 0
        %3639 = vmatmul.mubr.bf16.gmra.mxu0 %v3573
        %v3640 = vpop.f32.mrf.mxu0
        %v3641 = vadd.f32 0.0, %v3640
        %v3642 = vpop.f32.mrf.mxu0
        %v3643 = vpop.f32.mrf.mxu0
        %v3644 = vadd.f32 0.0, %v3643
        %v3645 = vpop.f32.mrf.mxu0
        %3646 = vmatprep.mubr.bf16.mxu0 0
        %3647 = vmatmul.mubr.bf16.gmra.mxu0 %v3576
        %v3648 = vpop.f32.mrf.mxu0
        %v3649 = vadd.f32 0.0, %v3648
        %v3650 = vpop.f32.mrf.mxu0
        %v3651 = vpop.f32.mrf.mxu0
        %v3652 = vadd.f32 0.0, %v3651
        %v3653 = vpop.f32.mrf.mxu0
        %3654 = vdwg.mxu0
        %3655 = vrot.lane.b32.xlu0 %v1297, 32
        %v3656 = vpop.permute.xlu0 %3655
        %3657 = vrot.lane.b32.xlu0 %v1298, 32
        %v3658 = vpop.permute.xlu0 %3657
        %3659 = vrot.lane.b32.xlu0 %v1299, 32
        %v3660 = vpop.permute.xlu0 %3659
        %3661 = vrot.lane.b32.xlu0 %v1300, 32
        %v3662 = vpop.permute.xlu0 %3661
        %3663 = vrot.lane.b32.xlu0 %v1305, 32
        %v3664 = vpop.permute.xlu0 %3663
        %3665 = vrot.lane.b32.xlu0 %v1306, 32
        %v3666 = vpop.permute.xlu0 %3665
        %3667 = vrot.lane.b32.xlu0 %v1307, 32
        %v3668 = vpop.permute.xlu0 %3667
        %3669 = vrot.lane.b32.xlu0 %v1308, 32
        %v3670 = vpop.permute.xlu0 %3669
        %v3672 = vsel %vm1317, %v3656, 0
        %v3675 = vsel %vm1317, %v3658, 0
        %v3678 = vsel %vm1317, %v3660, 0
        %v3681 = vsel %vm1317, %v3662, 0
        %v3684 = vsel %vm1317, %v3664, 0
        %v3687 = vsel %vm1317, %v3666, 0
        %v3690 = vsel %vm1317, %v3668, 0
        %v3693 = vsel %vm1317, %v3670, 0
        %3695 = vmatprep.subr.bf16.mxu0 0
        %3696 = vmatpush1.bf16.xpose.msra.mxu0 0
        %3697 = vmatprep.subr.bf16.mxu0 0
        %3698 = vmatpush1.bf16.xpose.msra.mxu0 0
        %3699 = vmatprep.subr.bf16.mxu0 0
        %3700 = vmatpush1.bf16.xpose.msra.mxu0 0
        %3701 = vmatprep.subr.bf16.mxu0 0
        %3702 = vmatpush1.bf16.xpose.msra.mxu0 0
        %3703 = vmatprep.subr.bf16.mxu0 0
        %3704 = vmatpush1.bf16.xpose.msra.mxu0 %v3693
        %3705 = vmatprep.subr.bf16.mxu0 0
        %3706 = vmatpush1.bf16.xpose.msra.mxu0 %v3690
        %3707 = vmatprep.subr.bf16.mxu0 0
        %3708 = vmatpush1.bf16.xpose.msra.mxu0 %v3687
        %3709 = vmatprep.subr.bf16.mxu0 0
        %3710 = vmatpush1.bf16.xpose.msra.mxu0 %v3684
        %3711 = vmatprep.subr.bf16.mxu0 0
        %3712 = vmatpush2.bf16.xpose.msra.mxu0 0
        %3713 = vmatprep.subr.bf16.mxu0 0
        %3714 = vmatpush2.bf16.xpose.msra.mxu0 0
        %3715 = vmatprep.subr.bf16.mxu0 0
        %3716 = vmatpush2.bf16.xpose.msra.mxu0 0
        %3717 = vmatprep.subr.bf16.mxu0 0
        %3718 = vmatpush2.bf16.xpose.msra.mxu0 0
        %3719 = vmatprep.subr.bf16.mxu0 0
        %3720 = vmatpush2.bf16.xpose.msra.mxu0 0
        %3721 = vmatprep.subr.bf16.mxu0 0
        %3722 = vmatpush2.bf16.xpose.msra.mxu0 0
        %3723 = vmatprep.subr.bf16.mxu0 0
        %3724 = vmatpush2.bf16.xpose.msra.mxu0 0
        %3725 = vmatprep.subr.bf16.mxu0 0
        %3726 = vmatpush2.bf16.xpose.msra.mxu0 0
        %3727 = vmatprep.mubr.bf16.mxu0 0
        %3728 = vmatmul.mubr.bf16.gmra.mxu0 %v3672
        %v3729 = vpop.f32.mrf.mxu0
        %v3730 = vadd.f32 0.0, %v3729
        %v3731 = vpop.f32.mrf.mxu0
        %v3732 = vpop.f32.mrf.mxu0
        %v3733 = vadd.f32 0.0, %v3732
        %v3734 = vpop.f32.mrf.mxu0
        %3735 = vmatprep.mubr.bf16.mxu0 0
        %3736 = vmatmul.mubr.bf16.gmra.mxu0 %v3675
        %v3737 = vpop.f32.mrf.mxu0
        %v3738 = vadd.f32 0.0, %v3737
        %v3739 = vpop.f32.mrf.mxu0
        %v3740 = vpop.f32.mrf.mxu0
        %v3741 = vadd.f32 0.0, %v3740
        %v3742 = vpop.f32.mrf.mxu0
        %3743 = vmatprep.mubr.bf16.mxu0 0
        %3744 = vmatmul.mubr.bf16.gmra.mxu0 %v3678
        %v3745 = vpop.f32.mrf.mxu0
        %v3746 = vadd.f32 0.0, %v3745
        %v3747 = vpop.f32.mrf.mxu0
        %v3748 = vpop.f32.mrf.mxu0
        %v3749 = vadd.f32 0.0, %v3748
        %v3750 = vpop.f32.mrf.mxu0
        %3751 = vmatprep.mubr.bf16.mxu0 0
        %3752 = vmatmul.mubr.bf16.gmra.mxu0 %v3681
        %v3753 = vpop.f32.mrf.mxu0
        %v3754 = vadd.f32 0.0, %v3753
        %v3755 = vpop.f32.mrf.mxu0
        %v3756 = vpop.f32.mrf.mxu0
        %v3757 = vadd.f32 0.0, %v3756
        %v3758 = vpop.f32.mrf.mxu0
        %3759 = vdwg.mxu0
        %v3760 = vmul.f32 %v3625, 0.17677669
        %v3761 = vmul.f32 %v3628, 0.17677669
        %v3762 = vmul.f32 %v3633, 0.17677669
        %v3763 = vmul.f32 %v3636, 0.17677669
        %v3764 = vmul.f32 %v3641, 0.17677669
        %v3765 = vmul.f32 %v3644, 0.17677669
        %v3766 = vmul.f32 %v3649, 0.17677669
        %v3767 = vmul.f32 %v3652, 0.17677669
        %v3768 = vmul.f32 %v3730, 0.17677669
        %v3769 = vmul.f32 %v3733, 0.17677669
        %v3770 = vmul.f32 %v3738, 0.17677669
        %v3771 = vmul.f32 %v3741, 0.17677669
        %v3772 = vmul.f32 %v3746, 0.17677669
        %v3773 = vmul.f32 %v3749, 0.17677669
        %v3774 = vmul.f32 %v3754, 0.17677669
        %v3775 = vmul.f32 %v3757, 0.17677669
        %v3776 = vadd.f32 %v3760, %v848
        %v3777 = vadd.f32 %v3761, %v848
        %v3778 = vadd.f32 %v3762, %v848
        %v3779 = vadd.f32 %v3763, %v848
        %v3780 = vadd.f32 %v3764, %v848
        %v3781 = vadd.f32 %v3765, %v848
        %v3782 = vadd.f32 %v3766, %v848
        %v3783 = vadd.f32 %v3767, %v848
        %v3784 = vadd.f32 %v3768, %v852
        %v3785 = vadd.f32 %v3769, %v852
        %v3786 = vadd.f32 %v3770, %v852
        %v3787 = vadd.f32 %v3771, %v852
        %v3788 = vadd.f32 %v3772, %v852
        %v3789 = vadd.f32 %v3773, %v852
        %v3790 = vadd.f32 %v3774, %v852
        %v3791 = vadd.f32 %v3775, %v852
        %v3792 = vsel %vm1528, %v3776, -inf
        %3793 = vmax.xlane.f32.xlu0 %v3792
        %v3794 = vpop.xlane.xlu0 %3793
        %v3795 = vsel %vm1528, %v3777, -inf
        %3796 = vmax.xlane.f32.xlu0 %v3795
        %v3797 = vpop.xlane.xlu0 %3796
        %v3798 = vsel %vm1528, %v3778, -inf
        %3799 = vmax.xlane.f32.xlu0 %v3798
        %v3800 = vpop.xlane.xlu0 %3799
        %v3801 = vsel %vm1528, %v3779, -inf
        %3802 = vmax.xlane.f32.xlu0 %v3801
        %v3803 = vpop.xlane.xlu0 %3802
        %v3804 = vsel %vm1528, %v3780, -inf
        %3805 = vmax.xlane.f32.xlu0 %v3804
        %v3806 = vpop.xlane.xlu0 %3805
        %v3807 = vsel %vm1528, %v3781, -inf
        %3808 = vmax.xlane.f32.xlu0 %v3807
        %v3809 = vpop.xlane.xlu0 %3808
        %v3810 = vsel %vm1528, %v3782, -inf
        %3811 = vmax.xlane.f32.xlu0 %v3810
        %v3812 = vpop.xlane.xlu0 %3811
        %v3813 = vsel %vm1528, %v3783, -inf
        %3814 = vmax.xlane.f32.xlu0 %v3813
        %v3815 = vpop.xlane.xlu0 %3814
        %v3816 = vsel %vm1528, %v3784, -inf
        %3817 = vmax.xlane.f32.xlu0 %v3816
        %v3818 = vpop.xlane.xlu0 %3817
        %v3819 = vsel %vm1528, %v3785, -inf
        %3820 = vmax.xlane.f32.xlu0 %v3819
        %v3821 = vpop.xlane.xlu0 %3820
        %v3822 = vsel %vm1528, %v3786, -inf
        %3823 = vmax.xlane.f32.xlu0 %v3822
        %v3824 = vpop.xlane.xlu0 %3823
        %v3825 = vsel %vm1528, %v3787, -inf
        %3826 = vmax.xlane.f32.xlu0 %v3825
        %v3827 = vpop.xlane.xlu0 %3826
        %v3828 = vsel %vm1528, %v3788, -inf
        %3829 = vmax.xlane.f32.xlu0 %v3828
        %v3830 = vpop.xlane.xlu0 %3829
        %v3831 = vsel %vm1528, %v3789, -inf
        %3832 = vmax.xlane.f32.xlu0 %v3831
        %v3833 = vpop.xlane.xlu0 %3832
        %v3834 = vsel %vm1528, %v3790, -inf
        %3835 = vmax.xlane.f32.xlu0 %v3834
        %v3836 = vpop.xlane.xlu0 %3835
        %v3837 = vsel %vm1528, %v3791, -inf
        %3838 = vmax.xlane.f32.xlu0 %v3837
        %v3839 = vpop.xlane.xlu0 %3838
        %v3840 = vsub.f32 %v3776, %v3794
        %v3841 = vsub.f32 %v3777, %v3797
        %v3842 = vsub.f32 %v3778, %v3800
        %v3843 = vsub.f32 %v3779, %v3803
        %v3844 = vsub.f32 %v3780, %v3806
        %v3845 = vsub.f32 %v3781, %v3809
        %v3846 = vsub.f32 %v3782, %v3812
        %v3847 = vsub.f32 %v3783, %v3815
        %v3848 = vsub.f32 %v3784, %v3818
        %v3849 = vsub.f32 %v3785, %v3821
        %v3850 = vsub.f32 %v3786, %v3824
        %v3851 = vsub.f32 %v3787, %v3827
        %v3852 = vsub.f32 %v3788, %v3830
        %v3853 = vsub.f32 %v3789, %v3833
        %v3854 = vsub.f32 %v3790, %v3836
        %v3855 = vsub.f32 %v3791, %v3839
        %v3856 = vmul.f32 %v3840, 1.442695
        %v3857 = vpow.pop %v3856
        %v3858 = vmul.f32 %v3841, 1.442695
        %v3859 = vpow.pop %v3858
        %v3860 = vmul.f32 %v3842, 1.442695
        %v3861 = vpow.pop %v3860
        %v3862 = vmul.f32 %v3843, 1.442695
        %v3863 = vpow.pop %v3862
        %v3864 = vmul.f32 %v3844, 1.442695
        %v3865 = vpow.pop %v3864
        %v3866 = vmul.f32 %v3845, 1.442695
        %v3867 = vpow.pop %v3866
        %v3868 = vmul.f32 %v3846, 1.442695
        %v3869 = vpow.pop %v3868
        %v3870 = vmul.f32 %v3847, 1.442695
        %v3871 = vpow.pop %v3870
        %v3872 = vmul.f32 %v3848, 1.442695
        %v3873 = vpow.pop %v3872
        %v3874 = vmul.f32 %v3849, 1.442695
        %v3875 = vpow.pop %v3874
        %v3876 = vmul.f32 %v3850, 1.442695
        %v3877 = vpow.pop %v3876
        %v3878 = vmul.f32 %v3851, 1.442695
        %v3879 = vpow.pop %v3878
        %v3880 = vmul.f32 %v3852, 1.442695
        %v3881 = vpow.pop %v3880
        %v3882 = vmul.f32 %v3853, 1.442695
        %v3883 = vpow.pop %v3882
        %v3884 = vmul.f32 %v3854, 1.442695
        %v3885 = vpow.pop %v3884
        %v3886 = vmul.f32 %v3855, 1.442695
        %v3887 = vpow.pop %v3886
        %v3888 = vsel %vm1528, %v3857, 0.0
        %3889 = vadd.xlane.f32.xlu0 %v3888
        %v3890 = vpop.xlane.xlu0 %3889
        %v3891 = vsel %vm1528, %v3859, 0.0
        %3892 = vadd.xlane.f32.xlu0 %v3891
        %v3893 = vpop.xlane.xlu0 %3892
        %v3894 = vsel %vm1528, %v3861, 0.0
        %3895 = vadd.xlane.f32.xlu0 %v3894
        %v3896 = vpop.xlane.xlu0 %3895
        %v3897 = vsel %vm1528, %v3863, 0.0
        %3898 = vadd.xlane.f32.xlu0 %v3897
        %v3899 = vpop.xlane.xlu0 %3898
        %v3900 = vsel %vm1528, %v3865, 0.0
        %3901 = vadd.xlane.f32.xlu0 %v3900
        %v3902 = vpop.xlane.xlu0 %3901
        %v3903 = vsel %vm1528, %v3867, 0.0
        %3904 = vadd.xlane.f32.xlu0 %v3903
        %v3905 = vpop.xlane.xlu0 %3904
        %v3906 = vsel %vm1528, %v3869, 0.0
        %3907 = vadd.xlane.f32.xlu0 %v3906
        %v3908 = vpop.xlane.xlu0 %3907
        %v3909 = vsel %vm1528, %v3871, 0.0
        %3910 = vadd.xlane.f32.xlu0 %v3909
        %v3911 = vpop.xlane.xlu0 %3910
        %v3912 = vsel %vm1528, %v3873, 0.0
        %3913 = vadd.xlane.f32.xlu0 %v3912
        %v3914 = vpop.xlane.xlu0 %3913
        %v3915 = vsel %vm1528, %v3875, 0.0
        %3916 = vadd.xlane.f32.xlu0 %v3915
        %v3917 = vpop.xlane.xlu0 %3916
        %v3918 = vsel %vm1528, %v3877, 0.0
        %3919 = vadd.xlane.f32.xlu0 %v3918
        %v3920 = vpop.xlane.xlu0 %3919
        %v3921 = vsel %vm1528, %v3879, 0.0
        %3922 = vadd.xlane.f32.xlu0 %v3921
        %v3923 = vpop.xlane.xlu0 %3922
        %v3924 = vsel %vm1528, %v3881, 0.0
        %3925 = vadd.xlane.f32.xlu0 %v3924
        %v3926 = vpop.xlane.xlu0 %3925
        %v3927 = vsel %vm1528, %v3883, 0.0
        %3928 = vadd.xlane.f32.xlu0 %v3927
        %v3929 = vpop.xlane.xlu0 %3928
        %v3930 = vsel %vm1528, %v3885, 0.0
        %3931 = vadd.xlane.f32.xlu0 %v3930
        %v3932 = vpop.xlane.xlu0 %3931
        %v3933 = vsel %vm1528, %v3887, 0.0
        %3934 = vadd.xlane.f32.xlu0 %v3933
        %v3935 = vpop.xlane.xlu0 %3934
        %v3936 = vrcp.pop %v3890
        %v3937 = vrcp.pop %v3893
        %v3938 = vrcp.pop %v3896
        %v3939 = vrcp.pop %v3899
        %v3940 = vrcp.pop %v3902
        %v3941 = vrcp.pop %v3905
        %v3942 = vrcp.pop %v3908
        %v3943 = vrcp.pop %v3911
        %v3944 = vrcp.pop %v3914
        %v3945 = vrcp.pop %v3917
        %v3946 = vrcp.pop %v3920
        %v3947 = vrcp.pop %v3923
        %v3948 = vrcp.pop %v3926
        %v3949 = vrcp.pop %v3929
        %v3950 = vrcp.pop %v3932
        %v3951 = vrcp.pop %v3935
        %v3952 = vmul.f32 %v3857, %v3936
        %v3953 = vmul.f32 %v3859, %v3937
        %v3954 = vmul.f32 %v3861, %v3938
        %v3955 = vmul.f32 %v3863, %v3939
        %v3956 = vmul.f32 %v3865, %v3940
        %v3957 = vmul.f32 %v3867, %v3941
        %v3958 = vmul.f32 %v3869, %v3942
        %v3959 = vmul.f32 %v3871, %v3943
        %v3960 = vmul.f32 %v3873, %v3944
        %v3961 = vmul.f32 %v3875, %v3945
        %v3962 = vmul.f32 %v3877, %v3946
        %v3963 = vmul.f32 %v3879, %v3947
        %v3964 = vmul.f32 %v3881, %v3948
        %v3965 = vmul.f32 %v3883, %v3949
        %v3966 = vmul.f32 %v3885, %v3950
        %v3967 = vmul.f32 %v3887, %v3951
        %v3968 = vpack.c.bf16 %v3953, %v3952
        %v3969 = vpack.c.bf16 %v3955, %v3954
        %v3970 = vpack.c.bf16 %v3957, %v3956
        %v3971 = vpack.c.bf16 %v3959, %v3958
        %v3972 = vpack.c.bf16 %v3961, %v3960
        %v3973 = vpack.c.bf16 %v3963, %v3962
        %v3974 = vpack.c.bf16 %v3965, %v3964
        %v3975 = vpack.c.bf16 %v3967, %v3966
        %3976 = vrot.lane.b32.xlu0 %v1309, 32
        %v3977 = vpop.permute.xlu0 %3976
        %3978 = vrot.lane.b32.xlu0 %v1310, 32
        %v3979 = vpop.permute.xlu0 %3978
        %3980 = vrot.lane.b32.xlu0 %v1311, 32
        %v3981 = vpop.permute.xlu0 %3980
        %3982 = vrot.lane.b32.xlu0 %v1312, 32
        %v3983 = vpop.permute.xlu0 %3982
        %v3989 = vsel %vm1528, %v3968, 0
        %v3992 = vsel %vm1528, %v3969, 0
        %v3995 = vsel %vm1528, %v3970, 0
        %v3998 = vsel %vm1528, %v3971, 0
        %4000 = vmatprep.subr.bf16.mxu0 0
        %4001 = vmatpush1.bf16.msra.mxu0 0
        %4002 = vmatprep.subr.bf16.mxu0 0
        %4003 = vmatpush1.bf16.msra.mxu0 0
        %4004 = vmatprep.subr.bf16.mxu0 0
        %4005 = vmatpush1.bf16.msra.mxu0 0
        %4006 = vmatprep.subr.bf16.mxu0 0
        %4007 = vmatpush1.bf16.msra.mxu0 0
        %4008 = vmatprep.subr.bf16.mxu0 0
        %4009 = vmatpush1.bf16.msra.mxu0 %v3983
        %4010 = vmatprep.subr.bf16.mxu0 0
        %4011 = vmatpush1.bf16.msra.mxu0 %v3981
        %4012 = vmatprep.subr.bf16.mxu0 0
        %4013 = vmatpush1.bf16.msra.mxu0 %v3979
        %4014 = vmatprep.subr.bf16.mxu0 0
        %4015 = vmatpush1.bf16.msra.mxu0 %v3977
        %4016 = vmatprep.subr.bf16.mxu0 0
        %4017 = vmatpush2.bf16.msra.mxu0 0
        %4018 = vmatprep.subr.bf16.mxu0 0
        %4019 = vmatpush2.bf16.msra.mxu0 0
        %4020 = vmatprep.subr.bf16.mxu0 0
        %4021 = vmatpush2.bf16.msra.mxu0 0
        %4022 = vmatprep.subr.bf16.mxu0 0
        %4023 = vmatpush2.bf16.msra.mxu0 0
        %4024 = vmatprep.subr.bf16.mxu0 0
        %4025 = vmatpush2.bf16.msra.mxu0 0
        %4026 = vmatprep.subr.bf16.mxu0 0
        %4027 = vmatpush2.bf16.msra.mxu0 0
        %4028 = vmatprep.subr.bf16.mxu0 0
        %4029 = vmatpush2.bf16.msra.mxu0 0
        %4030 = vmatprep.subr.bf16.mxu0 0
        %4031 = vmatpush2.bf16.msra.mxu0 0
        %4032 = vmatprep.mubr.bf16.mxu0 0
        %4033 = vmatmul.mubr.bf16.gmra.mxu0 %v3989
        %v4034 = vpop.f32.mrf.mxu0
        %v4035 = vadd.f32 0.0, %v4034
        %v4036 = vpop.f32.mrf.mxu0
        %v4037 = vpop.f32.mrf.mxu0
        %v4038 = vadd.f32 0.0, %v4037
        %v4039 = vpop.f32.mrf.mxu0
        %4040 = vmatprep.mubr.bf16.mxu0 0
        %4041 = vmatmul.mubr.bf16.gmra.mxu0 %v3992
        %v4042 = vpop.f32.mrf.mxu0
        %v4043 = vadd.f32 0.0, %v4042
        %v4044 = vpop.f32.mrf.mxu0
        %v4045 = vpop.f32.mrf.mxu0
        %v4046 = vadd.f32 0.0, %v4045
        %v4047 = vpop.f32.mrf.mxu0
        %4048 = vmatprep.mubr.bf16.mxu0 0
        %4049 = vmatmul.mubr.bf16.gmra.mxu0 %v3995
        %v4050 = vpop.f32.mrf.mxu0
        %v4051 = vadd.f32 0.0, %v4050
        %v4052 = vpop.f32.mrf.mxu0
        %v4053 = vpop.f32.mrf.mxu0
        %v4054 = vadd.f32 0.0, %v4053
        %v4055 = vpop.f32.mrf.mxu0
        %4056 = vmatprep.mubr.bf16.mxu0 0
        %4057 = vmatmul.mubr.bf16.gmra.mxu0 %v3998
        %v4058 = vpop.f32.mrf.mxu0
        %v4059 = vadd.f32 0.0, %v4058
        %v4060 = vpop.f32.mrf.mxu0
        %v4061 = vpop.f32.mrf.mxu0
        %v4062 = vadd.f32 0.0, %v4061
        %v4063 = vpop.f32.mrf.mxu0
        %4064 = vdwg.mxu0
        %4065 = vrot.lane.b32.xlu0 %v1313, 32
        %v4066 = vpop.permute.xlu0 %4065
        %4067 = vrot.lane.b32.xlu0 %v1314, 32
        %v4068 = vpop.permute.xlu0 %4067
        %4069 = vrot.lane.b32.xlu0 %v1315, 32
        %v4070 = vpop.permute.xlu0 %4069
        %4071 = vrot.lane.b32.xlu0 %v1316, 32
        %v4072 = vpop.permute.xlu0 %4071
        %v4078 = vsel %vm1528, %v3972, 0
        %v4081 = vsel %vm1528, %v3973, 0
        %v4084 = vsel %vm1528, %v3974, 0
        %v4087 = vsel %vm1528, %v3975, 0
        %4089 = vmatprep.subr.bf16.mxu0 0
        %4090 = vmatpush1.bf16.msra.mxu0 0
        %4091 = vmatprep.subr.bf16.mxu0 0
        %4092 = vmatpush1.bf16.msra.mxu0 0
        %4093 = vmatprep.subr.bf16.mxu0 0
        %4094 = vmatpush1.bf16.msra.mxu0 0
        %4095 = vmatprep.subr.bf16.mxu0 0
        %4096 = vmatpush1.bf16.msra.mxu0 0
        %4097 = vmatprep.subr.bf16.mxu0 0
        %4098 = vmatpush1.bf16.msra.mxu0 %v4072
        %4099 = vmatprep.subr.bf16.mxu0 0
        %4100 = vmatpush1.bf16.msra.mxu0 %v4070
        %4101 = vmatprep.subr.bf16.mxu0 0
        %4102 = vmatpush1.bf16.msra.mxu0 %v4068
        %4103 = vmatprep.subr.bf16.mxu0 0
        %4104 = vmatpush1.bf16.msra.mxu0 %v4066
        %4105 = vmatprep.subr.bf16.mxu0 0
        %4106 = vmatpush2.bf16.msra.mxu0 0
        %4107 = vmatprep.subr.bf16.mxu0 0
        %4108 = vmatpush2.bf16.msra.mxu0 0
        %4109 = vmatprep.subr.bf16.mxu0 0
        %4110 = vmatpush2.bf16.msra.mxu0 0
        %4111 = vmatprep.subr.bf16.mxu0 0
        %4112 = vmatpush2.bf16.msra.mxu0 0
        %4113 = vmatprep.subr.bf16.mxu0 0
        %4114 = vmatpush2.bf16.msra.mxu0 0
        %4115 = vmatprep.subr.bf16.mxu0 0
        %4116 = vmatpush2.bf16.msra.mxu0 0
        %4117 = vmatprep.subr.bf16.mxu0 0
        %4118 = vmatpush2.bf16.msra.mxu0 0
        %4119 = vmatprep.subr.bf16.mxu0 0
        %4120 = vmatpush2.bf16.msra.mxu0 0
        %4121 = vmatprep.mubr.bf16.mxu0 0
        %4122 = vmatmul.mubr.bf16.gmra.mxu0 %v4078
        %v4123 = vpop.f32.mrf.mxu0
        %v4124 = vadd.f32 0.0, %v4123
        %v4125 = vpop.f32.mrf.mxu0
        %v4126 = vpop.f32.mrf.mxu0
        %v4127 = vadd.f32 0.0, %v4126
        %v4128 = vpop.f32.mrf.mxu0
        %4129 = vmatprep.mubr.bf16.mxu0 0
        %4130 = vmatmul.mubr.bf16.gmra.mxu0 %v4081
        %v4131 = vpop.f32.mrf.mxu0
        %v4132 = vadd.f32 0.0, %v4131
        %v4133 = vpop.f32.mrf.mxu0
        %v4134 = vpop.f32.mrf.mxu0
        %v4135 = vadd.f32 0.0, %v4134
        %v4136 = vpop.f32.mrf.mxu0
        %4137 = vmatprep.mubr.bf16.mxu0 0
        %4138 = vmatmul.mubr.bf16.gmra.mxu0 %v4084
        %v4139 = vpop.f32.mrf.mxu0
        %v4140 = vadd.f32 0.0, %v4139
        %v4141 = vpop.f32.mrf.mxu0
        %v4142 = vpop.f32.mrf.mxu0
        %v4143 = vadd.f32 0.0, %v4142
        %v4144 = vpop.f32.mrf.mxu0
        %4145 = vmatprep.mubr.bf16.mxu0 0
        %4146 = vmatmul.mubr.bf16.gmra.mxu0 %v4087
        %v4147 = vpop.f32.mrf.mxu0
        %v4148 = vadd.f32 0.0, %v4147
        %v4149 = vpop.f32.mrf.mxu0
        %v4150 = vpop.f32.mrf.mxu0
        %v4151 = vadd.f32 0.0, %v4150
        %v4152 = vpop.f32.mrf.mxu0
        %4153 = vdwg.mxu0
        %v4154 = vpack.c.bf16 %v4038, %v4035
        %v4155 = vpack.c.bf16 %v4046, %v4043
        %v4156 = vpack.c.bf16 %v4054, %v4051
        %v4157 = vpack.c.bf16 %v4062, %v4059
        %v4158 = vpack.c.bf16 %v4127, %v4124
        %v4159 = vpack.c.bf16 %v4135, %v4132
        %v4160 = vpack.c.bf16 %v4143, %v4140
        %v4161 = vpack.c.bf16 %v4151, %v4148
        %v4162 = vld [vmem:[%s475 + $0x30] sm:$0xf]
        %v4163 = vld [vmem:[%s475 + $0x34] sm:$0xf]
        %v4164 = vld [vmem:[%s475 + $0x38] sm:$0xf]
        %v4165 = vld [vmem:[%s475 + $0x3c] sm:$0xf]
        %v4170 = vunpack.c.l.b16 %v4162
        %v4171 = vunpack.c.l.b16 %v4163
        %v4172 = vunpack.c.l.b16 %v4164
        %v4173 = vunpack.c.l.b16 %v4165
        %v4174 = vpack.c.b16 %v4171, %v4170
        %v4175 = vpack.c.b16 %v4173, %v4172
        %v4179 = vsel %vm1317, %v4154, 0
        %v4182 = vsel %vm1317, %v4155, 0
        %v4185 = vsel %vm1317, %v4156, 0
        %v4188 = vsel %vm1317, %v4157, 0
        %v4191 = vsel %vm1317, %v4158, 0
        %v4194 = vsel %vm1317, %v4159, 0
        %v4197 = vsel %vm1317, %v4160, 0
        %v4200 = vsel %vm1317, %v4161, 0
        %4202 = vmatprep.subr.bf16.mxu0 0
        %4203 = vmatpush1.bf16.msra.mxu0 0
        %4204 = vmatprep.subr.bf16.mxu0 0
        %4205 = vmatpush1.bf16.msra.mxu0 0
        %4206 = vmatprep.subr.bf16.mxu0 0
        %4207 = vmatpush1.bf16.msra.mxu0 0
        %4208 = vmatprep.subr.bf16.mxu0 0
        %4209 = vmatpush1.bf16.msra.mxu0 0
        %4210 = vmatprep.subr.bf16.mxu0 0
        %4211 = vmatpush1.bf16.msra.mxu0 0
        %4212 = vmatprep.subr.bf16.mxu0 0
        %4213 = vmatpush1.bf16.msra.mxu0 0
        %4214 = vmatprep.subr.bf16.mxu0 0
        %4215 = vmatpush1.bf16.msra.mxu0 %v4175
        %4216 = vmatprep.subr.bf16.mxu0 0
        %4217 = vmatpush1.bf16.msra.mxu0 %v4174
        %4218 = vmatprep.subr.bf16.mxu0 0
        %4219 = vmatpush2.bf16.msra.mxu0 0
        %4220 = vmatprep.subr.bf16.mxu0 0
        %4221 = vmatpush2.bf16.msra.mxu0 0
        %4222 = vmatprep.subr.bf16.mxu0 0
        %4223 = vmatpush2.bf16.msra.mxu0 0
        %4224 = vmatprep.subr.bf16.mxu0 0
        %4225 = vmatpush2.bf16.msra.mxu0 0
        %4226 = vmatprep.subr.bf16.mxu0 0
        %4227 = vmatpush2.bf16.msra.mxu0 0
        %4228 = vmatprep.subr.bf16.mxu0 0
        %4229 = vmatpush2.bf16.msra.mxu0 0
        %4230 = vmatprep.subr.bf16.mxu0 0
        %4231 = vmatpush2.bf16.msra.mxu0 0
        %4232 = vmatprep.subr.bf16.mxu0 0
        %4233 = vmatpush2.bf16.msra.mxu0 0
        %4234 = vmatprep.mubr.bf16.mxu0 0
        %4235 = vmatmul.mubr.bf16.gmra.mxu0 %v4179
        %v4236 = vpop.f32.mrf.mxu0
        %v4237 = vadd.f32 0.0, %v4236
        %v4238 = vpop.f32.mrf.mxu0
        %v4239 = vpop.f32.mrf.mxu0
        %v4240 = vadd.f32 0.0, %v4239
        %v4241 = vpop.f32.mrf.mxu0
        %4242 = vmatprep.mubr.bf16.mxu0 0
        %4243 = vmatmul.mubr.bf16.gmra.mxu0 %v4182
        %v4244 = vpop.f32.mrf.mxu0
        %v4245 = vadd.f32 0.0, %v4244
        %v4246 = vpop.f32.mrf.mxu0
        %v4247 = vpop.f32.mrf.mxu0
        %v4248 = vadd.f32 0.0, %v4247
        %v4249 = vpop.f32.mrf.mxu0
        %4250 = vmatprep.mubr.bf16.mxu0 0
        %4251 = vmatmul.mubr.bf16.gmra.mxu0 %v4185
        %v4252 = vpop.f32.mrf.mxu0
        %v4253 = vadd.f32 0.0, %v4252
        %v4254 = vpop.f32.mrf.mxu0
        %v4255 = vpop.f32.mrf.mxu0
        %v4256 = vadd.f32 0.0, %v4255
        %v4257 = vpop.f32.mrf.mxu0
        %4258 = vmatprep.mubr.bf16.mxu0 0
        %4259 = vmatmul.mubr.bf16.gmra.mxu0 %v4188
        %v4260 = vpop.f32.mrf.mxu0
        %v4261 = vadd.f32 0.0, %v4260
        %v4262 = vpop.f32.mrf.mxu0
        %v4263 = vpop.f32.mrf.mxu0
        %v4264 = vadd.f32 0.0, %v4263
        %v4265 = vpop.f32.mrf.mxu0
        %4266 = vmatprep.mubr.bf16.mxu0 0
        %4267 = vmatmul.mubr.bf16.gmra.mxu0 %v4191
        %v4268 = vpop.f32.mrf.mxu0
        %v4269 = vadd.f32 0.0, %v4268
        %v4270 = vpop.f32.mrf.mxu0
        %v4271 = vpop.f32.mrf.mxu0
        %v4272 = vadd.f32 0.0, %v4271
        %v4273 = vpop.f32.mrf.mxu0
        %4274 = vmatprep.mubr.bf16.mxu0 0
        %4275 = vmatmul.mubr.bf16.gmra.mxu0 %v4194
        %v4276 = vpop.f32.mrf.mxu0
        %v4277 = vadd.f32 0.0, %v4276
        %v4278 = vpop.f32.mrf.mxu0
        %v4279 = vpop.f32.mrf.mxu0
        %v4280 = vadd.f32 0.0, %v4279
        %v4281 = vpop.f32.mrf.mxu0
        %4282 = vmatprep.mubr.bf16.mxu0 0
        %4283 = vmatmul.mubr.bf16.gmra.mxu0 %v4197
        %v4284 = vpop.f32.mrf.mxu0
        %v4285 = vadd.f32 0.0, %v4284
        %v4286 = vpop.f32.mrf.mxu0
        %v4287 = vpop.f32.mrf.mxu0
        %v4288 = vadd.f32 0.0, %v4287
        %v4289 = vpop.f32.mrf.mxu0
        %4290 = vmatprep.mubr.bf16.mxu0 0
        %4291 = vmatmul.mubr.bf16.gmra.mxu0 %v4200
        %v4292 = vpop.f32.mrf.mxu0
        %v4293 = vadd.f32 0.0, %v4292
        %v4294 = vpop.f32.mrf.mxu0
        %v4295 = vpop.f32.mrf.mxu0
        %v4296 = vadd.f32 0.0, %v4295
        %v4297 = vpop.f32.mrf.mxu0
        %4298 = vdwg.mxu0
        %v4299 = vadd.f32 %v3534, %v4237
        %v4300 = vadd.f32 %v3535, %v4240
        %v4301 = vadd.f32 %v3536, %v4245
        %v4302 = vadd.f32 %v3537, %v4248
        %v4303 = vadd.f32 %v3538, %v4253
        %v4304 = vadd.f32 %v3539, %v4256
        %v4305 = vadd.f32 %v3540, %v4261
        %v4306 = vadd.f32 %v3541, %v4264
        %v4307 = vadd.f32 %v3542, %v4269
        %v4308 = vadd.f32 %v3543, %v4272
        %v4309 = vadd.f32 %v3544, %v4277
        %v4310 = vadd.f32 %v3545, %v4280
        %v4311 = vadd.f32 %v3546, %v4285
        %v4312 = vadd.f32 %v3547, %v4288
        %v4313 = vadd.f32 %v3548, %v4293
        %v4314 = vadd.f32 %v3549, %v4296
        %v4315 = vlaneseq
        %v4316 = vshrl.u32 %v4315, 7
        %v4317 = vsub.s32 3, %v4316
        %v4318 = vrot.slane %v819, %v4317
        %v4319 = vadd.f32 %v4299, %v4318
        %v4320 = vadd.f32 %v4300, %v4318
        %v4321 = vadd.f32 %v4301, %v4318
        %v4322 = vadd.f32 %v4302, %v4318
        %v4323 = vadd.f32 %v4303, %v4318
        %v4324 = vadd.f32 %v4304, %v4318
        %v4325 = vadd.f32 %v4305, %v4318
        %v4326 = vadd.f32 %v4306, %v4318
        %v4327 = vadd.f32 %v4307, %v4318
        %v4328 = vadd.f32 %v4308, %v4318
        %v4329 = vadd.f32 %v4309, %v4318
        %v4330 = vadd.f32 %v4310, %v4318
        %v4331 = vadd.f32 %v4311, %v4318
        %v4332 = vadd.f32 %v4312, %v4318
        %v4333 = vadd.f32 %v4313, %v4318
        %v4334 = vadd.f32 %v4314, %v4318
        %v4335 = vadd.f32 %v803, %v4319
        %v4336 = vadd.f32 %v804, %v4320
        %v4337 = vadd.f32 %v805, %v4321
        %v4338 = vadd.f32 %v806, %v4322
        %v4339 = vadd.f32 %v807, %v4323
        %v4340 = vadd.f32 %v808, %v4324
        %v4341 = vadd.f32 %v809, %v4325
        %v4342 = vadd.f32 %v810, %v4326
        %v4343 = vadd.f32 %v811, %v4327
        %v4344 = vadd.f32 %v812, %v4328
        %v4345 = vadd.f32 %v813, %v4329
        %v4346 = vadd.f32 %v814, %v4330
        %v4347 = vadd.f32 %v815, %v4331
        %v4348 = vadd.f32 %v816, %v4332
        %v4349 = vadd.f32 %v817, %v4333
        %v4350 = vadd.f32 %v818, %v4334
        %4351 = vadd.xlane.f32.xlu0 %v4335
        %v4352 = vpop.xlane.xlu0 %4351
        %4353 = vadd.xlane.f32.xlu0 %v4336
        %v4354 = vpop.xlane.xlu0 %4353
        %4355 = vadd.xlane.f32.xlu0 %v4337
        %v4356 = vpop.xlane.xlu0 %4355
        %4357 = vadd.xlane.f32.xlu0 %v4338
        %v4358 = vpop.xlane.xlu0 %4357
        %4359 = vadd.xlane.f32.xlu0 %v4339
        %v4360 = vpop.xlane.xlu0 %4359
        %4361 = vadd.xlane.f32.xlu0 %v4340
        %v4362 = vpop.xlane.xlu0 %4361
        %4363 = vadd.xlane.f32.xlu0 %v4341
        %v4364 = vpop.xlane.xlu0 %4363
        %4365 = vadd.xlane.f32.xlu0 %v4342
        %v4366 = vpop.xlane.xlu0 %4365
        %4367 = vadd.xlane.f32.xlu0 %v4343
        %v4368 = vpop.xlane.xlu0 %4367
        %4369 = vadd.xlane.f32.xlu0 %v4344
        %v4370 = vpop.xlane.xlu0 %4369
        %4371 = vadd.xlane.f32.xlu0 %v4345
        %v4372 = vpop.xlane.xlu0 %4371
        %4373 = vadd.xlane.f32.xlu0 %v4346
        %v4374 = vpop.xlane.xlu0 %4373
        %4375 = vadd.xlane.f32.xlu0 %v4347
        %v4376 = vpop.xlane.xlu0 %4375
        %4377 = vadd.xlane.f32.xlu0 %v4348
        %v4378 = vpop.xlane.xlu0 %4377
        %4379 = vadd.xlane.f32.xlu0 %v4349
        %v4380 = vpop.xlane.xlu0 %4379
        %4381 = vadd.xlane.f32.xlu0 %v4350
        %v4382 = vpop.xlane.xlu0 %4381
        %v4383 = vrcp.pop 128.0
        %v4384 = vmul.f32 %v4352, %v4383
        %v4385 = vmul.f32 %v4354, %v4383
        %v4386 = vmul.f32 %v4356, %v4383
        %v4387 = vmul.f32 %v4358, %v4383
        %v4388 = vmul.f32 %v4360, %v4383
        %v4389 = vmul.f32 %v4362, %v4383
        %v4390 = vmul.f32 %v4364, %v4383
        %v4391 = vmul.f32 %v4366, %v4383
        %v4392 = vmul.f32 %v4368, %v4383
        %v4393 = vmul.f32 %v4370, %v4383
        %v4394 = vmul.f32 %v4372, %v4383
        %v4395 = vmul.f32 %v4374, %v4383
        %v4396 = vmul.f32 %v4376, %v4383
        %v4397 = vmul.f32 %v4378, %v4383
        %v4398 = vmul.f32 %v4380, %v4383
        %v4399 = vmul.f32 %v4382, %v4383
        %v4400 = vsub.f32 %v4335, %v4384
        %v4401 = vsub.f32 %v4336, %v4385
        %v4402 = vsub.f32 %v4337, %v4386
        %v4403 = vsub.f32 %v4338, %v4387
        %v4404 = vsub.f32 %v4339, %v4388
        %v4405 = vsub.f32 %v4340, %v4389
        %v4406 = vsub.f32 %v4341, %v4390
        %v4407 = vsub.f32 %v4342, %v4391
        %v4408 = vsub.f32 %v4343, %v4392
        %v4409 = vsub.f32 %v4344, %v4393
        %v4410 = vsub.f32 %v4345, %v4394
        %v4411 = vsub.f32 %v4346, %v4395
        %v4412 = vsub.f32 %v4347, %v4396
        %v4413 = vsub.f32 %v4348, %v4397
        %v4414 = vsub.f32 %v4349, %v4398
        %v4415 = vsub.f32 %v4350, %v4399
        %v4416 = vmul.f32 %v4400, %v4400
        %v4417 = vmul.f32 %v4401, %v4401
        %v4418 = vmul.f32 %v4402, %v4402
        %v4419 = vmul.f32 %v4403, %v4403
        %v4420 = vmul.f32 %v4404, %v4404
        %v4421 = vmul.f32 %v4405, %v4405
        %v4422 = vmul.f32 %v4406, %v4406
        %v4423 = vmul.f32 %v4407, %v4407
        %v4424 = vmul.f32 %v4408, %v4408
        %v4425 = vmul.f32 %v4409, %v4409
        %v4426 = vmul.f32 %v4410, %v4410
        %v4427 = vmul.f32 %v4411, %v4411
        %v4428 = vmul.f32 %v4412, %v4412
        %v4429 = vmul.f32 %v4413, %v4413
        %v4430 = vmul.f32 %v4414, %v4414
        %v4431 = vmul.f32 %v4415, %v4415
        %4432 = vadd.xlane.f32.xlu0 %v4416
        %v4433 = vpop.xlane.xlu0 %4432
        %4434 = vadd.xlane.f32.xlu0 %v4417
        %v4435 = vpop.xlane.xlu0 %4434
        %4436 = vadd.xlane.f32.xlu0 %v4418
        %v4437 = vpop.xlane.xlu0 %4436
        %4438 = vadd.xlane.f32.xlu0 %v4419
        %v4439 = vpop.xlane.xlu0 %4438
        %4440 = vadd.xlane.f32.xlu0 %v4420
        %v4441 = vpop.xlane.xlu0 %4440
        %4442 = vadd.xlane.f32.xlu0 %v4421
        %v4443 = vpop.xlane.xlu0 %4442
        %4444 = vadd.xlane.f32.xlu0 %v4422
        %v4445 = vpop.xlane.xlu0 %4444
        %4446 = vadd.xlane.f32.xlu0 %v4423
        %v4447 = vpop.xlane.xlu0 %4446
        %4448 = vadd.xlane.f32.xlu0 %v4424
        %v4449 = vpop.xlane.xlu0 %4448
        %4450 = vadd.xlane.f32.xlu0 %v4425
        %v4451 = vpop.xlane.xlu0 %4450
        %4452 = vadd.xlane.f32.xlu0 %v4426
        %v4453 = vpop.xlane.xlu0 %4452
        %4454 = vadd.xlane.f32.xlu0 %v4427
        %v4455 = vpop.xlane.xlu0 %4454
        %4456 = vadd.xlane.f32.xlu0 %v4428
        %v4457 = vpop.xlane.xlu0 %4456
        %4458 = vadd.xlane.f32.xlu0 %v4429
        %v4459 = vpop.xlane.xlu0 %4458
        %4460 = vadd.xlane.f32.xlu0 %v4430
        %v4461 = vpop.xlane.xlu0 %4460
        %4462 = vadd.xlane.f32.xlu0 %v4431
        %v4463 = vpop.xlane.xlu0 %4462
        %v4464 = vmul.f32 %v4433, %v4383
        %v4465 = vmul.f32 %v4435, %v4383
        %v4466 = vmul.f32 %v4437, %v4383
        %v4467 = vmul.f32 %v4439, %v4383
        %v4468 = vmul.f32 %v4441, %v4383
        %v4469 = vmul.f32 %v4443, %v4383
        %v4470 = vmul.f32 %v4445, %v4383
        %v4471 = vmul.f32 %v4447, %v4383
        %v4472 = vmul.f32 %v4449, %v4383
        %v4473 = vmul.f32 %v4451, %v4383
        %v4474 = vmul.f32 %v4453, %v4383
        %v4475 = vmul.f32 %v4455, %v4383
        %v4476 = vmul.f32 %v4457, %v4383
        %v4477 = vmul.f32 %v4459, %v4383
        %v4478 = vmul.f32 %v4461, %v4383
        %v4479 = vmul.f32 %v4463, %v4383
        %v4480 = vadd.f32 %v4464, 1e-12
        %v4481 = vadd.f32 %v4465, 1e-12
        %v4482 = vadd.f32 %v4466, 1e-12
        %v4483 = vadd.f32 %v4467, 1e-12
        %v4484 = vadd.f32 %v4468, 1e-12
        %v4485 = vadd.f32 %v4469, 1e-12
        %v4486 = vadd.f32 %v4470, 1e-12
        %v4487 = vadd.f32 %v4471, 1e-12
        %v4488 = vadd.f32 %v4472, 1e-12
        %v4489 = vadd.f32 %v4473, 1e-12
        %v4490 = vadd.f32 %v4474, 1e-12
        %v4491 = vadd.f32 %v4475, 1e-12
        %v4492 = vadd.f32 %v4476, 1e-12
        %v4493 = vadd.f32 %v4477, 1e-12
        %v4494 = vadd.f32 %v4478, 1e-12
        %v4495 = vadd.f32 %v4479, 1e-12
        %v4496 = vrsqrt.pop %v4480
        %v4497 = vrsqrt.pop %v4481
        %v4498 = vrsqrt.pop %v4482
        %v4499 = vrsqrt.pop %v4483
        %v4500 = vrsqrt.pop %v4484
        %v4501 = vrsqrt.pop %v4485
        %v4502 = vrsqrt.pop %v4486
        %v4503 = vrsqrt.pop %v4487
        %v4504 = vrsqrt.pop %v4488
        %v4505 = vrsqrt.pop %v4489
        %v4506 = vrsqrt.pop %v4490
        %v4507 = vrsqrt.pop %v4491
        %v4508 = vrsqrt.pop %v4492
        %v4509 = vrsqrt.pop %v4493
        %v4510 = vrsqrt.pop %v4494
        %v4511 = vrsqrt.pop %v4495
        %v4512 = vmul.f32 %v4400, %v4496
        %v4513 = vmul.f32 %v4401, %v4497
        %v4514 = vmul.f32 %v4402, %v4498
        %v4515 = vmul.f32 %v4403, %v4499
        %v4516 = vmul.f32 %v4404, %v4500
        %v4517 = vmul.f32 %v4405, %v4501
        %v4518 = vmul.f32 %v4406, %v4502
        %v4519 = vmul.f32 %v4407, %v4503
        %v4520 = vmul.f32 %v4408, %v4504
        %v4521 = vmul.f32 %v4409, %v4505
        %v4522 = vmul.f32 %v4410, %v4506
        %v4523 = vmul.f32 %v4411, %v4507
        %v4524 = vmul.f32 %v4412, %v4508
        %v4525 = vmul.f32 %v4413, %v4509
        %v4526 = vmul.f32 %v4414, %v4510
        %v4527 = vmul.f32 %v4415, %v4511
        %v4528 = vlaneseq
        %v4529 = vshrl.u32 %v4528, 7
        %v4530 = vsub.s32 4, %v4529
        %v4531 = vrot.slane %v819, %v4530
        %v4532 = vmul.f32 %v4512, %v4531
        %v4533 = vmul.f32 %v4513, %v4531
        %v4534 = vmul.f32 %v4514, %v4531
        %v4535 = vmul.f32 %v4515, %v4531
        %v4536 = vmul.f32 %v4516, %v4531
        %v4537 = vmul.f32 %v4517, %v4531
        %v4538 = vmul.f32 %v4518, %v4531
        %v4539 = vmul.f32 %v4519, %v4531
        %v4540 = vmul.f32 %v4520, %v4531
        %v4541 = vmul.f32 %v4521, %v4531
        %v4542 = vmul.f32 %v4522, %v4531
        %v4543 = vmul.f32 %v4523, %v4531
        %v4544 = vmul.f32 %v4524, %v4531
        %v4545 = vmul.f32 %v4525, %v4531
        %v4546 = vmul.f32 %v4526, %v4531
        %v4547 = vmul.f32 %v4527, %v4531
        %v4548 = vlaneseq
        %v4549 = vshrl.u32 %v4548, 7
        %v4550 = vsub.s32 5, %v4549
        %v4551 = vrot.slane %v819, %v4550
        %v4552 = vadd.f32 %v4532, %v4551
        %v4553 = vadd.f32 %v4533, %v4551
        %v4554 = vadd.f32 %v4534, %v4551
        %v4555 = vadd.f32 %v4535, %v4551
        %v4556 = vadd.f32 %v4536, %v4551
        %v4557 = vadd.f32 %v4537, %v4551
        %v4558 = vadd.f32 %v4538, %v4551
        %v4559 = vadd.f32 %v4539, %v4551
        %v4560 = vadd.f32 %v4540, %v4551
        %v4561 = vadd.f32 %v4541, %v4551
        %v4562 = vadd.f32 %v4542, %v4551
        %v4563 = vadd.f32 %v4543, %v4551
        %v4564 = vadd.f32 %v4544, %v4551
        %v4565 = vadd.f32 %v4545, %v4551
        %v4566 = vadd.f32 %v4546, %v4551
        %v4567 = vadd.f32 %v4547, %v4551
        %v4569 = vrot.slane %v819, 1
        %v4571 = vpack.c.bf16 %v4553, %v4552
        %v4572 = vpack.c.bf16 %v4555, %v4554
        %v4573 = vpack.c.bf16 %v4557, %v4556
        %v4574 = vpack.c.bf16 %v4559, %v4558
        %v4575 = vpack.c.bf16 %v4561, %v4560
        %v4576 = vpack.c.bf16 %v4563, %v4562
        %v4577 = vpack.c.bf16 %v4565, %v4564
        %v4578 = vpack.c.bf16 %v4567, %v4566
        %v4579 = vld [vmem:[%s484] sm:$0xff]
        %v4580 = vld [vmem:[%s484 + $0x8] sm:$0xff]
        %v4581 = vld [vmem:[%s484 + $0x10] sm:$0xff]
        %v4582 = vld [vmem:[%s484 + $0x18] sm:$0xff]
        %v4583 = vld [vmem:[%s484 + $0x20] sm:$0xff]
        %v4584 = vld [vmem:[%s484 + $0x28] sm:$0xff]
        %v4585 = vld [vmem:[%s484 + $0x30] sm:$0xff]
        %v4586 = vld [vmem:[%s484 + $0x38] sm:$0xff]
        %v4587 = vld [vmem:[%s484 + $0x40] sm:$0xff]
        %v4588 = vld [vmem:[%s484 + $0x48] sm:$0xff]
        %v4589 = vld [vmem:[%s484 + $0x50] sm:$0xff]
        %v4590 = vld [vmem:[%s484 + $0x58] sm:$0xff]
        %v4591 = vld [vmem:[%s484 + $0x60] sm:$0xff]
        %v4592 = vld [vmem:[%s484 + $0x68] sm:$0xff]
        %v4593 = vld [vmem:[%s484 + $0x70] sm:$0xff]
        %v4594 = vld [vmem:[%s484 + $0x78] sm:$0xff]
        %v4595 = vlaneseq
        %v4596 = vshrl.u32 %v4595, 7
        %v4597 = vsub.s32 6, %v4596
        %v4598 = vrot.slane %v819, %v4597
        %v4599 = vlaneseq
        %v4600 = vshrl.u32 %v4599, 7
        %v4601 = vsub.s32 6, %v4600
        %v4602 = vrot.slane %v4569, %v4601
        %v4619 = vunpack.c.l.b16 %v4579
        %v4620 = vunpack.c.h.b16 %v4579
        %v4621 = vunpack.c.l.b16 %v4580
        %v4622 = vunpack.c.h.b16 %v4580
        %v4623 = vunpack.c.l.b16 %v4581
        %v4624 = vunpack.c.h.b16 %v4581
        %v4625 = vunpack.c.l.b16 %v4582
        %v4626 = vunpack.c.h.b16 %v4582
        %v4627 = vunpack.c.l.b16 %v4583
        %v4628 = vunpack.c.h.b16 %v4583
        %v4629 = vunpack.c.l.b16 %v4584
        %v4630 = vunpack.c.h.b16 %v4584
        %v4631 = vunpack.c.l.b16 %v4585
        %v4632 = vunpack.c.h.b16 %v4585
        %v4633 = vunpack.c.l.b16 %v4586
        %v4634 = vunpack.c.h.b16 %v4586
        %v4635 = vunpack.c.l.b16 %v4587
        %v4636 = vunpack.c.h.b16 %v4587
        %v4637 = vunpack.c.l.b16 %v4588
        %v4638 = vunpack.c.h.b16 %v4588
        %v4639 = vunpack.c.l.b16 %v4589
        %v4640 = vunpack.c.h.b16 %v4589
        %v4641 = vunpack.c.l.b16 %v4590
        %v4642 = vunpack.c.h.b16 %v4590
        %v4643 = vunpack.c.l.b16 %v4591
        %v4644 = vunpack.c.h.b16 %v4591
        %v4645 = vunpack.c.l.b16 %v4592
        %v4646 = vunpack.c.h.b16 %v4592
        %v4647 = vunpack.c.l.b16 %v4593
        %v4648 = vunpack.c.h.b16 %v4593
        %v4649 = vunpack.c.l.b16 %v4594
        %v4650 = vunpack.c.h.b16 %v4594
        %v4651 = vpack.c.b16 %v4621, %v4619
        %v4652 = vpack.c.b16 %v4622, %v4620
        %v4653 = vpack.c.b16 %v4625, %v4623
        %v4654 = vpack.c.b16 %v4626, %v4624
        %v4655 = vpack.c.b16 %v4629, %v4627
        %v4656 = vpack.c.b16 %v4630, %v4628
        %v4657 = vpack.c.b16 %v4633, %v4631
        %v4658 = vpack.c.b16 %v4634, %v4632
        %v4659 = vpack.c.b16 %v4637, %v4635
        %v4660 = vpack.c.b16 %v4638, %v4636
        %v4661 = vpack.c.b16 %v4641, %v4639
        %v4662 = vpack.c.b16 %v4642, %v4640
        %v4663 = vpack.c.b16 %v4645, %v4643
        %v4664 = vpack.c.b16 %v4646, %v4644
        %v4665 = vpack.c.b16 %v4649, %v4647
        %v4666 = vpack.c.b16 %v4650, %v4648
        %4683 = vmatprep.subr.bf16.mxu0 %v4666
        %4684 = vmatpush1.bf16.msra.mxu0 %v4665
        %4685 = vmatprep.subr.bf16.mxu0 %v4664
        %4686 = vmatpush1.bf16.msra.mxu0 %v4663
        %4687 = vmatprep.subr.bf16.mxu0 %v4662
        %4688 = vmatpush1.bf16.msra.mxu0 %v4661
        %4689 = vmatprep.subr.bf16.mxu0 %v4660
        %4690 = vmatpush1.bf16.msra.mxu0 %v4659
        %4691 = vmatprep.subr.bf16.mxu0 %v4658
        %4692 = vmatpush1.bf16.msra.mxu0 %v4657
        %4693 = vmatprep.subr.bf16.mxu0 %v4656
        %4694 = vmatpush1.bf16.msra.mxu0 %v4655
        %4695 = vmatprep.subr.bf16.mxu0 %v4654
        %4696 = vmatpush1.bf16.msra.mxu0 %v4653
        %4697 = vmatprep.subr.bf16.mxu0 %v4652
        %4698 = vmatpush1.bf16.msra.mxu0 %v4651
        %4699 = vmatprep.subr.bf16.mxu0 0
        %4700 = vmatpush2.bf16.msra.mxu0 0
        %4701 = vmatprep.subr.bf16.mxu0 0
        %4702 = vmatpush2.bf16.msra.mxu0 0
        %4703 = vmatprep.subr.bf16.mxu0 0
        %4704 = vmatpush2.bf16.msra.mxu0 0
        %4705 = vmatprep.subr.bf16.mxu0 0
        %4706 = vmatpush2.bf16.msra.mxu0 0
        %4707 = vmatprep.subr.bf16.mxu0 0
        %4708 = vmatpush2.bf16.msra.mxu0 0
        %4709 = vmatprep.subr.bf16.mxu0 0
        %4710 = vmatpush2.bf16.msra.mxu0 0
        %4711 = vmatprep.subr.bf16.mxu0 0
        %4712 = vmatpush2.bf16.msra.mxu0 0
        %4713 = vmatprep.subr.bf16.mxu0 0
        %4714 = vmatpush2.bf16.msra.mxu0 0
        %4715 = vmatprep.mubr.bf16.mxu0 0
        %4716 = vmatmul.mubr.bf16.gmra.mxu0 %v4571
        %v4717 = vpop.f32.mrf.mxu0
        %v4718 = vadd.f32 %v4598, %v4717
        %v4719 = vpop.f32.mrf.mxu0
        %v4720 = vadd.f32 %v4602, %v4719
        %v4721 = vpop.f32.mrf.mxu0
        %v4722 = vadd.f32 %v4598, %v4721
        %v4723 = vpop.f32.mrf.mxu0
        %v4724 = vadd.f32 %v4602, %v4723
        %4725 = vmatprep.mubr.bf16.mxu0 0
        %4726 = vmatmul.mubr.bf16.gmra.mxu0 %v4572
        %v4727 = vpop.f32.mrf.mxu0
        %v4728 = vadd.f32 %v4598, %v4727
        %v4729 = vpop.f32.mrf.mxu0
        %v4730 = vadd.f32 %v4602, %v4729
        %v4731 = vpop.f32.mrf.mxu0
        %v4732 = vadd.f32 %v4598, %v4731
        %v4733 = vpop.f32.mrf.mxu0
        %v4734 = vadd.f32 %v4602, %v4733
        %4735 = vmatprep.mubr.bf16.mxu0 0
        %4736 = vmatmul.mubr.bf16.gmra.mxu0 %v4573
        %v4737 = vpop.f32.mrf.mxu0
        %v4738 = vadd.f32 %v4598, %v4737
        %v4739 = vpop.f32.mrf.mxu0
        %v4740 = vadd.f32 %v4602, %v4739
        %v4741 = vpop.f32.mrf.mxu0
        %v4742 = vadd.f32 %v4598, %v4741
        %v4743 = vpop.f32.mrf.mxu0
        %v4744 = vadd.f32 %v4602, %v4743
        %4745 = vmatprep.mubr.bf16.mxu0 0
        %4746 = vmatmul.mubr.bf16.gmra.mxu0 %v4574
        %v4747 = vpop.f32.mrf.mxu0
        %v4748 = vadd.f32 %v4598, %v4747
        %v4749 = vpop.f32.mrf.mxu0
        %v4750 = vadd.f32 %v4602, %v4749
        %v4751 = vpop.f32.mrf.mxu0
        %v4752 = vadd.f32 %v4598, %v4751
        %v4753 = vpop.f32.mrf.mxu0
        %v4754 = vadd.f32 %v4602, %v4753
        %4755 = vmatprep.mubr.bf16.mxu0 0
        %4756 = vmatmul.mubr.bf16.gmra.mxu0 %v4575
        %v4757 = vpop.f32.mrf.mxu0
        %v4758 = vadd.f32 %v4598, %v4757
        %v4759 = vpop.f32.mrf.mxu0
        %v4760 = vadd.f32 %v4602, %v4759
        %v4761 = vpop.f32.mrf.mxu0
        %v4762 = vadd.f32 %v4598, %v4761
        %v4763 = vpop.f32.mrf.mxu0
        %v4764 = vadd.f32 %v4602, %v4763
        %4765 = vmatprep.mubr.bf16.mxu0 0
        %4766 = vmatmul.mubr.bf16.gmra.mxu0 %v4576
        %v4767 = vpop.f32.mrf.mxu0
        %v4768 = vadd.f32 %v4598, %v4767
        %v4769 = vpop.f32.mrf.mxu0
        %v4770 = vadd.f32 %v4602, %v4769
        %v4771 = vpop.f32.mrf.mxu0
        %v4772 = vadd.f32 %v4598, %v4771
        %v4773 = vpop.f32.mrf.mxu0
        %v4774 = vadd.f32 %v4602, %v4773
        %4775 = vmatprep.mubr.bf16.mxu0 0
        %4776 = vmatmul.mubr.bf16.gmra.mxu0 %v4577
        %v4777 = vpop.f32.mrf.mxu0
        %v4778 = vadd.f32 %v4598, %v4777
        %v4779 = vpop.f32.mrf.mxu0
        %v4780 = vadd.f32 %v4602, %v4779
        %v4781 = vpop.f32.mrf.mxu0
        %v4782 = vadd.f32 %v4598, %v4781
        %v4783 = vpop.f32.mrf.mxu0
        %v4784 = vadd.f32 %v4602, %v4783
        %4785 = vmatprep.mubr.bf16.mxu0 0
        %4786 = vmatmul.mubr.bf16.gmra.mxu0 %v4578
        %v4787 = vpop.f32.mrf.mxu0
        %v4788 = vadd.f32 %v4598, %v4787
        %v4789 = vpop.f32.mrf.mxu0
        %v4790 = vadd.f32 %v4602, %v4789
        %v4791 = vpop.f32.mrf.mxu0
        %v4792 = vadd.f32 %v4598, %v4791
        %v4793 = vpop.f32.mrf.mxu0
        %v4794 = vadd.f32 %v4602, %v4793
        %4795 = vdwg.mxu0
        %v4796 = vmul.f32 %v4718, %v4718
        %v4797 = vmul.f32 %v4720, %v4720
        %v4798 = vmul.f32 %v4722, %v4722
        %v4799 = vmul.f32 %v4724, %v4724
        %v4800 = vmul.f32 %v4728, %v4728
        %v4801 = vmul.f32 %v4730, %v4730
        %v4802 = vmul.f32 %v4732, %v4732
        %v4803 = vmul.f32 %v4734, %v4734
        %v4804 = vmul.f32 %v4738, %v4738
        %v4805 = vmul.f32 %v4740, %v4740
        %v4806 = vmul.f32 %v4742, %v4742
        %v4807 = vmul.f32 %v4744, %v4744
        %v4808 = vmul.f32 %v4748, %v4748
        %v4809 = vmul.f32 %v4750, %v4750
        %v4810 = vmul.f32 %v4752, %v4752
        %v4811 = vmul.f32 %v4754, %v4754
        %v4812 = vmul.f32 %v4758, %v4758
        %v4813 = vmul.f32 %v4760, %v4760
        %v4814 = vmul.f32 %v4762, %v4762
        %v4815 = vmul.f32 %v4764, %v4764
        %v4816 = vmul.f32 %v4768, %v4768
        %v4817 = vmul.f32 %v4770, %v4770
        %v4818 = vmul.f32 %v4772, %v4772
        %v4819 = vmul.f32 %v4774, %v4774
        %v4820 = vmul.f32 %v4778, %v4778
        %v4821 = vmul.f32 %v4780, %v4780
        %v4822 = vmul.f32 %v4782, %v4782
        %v4823 = vmul.f32 %v4784, %v4784
        %v4824 = vmul.f32 %v4788, %v4788
        %v4825 = vmul.f32 %v4790, %v4790
        %v4826 = vmul.f32 %v4792, %v4792
        %v4827 = vmul.f32 %v4794, %v4794
        %v4828 = vmul.f32 %v4718, %v4796
        %v4829 = vmul.f32 %v4720, %v4797
        %v4830 = vmul.f32 %v4722, %v4798
        %v4831 = vmul.f32 %v4724, %v4799
        %v4832 = vmul.f32 %v4728, %v4800
        %v4833 = vmul.f32 %v4730, %v4801
        %v4834 = vmul.f32 %v4732, %v4802
        %v4835 = vmul.f32 %v4734, %v4803
        %v4836 = vmul.f32 %v4738, %v4804
        %v4837 = vmul.f32 %v4740, %v4805
        %v4838 = vmul.f32 %v4742, %v4806
        %v4839 = vmul.f32 %v4744, %v4807
        %v4840 = vmul.f32 %v4748, %v4808
        %v4841 = vmul.f32 %v4750, %v4809
        %v4842 = vmul.f32 %v4752, %v4810
        %v4843 = vmul.f32 %v4754, %v4811
        %v4844 = vmul.f32 %v4758, %v4812
        %v4845 = vmul.f32 %v4760, %v4813
        %v4846 = vmul.f32 %v4762, %v4814
        %v4847 = vmul.f32 %v4764, %v4815
        %v4848 = vmul.f32 %v4768, %v4816
        %v4849 = vmul.f32 %v4770, %v4817
        %v4850 = vmul.f32 %v4772, %v4818
        %v4851 = vmul.f32 %v4774, %v4819
        %v4852 = vmul.f32 %v4778, %v4820
        %v4853 = vmul.f32 %v4780, %v4821
        %v4854 = vmul.f32 %v4782, %v4822
        %v4855 = vmul.f32 %v4784, %v4823
        %v4856 = vmul.f32 %v4788, %v4824
        %v4857 = vmul.f32 %v4790, %v4825
        %v4858 = vmul.f32 %v4792, %v4826
        %v4859 = vmul.f32 %v4794, %v4827
        %v4860 = vmul.f32 %v4828, 0.044715
        %v4861 = vmul.f32 %v4829, 0.044715
        %v4862 = vmul.f32 %v4830, 0.044715
        %v4863 = vmul.f32 %v4831, 0.044715
        %v4864 = vmul.f32 %v4832, 0.044715
        %v4865 = vmul.f32 %v4833, 0.044715
        %v4866 = vmul.f32 %v4834, 0.044715
        %v4867 = vmul.f32 %v4835, 0.044715
        %v4868 = vmul.f32 %v4836, 0.044715
        %v4869 = vmul.f32 %v4837, 0.044715
        %v4870 = vmul.f32 %v4838, 0.044715
        %v4871 = vmul.f32 %v4839, 0.044715
        %v4872 = vmul.f32 %v4840, 0.044715
        %v4873 = vmul.f32 %v4841, 0.044715
        %v4874 = vmul.f32 %v4842, 0.044715
        %v4875 = vmul.f32 %v4843, 0.044715
        %v4876 = vmul.f32 %v4844, 0.044715
        %v4877 = vmul.f32 %v4845, 0.044715
        %v4878 = vmul.f32 %v4846, 0.044715
        %v4879 = vmul.f32 %v4847, 0.044715
        %v4880 = vmul.f32 %v4848, 0.044715
        %v4881 = vmul.f32 %v4849, 0.044715
        %v4882 = vmul.f32 %v4850, 0.044715
        %v4883 = vmul.f32 %v4851, 0.044715
        %v4884 = vmul.f32 %v4852, 0.044715
        %v4885 = vmul.f32 %v4853, 0.044715
        %v4886 = vmul.f32 %v4854, 0.044715
        %v4887 = vmul.f32 %v4855, 0.044715
        %v4888 = vmul.f32 %v4856, 0.044715
        %v4889 = vmul.f32 %v4857, 0.044715
        %v4890 = vmul.f32 %v4858, 0.044715
        %v4891 = vmul.f32 %v4859, 0.044715
        %v4892 = vadd.f32 %v4718, %v4860
        %v4893 = vadd.f32 %v4720, %v4861
        %v4894 = vadd.f32 %v4722, %v4862
        %v4895 = vadd.f32 %v4724, %v4863
        %v4896 = vadd.f32 %v4728, %v4864
        %v4897 = vadd.f32 %v4730, %v4865
        %v4898 = vadd.f32 %v4732, %v4866
        %v4899 = vadd.f32 %v4734, %v4867
        %v4900 = vadd.f32 %v4738, %v4868
        %v4901 = vadd.f32 %v4740, %v4869
        %v4902 = vadd.f32 %v4742, %v4870
        %v4903 = vadd.f32 %v4744, %v4871
        %v4904 = vadd.f32 %v4748, %v4872
        %v4905 = vadd.f32 %v4750, %v4873
        %v4906 = vadd.f32 %v4752, %v4874
        %v4907 = vadd.f32 %v4754, %v4875
        %v4908 = vadd.f32 %v4758, %v4876
        %v4909 = vadd.f32 %v4760, %v4877
        %v4910 = vadd.f32 %v4762, %v4878
        %v4911 = vadd.f32 %v4764, %v4879
        %v4912 = vadd.f32 %v4768, %v4880
        %v4913 = vadd.f32 %v4770, %v4881
        %v4914 = vadd.f32 %v4772, %v4882
        %v4915 = vadd.f32 %v4774, %v4883
        %v4916 = vadd.f32 %v4778, %v4884
        %v4917 = vadd.f32 %v4780, %v4885
        %v4918 = vadd.f32 %v4782, %v4886
        %v4919 = vadd.f32 %v4784, %v4887
        %v4920 = vadd.f32 %v4788, %v4888
        %v4921 = vadd.f32 %v4790, %v4889
        %v4922 = vadd.f32 %v4792, %v4890
        %v4923 = vadd.f32 %v4794, %v4891
        %v4924 = vmul.f32 %v4892, 0.7978846
        %v4925 = vmul.f32 %v4893, 0.7978846
        %v4926 = vmul.f32 %v4894, 0.7978846
        %v4927 = vmul.f32 %v4895, 0.7978846
        %v4928 = vmul.f32 %v4896, 0.7978846
        %v4929 = vmul.f32 %v4897, 0.7978846
        %v4930 = vmul.f32 %v4898, 0.7978846
        %v4931 = vmul.f32 %v4899, 0.7978846
        %v4932 = vmul.f32 %v4900, 0.7978846
        %v4933 = vmul.f32 %v4901, 0.7978846
        %v4934 = vmul.f32 %v4902, 0.7978846
        %v4935 = vmul.f32 %v4903, 0.7978846
        %v4936 = vmul.f32 %v4904, 0.7978846
        %v4937 = vmul.f32 %v4905, 0.7978846
        %v4938 = vmul.f32 %v4906, 0.7978846
        %v4939 = vmul.f32 %v4907, 0.7978846
        %v4940 = vmul.f32 %v4908, 0.7978846
        %v4941 = vmul.f32 %v4909, 0.7978846
        %v4942 = vmul.f32 %v4910, 0.7978846
        %v4943 = vmul.f32 %v4911, 0.7978846
        %v4944 = vmul.f32 %v4912, 0.7978846
        %v4945 = vmul.f32 %v4913, 0.7978846
        %v4946 = vmul.f32 %v4914, 0.7978846
        %v4947 = vmul.f32 %v4915, 0.7978846
        %v4948 = vmul.f32 %v4916, 0.7978846
        %v4949 = vmul.f32 %v4917, 0.7978846
        %v4950 = vmul.f32 %v4918, 0.7978846
        %v4951 = vmul.f32 %v4919, 0.7978846
        %v4952 = vmul.f32 %v4920, 0.7978846
        %v4953 = vmul.f32 %v4921, 0.7978846
        %v4954 = vmul.f32 %v4922, 0.7978846
        %v4955 = vmul.f32 %v4923, 0.7978846
        %v4956 = vtanh.pop %v4924
        %v4957 = vtanh.pop %v4925
        %v4958 = vtanh.pop %v4926
        %v4959 = vtanh.pop %v4927
        %v4960 = vtanh.pop %v4928
        %v4961 = vtanh.pop %v4929
        %v4962 = vtanh.pop %v4930
        %v4963 = vtanh.pop %v4931
        %v4964 = vtanh.pop %v4932
        %v4965 = vtanh.pop %v4933
        %v4966 = vtanh.pop %v4934
        %v4967 = vtanh.pop %v4935
        %v4968 = vtanh.pop %v4936
        %v4969 = vtanh.pop %v4937
        %v4970 = vtanh.pop %v4938
        %v4971 = vtanh.pop %v4939
        %v4972 = vtanh.pop %v4940
        %v4973 = vtanh.pop %v4941
        %v4974 = vtanh.pop %v4942
        %v4975 = vtanh.pop %v4943
        %v4976 = vtanh.pop %v4944
        %v4977 = vtanh.pop %v4945
        %v4978 = vtanh.pop %v4946
        %v4979 = vtanh.pop %v4947
        %v4980 = vtanh.pop %v4948
        %v4981 = vtanh.pop %v4949
        %v4982 = vtanh.pop %v4950
        %v4983 = vtanh.pop %v4951
        %v4984 = vtanh.pop %v4952
        %v4985 = vtanh.pop %v4953
        %v4986 = vtanh.pop %v4954
        %v4987 = vtanh.pop %v4955
        %v4988 = vadd.f32 %v4956, 1.0
        %v4989 = vadd.f32 %v4957, 1.0
        %v4990 = vadd.f32 %v4958, 1.0
        %v4991 = vadd.f32 %v4959, 1.0
        %v4992 = vadd.f32 %v4960, 1.0
        %v4993 = vadd.f32 %v4961, 1.0
        %v4994 = vadd.f32 %v4962, 1.0
        %v4995 = vadd.f32 %v4963, 1.0
        %v4996 = vadd.f32 %v4964, 1.0
        %v4997 = vadd.f32 %v4965, 1.0
        %v4998 = vadd.f32 %v4966, 1.0
        %v4999 = vadd.f32 %v4967, 1.0
        %v5000 = vadd.f32 %v4968, 1.0
        %v5001 = vadd.f32 %v4969, 1.0
        %v5002 = vadd.f32 %v4970, 1.0
        %v5003 = vadd.f32 %v4971, 1.0
        %v5004 = vadd.f32 %v4972, 1.0
        %v5005 = vadd.f32 %v4973, 1.0
        %v5006 = vadd.f32 %v4974, 1.0
        %v5007 = vadd.f32 %v4975, 1.0
        %v5008 = vadd.f32 %v4976, 1.0
        %v5009 = vadd.f32 %v4977, 1.0
        %v5010 = vadd.f32 %v4978, 1.0
        %v5011 = vadd.f32 %v4979, 1.0
        %v5012 = vadd.f32 %v4980, 1.0
        %v5013 = vadd.f32 %v4981, 1.0
        %v5014 = vadd.f32 %v4982, 1.0
        %v5015 = vadd.f32 %v4983, 1.0
        %v5016 = vadd.f32 %v4984, 1.0
        %v5017 = vadd.f32 %v4985, 1.0
        %v5018 = vadd.f32 %v4986, 1.0
        %v5019 = vadd.f32 %v4987, 1.0
        %v5020 = vmul.f32 %v4988, 0.5
        %v5021 = vmul.f32 %v4989, 0.5
        %v5022 = vmul.f32 %v4990, 0.5
        %v5023 = vmul.f32 %v4991, 0.5
        %v5024 = vmul.f32 %v4992, 0.5
        %v5025 = vmul.f32 %v4993, 0.5
        %v5026 = vmul.f32 %v4994, 0.5
        %v5027 = vmul.f32 %v4995, 0.5
        %v5028 = vmul.f32 %v4996, 0.5
        %v5029 = vmul.f32 %v4997, 0.5
        %v5030 = vmul.f32 %v4998, 0.5
        %v5031 = vmul.f32 %v4999, 0.5
        %v5032 = vmul.f32 %v5000, 0.5
        %v5033 = vmul.f32 %v5001, 0.5
        %v5034 = vmul.f32 %v5002, 0.5
        %v5035 = vmul.f32 %v5003, 0.5
        %v5036 = vmul.f32 %v5004, 0.5
        %v5037 = vmul.f32 %v5005, 0.5
        %v5038 = vmul.f32 %v5006, 0.5
        %v5039 = vmul.f32 %v5007, 0.5
        %v5040 = vmul.f32 %v5008, 0.5
        %v5041 = vmul.f32 %v5009, 0.5
        %v5042 = vmul.f32 %v5010, 0.5
        %v5043 = vmul.f32 %v5011, 0.5
        %v5044 = vmul.f32 %v5012, 0.5
        %v5045 = vmul.f32 %v5013, 0.5
        %v5046 = vmul.f32 %v5014, 0.5
        %v5047 = vmul.f32 %v5015, 0.5
        %v5048 = vmul.f32 %v5016, 0.5
        %v5049 = vmul.f32 %v5017, 0.5
        %v5050 = vmul.f32 %v5018, 0.5
        %v5051 = vmul.f32 %v5019, 0.5
        %v5052 = vmul.f32 %v4718, %v5020
        %v5053 = vmul.f32 %v4720, %v5021
        %v5054 = vmul.f32 %v4722, %v5022
        %v5055 = vmul.f32 %v4724, %v5023
        %v5056 = vmul.f32 %v4728, %v5024
        %v5057 = vmul.f32 %v4730, %v5025
        %v5058 = vmul.f32 %v4732, %v5026
        %v5059 = vmul.f32 %v4734, %v5027
        %v5060 = vmul.f32 %v4738, %v5028
        %v5061 = vmul.f32 %v4740, %v5029
        %v5062 = vmul.f32 %v4742, %v5030
        %v5063 = vmul.f32 %v4744, %v5031
        %v5064 = vmul.f32 %v4748, %v5032
        %v5065 = vmul.f32 %v4750, %v5033
        %v5066 = vmul.f32 %v4752, %v5034
        %v5067 = vmul.f32 %v4754, %v5035
        %v5068 = vmul.f32 %v4758, %v5036
        %v5069 = vmul.f32 %v4760, %v5037
        %v5070 = vmul.f32 %v4762, %v5038
        %v5071 = vmul.f32 %v4764, %v5039
        %v5072 = vmul.f32 %v4768, %v5040
        %v5073 = vmul.f32 %v4770, %v5041
        %v5074 = vmul.f32 %v4772, %v5042
        %v5075 = vmul.f32 %v4774, %v5043
        %v5076 = vmul.f32 %v4778, %v5044
        %v5077 = vmul.f32 %v4780, %v5045
        %v5078 = vmul.f32 %v4782, %v5046
        %v5079 = vmul.f32 %v4784, %v5047
        %v5080 = vmul.f32 %v4788, %v5048
        %v5081 = vmul.f32 %v4790, %v5049
        %v5082 = vmul.f32 %v4792, %v5050
        %v5083 = vmul.f32 %v4794, %v5051
        %v5084 = vpack.c.bf16 %v5054, %v5052
        %v5085 = vpack.c.bf16 %v5055, %v5053
        %v5086 = vpack.c.bf16 %v5058, %v5056
        %v5087 = vpack.c.bf16 %v5059, %v5057
        %v5088 = vpack.c.bf16 %v5062, %v5060
        %v5089 = vpack.c.bf16 %v5063, %v5061
        %v5090 = vpack.c.bf16 %v5066, %v5064
        %v5091 = vpack.c.bf16 %v5067, %v5065
        %v5092 = vpack.c.bf16 %v5070, %v5068
        %v5093 = vpack.c.bf16 %v5071, %v5069
        %v5094 = vpack.c.bf16 %v5074, %v5072
        %v5095 = vpack.c.bf16 %v5075, %v5073
        %v5096 = vpack.c.bf16 %v5078, %v5076
        %v5097 = vpack.c.bf16 %v5079, %v5077
        %v5098 = vpack.c.bf16 %v5082, %v5080
        %v5099 = vpack.c.bf16 %v5083, %v5081
        %v5100 = vld [vmem:[%s493] sm:$0xf]
        %v5101 = vld [vmem:[%s493 + $0x4] sm:$0xf]
        %v5102 = vld [vmem:[%s493 + $0x8] sm:$0xf]
        %v5103 = vld [vmem:[%s493 + $0xc] sm:$0xf]
        %v5104 = vld [vmem:[%s493 + $0x10] sm:$0xf]
        %v5105 = vld [vmem:[%s493 + $0x14] sm:$0xf]
        %v5106 = vld [vmem:[%s493 + $0x18] sm:$0xf]
        %v5107 = vld [vmem:[%s493 + $0x1c] sm:$0xf]
        %v5108 = vld [vmem:[%s493 + $0x20] sm:$0xf]
        %v5109 = vld [vmem:[%s493 + $0x24] sm:$0xf]
        %v5110 = vld [vmem:[%s493 + $0x28] sm:$0xf]
        %v5111 = vld [vmem:[%s493 + $0x2c] sm:$0xf]
        %v5112 = vld [vmem:[%s493 + $0x30] sm:$0xf]
        %v5113 = vld [vmem:[%s493 + $0x34] sm:$0xf]
        %v5114 = vld [vmem:[%s493 + $0x38] sm:$0xf]
        %v5115 = vld [vmem:[%s493 + $0x3c] sm:$0xf]
        %v5116 = vld [vmem:[%s493 + $0x40] sm:$0xf]
        %v5117 = vld [vmem:[%s493 + $0x44] sm:$0xf]
        %v5118 = vld [vmem:[%s493 + $0x48] sm:$0xf]
        %v5119 = vld [vmem:[%s493 + $0x4c] sm:$0xf]
        %v5120 = vld [vmem:[%s493 + $0x50] sm:$0xf]
        %v5121 = vld [vmem:[%s493 + $0x54] sm:$0xf]
        %v5122 = vld [vmem:[%s493 + $0x58] sm:$0xf]
        %v5123 = vld [vmem:[%s493 + $0x5c] sm:$0xf]
        %v5124 = vld [vmem:[%s493 + $0x60] sm:$0xf]
        %v5125 = vld [vmem:[%s493 + $0x64] sm:$0xf]
        %v5126 = vld [vmem:[%s493 + $0x68] sm:$0xf]
        %v5127 = vld [vmem:[%s493 + $0x6c] sm:$0xf]
        %v5128 = vld [vmem:[%s493 + $0x70] sm:$0xf]
        %v5129 = vld [vmem:[%s493 + $0x74] sm:$0xf]
        %v5130 = vld [vmem:[%s493 + $0x78] sm:$0xf]
        %v5131 = vld [vmem:[%s493 + $0x7c] sm:$0xf]
        %v5132 = vlaneseq
        %v5133 = vshrl.u32 %v5132, 7
        %v5134 = vsub.s32 0, %v5133
        %v5135 = vrot.slane %v820, %v5134
        %v5168 = vunpack.c.l.b16 %v5100
        %v5169 = vunpack.c.l.b16 %v5101
        %v5170 = vunpack.c.l.b16 %v5102
        %v5171 = vunpack.c.l.b16 %v5103
        %v5172 = vunpack.c.l.b16 %v5104
        %v5173 = vunpack.c.l.b16 %v5105
        %v5174 = vunpack.c.l.b16 %v5106
        %v5175 = vunpack.c.l.b16 %v5107
        %v5176 = vunpack.c.l.b16 %v5108
        %v5177 = vunpack.c.l.b16 %v5109
        %v5178 = vunpack.c.l.b16 %v5110
        %v5179 = vunpack.c.l.b16 %v5111
        %v5180 = vunpack.c.l.b16 %v5112
        %v5181 = vunpack.c.l.b16 %v5113
        %v5182 = vunpack.c.l.b16 %v5114
        %v5183 = vunpack.c.l.b16 %v5115
        %v5184 = vunpack.c.l.b16 %v5116
        %v5185 = vunpack.c.l.b16 %v5117
        %v5186 = vunpack.c.l.b16 %v5118
        %v5187 = vunpack.c.l.b16 %v5119
        %v5188 = vunpack.c.l.b16 %v5120
        %v5189 = vunpack.c.l.b16 %v5121
        %v5190 = vunpack.c.l.b16 %v5122
        %v5191 = vunpack.c.l.b16 %v5123
        %v5192 = vunpack.c.l.b16 %v5124
        %v5193 = vunpack.c.l.b16 %v5125
        %v5194 = vunpack.c.l.b16 %v5126
        %v5195 = vunpack.c.l.b16 %v5127
        %v5196 = vunpack.c.l.b16 %v5128
        %v5197 = vunpack.c.l.b16 %v5129
        %v5198 = vunpack.c.l.b16 %v5130
        %v5199 = vunpack.c.l.b16 %v5131
        %v5200 = vpack.c.b16 %v5169, %v5168
        %v5201 = vpack.c.b16 %v5171, %v5170
        %v5202 = vpack.c.b16 %v5173, %v5172
        %v5203 = vpack.c.b16 %v5175, %v5174
        %v5204 = vpack.c.b16 %v5177, %v5176
        %v5205 = vpack.c.b16 %v5179, %v5178
        %v5206 = vpack.c.b16 %v5181, %v5180
        %v5207 = vpack.c.b16 %v5183, %v5182
        %v5208 = vpack.c.b16 %v5185, %v5184
        %v5209 = vpack.c.b16 %v5187, %v5186
        %v5210 = vpack.c.b16 %v5189, %v5188
        %v5211 = vpack.c.b16 %v5191, %v5190
        %v5212 = vpack.c.b16 %v5193, %v5192
        %v5213 = vpack.c.b16 %v5195, %v5194
        %v5214 = vpack.c.b16 %v5197, %v5196
        %v5215 = vpack.c.b16 %v5199, %v5198
        %5232 = vmatprep.subr.bf16.mxu0 0
        %5233 = vmatpush1.bf16.msra.mxu0 %v5207
        %5234 = vmatprep.subr.bf16.mxu0 0
        %5235 = vmatpush1.bf16.msra.mxu0 %v5206
        %5236 = vmatprep.subr.bf16.mxu0 0
        %5237 = vmatpush1.bf16.msra.mxu0 %v5205
        %5238 = vmatprep.subr.bf16.mxu0 0
        %5239 = vmatpush1.bf16.msra.mxu0 %v5204
        %5240 = vmatprep.subr.bf16.mxu0 0
        %5241 = vmatpush1.bf16.msra.mxu0 %v5203
        %5242 = vmatprep.subr.bf16.mxu0 0
        %5243 = vmatpush1.bf16.msra.mxu0 %v5202
        %5244 = vmatprep.subr.bf16.mxu0 0
        %5245 = vmatpush1.bf16.msra.mxu0 %v5201
        %5246 = vmatprep.subr.bf16.mxu0 0
        %5247 = vmatpush1.bf16.msra.mxu0 %v5200
        %5248 = vmatprep.subr.bf16.mxu0 0
        %5249 = vmatpush2.bf16.msra.mxu0 %v5215
        %5250 = vmatprep.subr.bf16.mxu0 0
        %5251 = vmatpush2.bf16.msra.mxu0 %v5214
        %5252 = vmatprep.subr.bf16.mxu0 0
        %5253 = vmatpush2.bf16.msra.mxu0 %v5213
        %5254 = vmatprep.subr.bf16.mxu0 0
        %5255 = vmatpush2.bf16.msra.mxu0 %v5212
        %5256 = vmatprep.subr.bf16.mxu0 0
        %5257 = vmatpush2.bf16.msra.mxu0 %v5211
        %5258 = vmatprep.subr.bf16.mxu0 0
        %5259 = vmatpush2.bf16.msra.mxu0 %v5210
        %5260 = vmatprep.subr.bf16.mxu0 0
        %5261 = vmatpush2.bf16.msra.mxu0 %v5209
        %5262 = vmatprep.subr.bf16.mxu0 0
        %5263 = vmatpush2.bf16.msra.mxu0 %v5208
        %5264 = vmatprep.mubr.bf16.mxu0 %v5085
        %5265 = vmatmul.mubr.bf16.gmra.mxu0 %v5084
        %v5266 = vpop.f32.mrf.mxu0
        %v5267 = vadd.f32 %v5135, %v5266
        %v5268 = vpop.f32.mrf.mxu0
        %v5269 = vpop.f32.mrf.mxu0
        %v5270 = vadd.f32 %v5135, %v5269
        %v5271 = vpop.f32.mrf.mxu0
        %5272 = vmatprep.mubr.bf16.mxu0 %v5087
        %5273 = vmatmul.mubr.bf16.gmra.mxu0 %v5086
        %v5274 = vpop.f32.mrf.mxu0
        %v5275 = vadd.f32 %v5135, %v5274
        %v5276 = vpop.f32.mrf.mxu0
        %v5277 = vpop.f32.mrf.mxu0
        %v5278 = vadd.f32 %v5135, %v5277
        %v5279 = vpop.f32.mrf.mxu0
        %5280 = vmatprep.mubr.bf16.mxu0 %v5089
        %5281 = vmatmul.mubr.bf16.gmra.mxu0 %v5088
        %v5282 = vpop.f32.mrf.mxu0
        %v5283 = vadd.f32 %v5135, %v5282
        %v5284 = vpop.f32.mrf.mxu0
        %v5285 = vpop.f32.mrf.mxu0
        %v5286 = vadd.f32 %v5135, %v5285
        %v5287 = vpop.f32.mrf.mxu0
        %5288 = vmatprep.mubr.bf16.mxu0 %v5091
        %5289 = vmatmul.mubr.bf16.gmra.mxu0 %v5090
        %v5290 = vpop.f32.mrf.mxu0
        %v5291 = vadd.f32 %v5135, %v5290
        %v5292 = vpop.f32.mrf.mxu0
        %v5293 = vpop.f32.mrf.mxu0
        %v5294 = vadd.f32 %v5135, %v5293
        %v5295 = vpop.f32.mrf.mxu0
        %5296 = vmatprep.mubr.bf16.mxu0 %v5093
        %5297 = vmatmul.mubr.bf16.gmra.mxu0 %v5092
        %v5298 = vpop.f32.mrf.mxu0
        %v5299 = vadd.f32 %v5135, %v5298
        %v5300 = vpop.f32.mrf.mxu0
        %v5301 = vpop.f32.mrf.mxu0
        %v5302 = vadd.f32 %v5135, %v5301
        %v5303 = vpop.f32.mrf.mxu0
        %5304 = vmatprep.mubr.bf16.mxu0 %v5095
        %5305 = vmatmul.mubr.bf16.gmra.mxu0 %v5094
        %v5306 = vpop.f32.mrf.mxu0
        %v5307 = vadd.f32 %v5135, %v5306
        %v5308 = vpop.f32.mrf.mxu0
        %v5309 = vpop.f32.mrf.mxu0
        %v5310 = vadd.f32 %v5135, %v5309
        %v5311 = vpop.f32.mrf.mxu0
        %5312 = vmatprep.mubr.bf16.mxu0 %v5097
        %5313 = vmatmul.mubr.bf16.gmra.mxu0 %v5096
        %v5314 = vpop.f32.mrf.mxu0
        %v5315 = vadd.f32 %v5135, %v5314
        %v5316 = vpop.f32.mrf.mxu0
        %v5317 = vpop.f32.mrf.mxu0
        %v5318 = vadd.f32 %v5135, %v5317
        %v5319 = vpop.f32.mrf.mxu0
        %5320 = vmatprep.mubr.bf16.mxu0 %v5099
        %5321 = vmatmul.mubr.bf16.gmra.mxu0 %v5098
        %v5322 = vpop.f32.mrf.mxu0
        %v5323 = vadd.f32 %v5135, %v5322
        %v5324 = vpop.f32.mrf.mxu0
        %v5325 = vpop.f32.mrf.mxu0
        %v5326 = vadd.f32 %v5135, %v5325
        %v5327 = vpop.f32.mrf.mxu0
        %5328 = vdwg.mxu0
        %v5329 = vadd.f32 %v4552, %v5267
        %v5330 = vadd.f32 %v4553, %v5270
        %v5331 = vadd.f32 %v4554, %v5275
        %v5332 = vadd.f32 %v4555, %v5278
        %v5333 = vadd.f32 %v4556, %v5283
        %v5334 = vadd.f32 %v4557, %v5286
        %v5335 = vadd.f32 %v4558, %v5291
        %v5336 = vadd.f32 %v4559, %v5294
        %v5337 = vadd.f32 %v4560, %v5299
        %v5338 = vadd.f32 %v4561, %v5302
        %v5339 = vadd.f32 %v4562, %v5307
        %v5340 = vadd.f32 %v4563, %v5310
        %v5341 = vadd.f32 %v4564, %v5315
        %v5342 = vadd.f32 %v4565, %v5318
        %v5343 = vadd.f32 %v4566, %v5323
        %v5344 = vadd.f32 %v4567, %v5326
        %5345 = vadd.xlane.f32.xlu0 %v5329
        %v5346 = vpop.xlane.xlu0 %5345
        %5347 = vadd.xlane.f32.xlu0 %v5330
        %v5348 = vpop.xlane.xlu0 %5347
        %5349 = vadd.xlane.f32.xlu0 %v5331
        %v5350 = vpop.xlane.xlu0 %5349
        %5351 = vadd.xlane.f32.xlu0 %v5332
        %v5352 = vpop.xlane.xlu0 %5351
        %5353 = vadd.xlane.f32.xlu0 %v5333
        %v5354 = vpop.xlane.xlu0 %5353
        %5355 = vadd.xlane.f32.xlu0 %v5334
        %v5356 = vpop.xlane.xlu0 %5355
        %5357 = vadd.xlane.f32.xlu0 %v5335
        %v5358 = vpop.xlane.xlu0 %5357
        %5359 = vadd.xlane.f32.xlu0 %v5336
        %v5360 = vpop.xlane.xlu0 %5359
        %5361 = vadd.xlane.f32.xlu0 %v5337
        %v5362 = vpop.xlane.xlu0 %5361
        %5363 = vadd.xlane.f32.xlu0 %v5338
        %v5364 = vpop.xlane.xlu0 %5363
        %5365 = vadd.xlane.f32.xlu0 %v5339
        %v5366 = vpop.xlane.xlu0 %5365
        %5367 = vadd.xlane.f32.xlu0 %v5340
        %v5368 = vpop.xlane.xlu0 %5367
        %5369 = vadd.xlane.f32.xlu0 %v5341
        %v5370 = vpop.xlane.xlu0 %5369
        %5371 = vadd.xlane.f32.xlu0 %v5342
        %v5372 = vpop.xlane.xlu0 %5371
        %5373 = vadd.xlane.f32.xlu0 %v5343
        %v5374 = vpop.xlane.xlu0 %5373
        %5375 = vadd.xlane.f32.xlu0 %v5344
        %v5376 = vpop.xlane.xlu0 %5375
        %v5377 = vmul.f32 %v5346, %v4383
        %v5378 = vmul.f32 %v5348, %v4383
        %v5379 = vmul.f32 %v5350, %v4383
        %v5380 = vmul.f32 %v5352, %v4383
        %v5381 = vmul.f32 %v5354, %v4383
        %v5382 = vmul.f32 %v5356, %v4383
        %v5383 = vmul.f32 %v5358, %v4383
        %v5384 = vmul.f32 %v5360, %v4383
        %v5385 = vmul.f32 %v5362, %v4383
        %v5386 = vmul.f32 %v5364, %v4383
        %v5387 = vmul.f32 %v5366, %v4383
        %v5388 = vmul.f32 %v5368, %v4383
        %v5389 = vmul.f32 %v5370, %v4383
        %v5390 = vmul.f32 %v5372, %v4383
        %v5391 = vmul.f32 %v5374, %v4383
        %v5392 = vmul.f32 %v5376, %v4383
        %v5393 = vsub.f32 %v5329, %v5377
        %v5394 = vsub.f32 %v5330, %v5378
        %v5395 = vsub.f32 %v5331, %v5379
        %v5396 = vsub.f32 %v5332, %v5380
        %v5397 = vsub.f32 %v5333, %v5381
        %v5398 = vsub.f32 %v5334, %v5382
        %v5399 = vsub.f32 %v5335, %v5383
        %v5400 = vsub.f32 %v5336, %v5384
        %v5401 = vsub.f32 %v5337, %v5385
        %v5402 = vsub.f32 %v5338, %v5386
        %v5403 = vsub.f32 %v5339, %v5387
        %v5404 = vsub.f32 %v5340, %v5388
        %v5405 = vsub.f32 %v5341, %v5389
        %v5406 = vsub.f32 %v5342, %v5390
        %v5407 = vsub.f32 %v5343, %v5391
        %v5408 = vsub.f32 %v5344, %v5392
        %v5409 = vmul.f32 %v5393, %v5393
        %v5410 = vmul.f32 %v5394, %v5394
        %v5411 = vmul.f32 %v5395, %v5395
        %v5412 = vmul.f32 %v5396, %v5396
        %v5413 = vmul.f32 %v5397, %v5397
        %v5414 = vmul.f32 %v5398, %v5398
        %v5415 = vmul.f32 %v5399, %v5399
        %v5416 = vmul.f32 %v5400, %v5400
        %v5417 = vmul.f32 %v5401, %v5401
        %v5418 = vmul.f32 %v5402, %v5402
        %v5419 = vmul.f32 %v5403, %v5403
        %v5420 = vmul.f32 %v5404, %v5404
        %v5421 = vmul.f32 %v5405, %v5405
        %v5422 = vmul.f32 %v5406, %v5406
        %v5423 = vmul.f32 %v5407, %v5407
        %v5424 = vmul.f32 %v5408, %v5408
        %5425 = vadd.xlane.f32.xlu0 %v5409
        %v5426 = vpop.xlane.xlu0 %5425
        %5427 = vadd.xlane.f32.xlu0 %v5410
        %v5428 = vpop.xlane.xlu0 %5427
        %5429 = vadd.xlane.f32.xlu0 %v5411
        %v5430 = vpop.xlane.xlu0 %5429
        %5431 = vadd.xlane.f32.xlu0 %v5412
        %v5432 = vpop.xlane.xlu0 %5431
        %5433 = vadd.xlane.f32.xlu0 %v5413
        %v5434 = vpop.xlane.xlu0 %5433
        %5435 = vadd.xlane.f32.xlu0 %v5414
        %v5436 = vpop.xlane.xlu0 %5435
        %5437 = vadd.xlane.f32.xlu0 %v5415
        %v5438 = vpop.xlane.xlu0 %5437
        %5439 = vadd.xlane.f32.xlu0 %v5416
        %v5440 = vpop.xlane.xlu0 %5439
        %5441 = vadd.xlane.f32.xlu0 %v5417
        %v5442 = vpop.xlane.xlu0 %5441
        %5443 = vadd.xlane.f32.xlu0 %v5418
        %v5444 = vpop.xlane.xlu0 %5443
        %5445 = vadd.xlane.f32.xlu0 %v5419
        %v5446 = vpop.xlane.xlu0 %5445
        %5447 = vadd.xlane.f32.xlu0 %v5420
        %v5448 = vpop.xlane.xlu0 %5447
        %5449 = vadd.xlane.f32.xlu0 %v5421
        %v5450 = vpop.xlane.xlu0 %5449
        %5451 = vadd.xlane.f32.xlu0 %v5422
        %v5452 = vpop.xlane.xlu0 %5451
        %5453 = vadd.xlane.f32.xlu0 %v5423
        %v5454 = vpop.xlane.xlu0 %5453
        %5455 = vadd.xlane.f32.xlu0 %v5424
        %v5456 = vpop.xlane.xlu0 %5455
        %v5457 = vmul.f32 %v5426, %v4383
        %v5458 = vmul.f32 %v5428, %v4383
        %v5459 = vmul.f32 %v5430, %v4383
        %v5460 = vmul.f32 %v5432, %v4383
        %v5461 = vmul.f32 %v5434, %v4383
        %v5462 = vmul.f32 %v5436, %v4383
        %v5463 = vmul.f32 %v5438, %v4383
        %v5464 = vmul.f32 %v5440, %v4383
        %v5465 = vmul.f32 %v5442, %v4383
        %v5466 = vmul.f32 %v5444, %v4383
        %v5467 = vmul.f32 %v5446, %v4383
        %v5468 = vmul.f32 %v5448, %v4383
        %v5469 = vmul.f32 %v5450, %v4383
        %v5470 = vmul.f32 %v5452, %v4383
        %v5471 = vmul.f32 %v5454, %v4383
        %v5472 = vmul.f32 %v5456, %v4383
        %v5473 = vadd.f32 %v5457, 1e-12
        %v5474 = vadd.f32 %v5458, 1e-12
        %v5475 = vadd.f32 %v5459, 1e-12
        %v5476 = vadd.f32 %v5460, 1e-12
        %v5477 = vadd.f32 %v5461, 1e-12
        %v5478 = vadd.f32 %v5462, 1e-12
        %v5479 = vadd.f32 %v5463, 1e-12
        %v5480 = vadd.f32 %v5464, 1e-12
        %v5481 = vadd.f32 %v5465, 1e-12
        %v5482 = vadd.f32 %v5466, 1e-12
        %v5483 = vadd.f32 %v5467, 1e-12
        %v5484 = vadd.f32 %v5468, 1e-12
        %v5485 = vadd.f32 %v5469, 1e-12
        %v5486 = vadd.f32 %v5470, 1e-12
        %v5487 = vadd.f32 %v5471, 1e-12
        %v5488 = vadd.f32 %v5472, 1e-12
        %v5489 = vrsqrt.pop %v5473
        %v5490 = vrsqrt.pop %v5474
        %v5491 = vrsqrt.pop %v5475
        %v5492 = vrsqrt.pop %v5476
        %v5493 = vrsqrt.pop %v5477
        %v5494 = vrsqrt.pop %v5478
        %v5495 = vrsqrt.pop %v5479
        %v5496 = vrsqrt.pop %v5480
        %v5497 = vrsqrt.pop %v5481
        %v5498 = vrsqrt.pop %v5482
        %v5499 = vrsqrt.pop %v5483
        %v5500 = vrsqrt.pop %v5484
        %v5501 = vrsqrt.pop %v5485
        %v5502 = vrsqrt.pop %v5486
        %v5503 = vrsqrt.pop %v5487
        %v5504 = vrsqrt.pop %v5488
        %v5505 = vmul.f32 %v5393, %v5489
        %v5506 = vmul.f32 %v5394, %v5490
        %v5507 = vmul.f32 %v5395, %v5491
        %v5508 = vmul.f32 %v5396, %v5492
        %v5509 = vmul.f32 %v5397, %v5493
        %v5510 = vmul.f32 %v5398, %v5494
        %v5511 = vmul.f32 %v5399, %v5495
        %v5512 = vmul.f32 %v5400, %v5496
        %v5513 = vmul.f32 %v5401, %v5497
        %v5514 = vmul.f32 %v5402, %v5498
        %v5515 = vmul.f32 %v5403, %v5499
        %v5516 = vmul.f32 %v5404, %v5500
        %v5517 = vmul.f32 %v5405, %v5501
        %v5518 = vmul.f32 %v5406, %v5502
        %v5519 = vmul.f32 %v5407, %v5503
        %v5520 = vmul.f32 %v5408, %v5504
        %v5521 = vlaneseq
        %v5522 = vshrl.u32 %v5521, 7
        %v5523 = vsub.s32 1, %v5522
        %v5524 = vrot.slane %v820, %v5523
        %v5525 = vmul.f32 %v5505, %v5524
        %v5526 = vmul.f32 %v5506, %v5524
        %v5527 = vmul.f32 %v5507, %v5524
        %v5528 = vmul.f32 %v5508, %v5524
        %v5529 = vmul.f32 %v5509, %v5524
        %v5530 = vmul.f32 %v5510, %v5524
        %v5531 = vmul.f32 %v5511, %v5524
        %v5532 = vmul.f32 %v5512, %v5524
        %v5533 = vmul.f32 %v5513, %v5524
        %v5534 = vmul.f32 %v5514, %v5524
        %v5535 = vmul.f32 %v5515, %v5524
        %v5536 = vmul.f32 %v5516, %v5524
        %v5537 = vmul.f32 %v5517, %v5524
        %v5538 = vmul.f32 %v5518, %v5524
        %v5539 = vmul.f32 %v5519, %v5524
        %v5540 = vmul.f32 %v5520, %v5524
        %v5541 = vlaneseq
        %v5542 = vshrl.u32 %v5541, 7
        %v5543 = vsub.s32 2, %v5542
        %v5544 = vrot.slane %v820, %v5543
        %v5545 = vadd.f32 %v5525, %v5544
        %v5546 = vadd.f32 %v5526, %v5544
        %v5547 = vadd.f32 %v5527, %v5544
        %v5548 = vadd.f32 %v5528, %v5544
        %v5549 = vadd.f32 %v5529, %v5544
        %v5550 = vadd.f32 %v5530, %v5544
        %v5551 = vadd.f32 %v5531, %v5544
        %v5552 = vadd.f32 %v5532, %v5544
        %v5553 = vadd.f32 %v5533, %v5544
        %v5554 = vadd.f32 %v5534, %v5544
        %v5555 = vadd.f32 %v5535, %v5544
        %v5556 = vadd.f32 %v5536, %v5544
        %v5557 = vadd.f32 %v5537, %v5544
        %v5558 = vadd.f32 %v5538, %v5544
        %v5559 = vadd.f32 %v5539, %v5544
        %v5560 = vadd.f32 %v5540, %v5544
        %5561 = vst [vmem:[#allocation2] sm:$0xff] %v5545
        %5562 = vst [vmem:[#allocation2 + $0x8] sm:$0xff] %v5546
        %5563 = vst [vmem:[#allocation2 + $0x10] sm:$0xff] %v5547
        %5564 = vst [vmem:[#allocation2 + $0x18] sm:$0xff] %v5548
        %5565 = vst [vmem:[#allocation2 + $0x20] sm:$0xff] %v5549
        %5566 = vst [vmem:[#allocation2 + $0x28] sm:$0xff] %v5550
        %5567 = vst [vmem:[#allocation2 + $0x30] sm:$0xff] %v5551
        %5568 = vst [vmem:[#allocation2 + $0x38] sm:$0xff] %v5552
        %5569 = vst [vmem:[#allocation2 + $0x40] sm:$0xff] %v5553
        %5570 = vst [vmem:[#allocation2 + $0x48] sm:$0xff] %v5554
        %5571 = vst [vmem:[#allocation2 + $0x50] sm:$0xff] %v5555
        %5572 = vst [vmem:[#allocation2 + $0x58] sm:$0xff] %v5556
        %5573 = vst [vmem:[#allocation2 + $0x60] sm:$0xff] %v5557
        %5574 = vst [vmem:[#allocation2 + $0x68] sm:$0xff] %v5558
        %5575 = vst [vmem:[#allocation2 + $0x70] sm:$0xff] %v5559
        %5576 = vst [vmem:[#allocation2 + $0x78] sm:$0xff] %v5560
        %p5577 = scmp.eq.s32.totalorder %s32, 1
        // Predicated region
        $region97: #{tpu_custom_call.1} parent=55 // pred_check
          %p5578 = pneg %p5577
        $region98: #{tpu_custom_call.1} parent=55 // pred_check_branch
          %5580 = sbr.rel (%p5578) target = $region100
        $region99: #{tpu_custom_call.1} parent=55 // pred_region
          %v5583 = vrot.slane %v5553, 7
          %vm5584 = vcmask 1041409
          %v5585 = vsel %vm5584, %v5583, %v5545
          %vm5587 = vcmask 1041408
          %v5588 = vsel %vm5587, %v5585, 0.0
          %v5589 = vpack.c.bf16 %v5588, %v5588
          %v5590 = vld [vmem:[#allocation17] sm:$0xf]
          %v5591 = vld [vmem:[#allocation17 + $0x4] sm:$0xf]
          %v5592 = vld [vmem:[#allocation17 + $0x8] sm:$0xf]
          %v5593 = vld [vmem:[#allocation17 + $0xc] sm:$0xf]
          %v5594 = vld [vmem:[#allocation17 + $0x10] sm:$0xf]
          %v5595 = vld [vmem:[#allocation17 + $0x14] sm:$0xf]
          %v5596 = vld [vmem:[#allocation17 + $0x18] sm:$0xf]
          %v5597 = vld [vmem:[#allocation17 + $0x1c] sm:$0xf]
          %v5598 = vld [vmem:[#allocation17 + $0x20] sm:$0xf]
          %v5599 = vld [vmem:[#allocation17 + $0x24] sm:$0xf]
          %v5600 = vld [vmem:[#allocation17 + $0x28] sm:$0xf]
          %v5601 = vld [vmem:[#allocation17 + $0x2c] sm:$0xf]
          %v5602 = vld [vmem:[#allocation17 + $0x30] sm:$0xf]
          %v5603 = vld [vmem:[#allocation17 + $0x34] sm:$0xf]
          %v5604 = vld [vmem:[#allocation17 + $0x38] sm:$0xf]
          %v5605 = vld [vmem:[#allocation17 + $0x3c] sm:$0xf]
          %v5606 = vld [vmem:[#allocation8 + $0x2] sm:$0x1]
          %v5607 = vlaneseq
          %v5608 = vshrl.u32 %v5607, 7
          %v5609 = vsub.s32 0, %v5608
          %v5610 = vrot.slane %v5606, %v5609
          %v5627 = vunpack.c.l.b16 %v5590
          %v5628 = vunpack.c.l.b16 %v5591
          %v5629 = vunpack.c.l.b16 %v5592
          %v5630 = vunpack.c.l.b16 %v5593
          %v5631 = vunpack.c.l.b16 %v5594
          %v5632 = vunpack.c.l.b16 %v5595
          %v5633 = vunpack.c.l.b16 %v5596
          %v5634 = vunpack.c.l.b16 %v5597
          %v5635 = vunpack.c.l.b16 %v5598
          %v5636 = vunpack.c.l.b16 %v5599
          %v5637 = vunpack.c.l.b16 %v5600
          %v5638 = vunpack.c.l.b16 %v5601
          %v5639 = vunpack.c.l.b16 %v5602
          %v5640 = vunpack.c.l.b16 %v5603
          %v5641 = vunpack.c.l.b16 %v5604
          %v5642 = vunpack.c.l.b16 %v5605
          %v5643 = vpack.c.b16 %v5628, %v5627
          %v5644 = vpack.c.b16 %v5630, %v5629
          %v5645 = vpack.c.b16 %v5632, %v5631
          %v5646 = vpack.c.b16 %v5634, %v5633
          %v5647 = vpack.c.b16 %v5636, %v5635
          %v5648 = vpack.c.b16 %v5638, %v5637
          %v5649 = vpack.c.b16 %v5640, %v5639
          %v5650 = vpack.c.b16 %v5642, %v5641
          %5659 = vmatprep.subr.bf16.mxu0 0
          %5660 = vmatpush1.bf16.msra.mxu0 %v5650
          %5661 = vmatprep.subr.bf16.mxu0 0
          %5662 = vmatpush1.bf16.msra.mxu0 %v5649
          %5663 = vmatprep.subr.bf16.mxu0 0
          %5664 = vmatpush1.bf16.msra.mxu0 %v5648
          %5665 = vmatprep.subr.bf16.mxu0 0
          %5666 = vmatpush1.bf16.msra.mxu0 %v5647
          %5667 = vmatprep.subr.bf16.mxu0 0
          %5668 = vmatpush1.bf16.msra.mxu0 %v5646
          %5669 = vmatprep.subr.bf16.mxu0 0
          %5670 = vmatpush1.bf16.msra.mxu0 %v5645
          %5671 = vmatprep.subr.bf16.mxu0 0
          %5672 = vmatpush1.bf16.msra.mxu0 %v5644
          %5673 = vmatprep.subr.bf16.mxu0 0
          %5674 = vmatpush1.bf16.msra.mxu0 %v5643
          %5675 = vmatprep.subr.bf16.mxu0 0
          %5676 = vmatpush2.bf16.msra.mxu0 0
          %5677 = vmatprep.subr.bf16.mxu0 0
          %5678 = vmatpush2.bf16.msra.mxu0 0
          %5679 = vmatprep.subr.bf16.mxu0 0
          %5680 = vmatpush2.bf16.msra.mxu0 0
          %5681 = vmatprep.subr.bf16.mxu0 0
          %5682 = vmatpush2.bf16.msra.mxu0 0
          %5683 = vmatprep.subr.bf16.mxu0 0
          %5684 = vmatpush2.bf16.msra.mxu0 0
          %5685 = vmatprep.subr.bf16.mxu0 0
          %5686 = vmatpush2.bf16.msra.mxu0 0
          %5687 = vmatprep.subr.bf16.mxu0 0
          %5688 = vmatpush2.bf16.msra.mxu0 0
          %5689 = vmatprep.subr.bf16.mxu0 0
          %5690 = vmatpush2.bf16.msra.mxu0 0
          %5691 = vmatprep.mubr.bf16.mxu0 0
          %5692 = vmatmul.mubr.bf16.gmra.mxu0 %v5589
          %v5693 = vpop.f32.mrf.mxu0
          %v5694 = vadd.f32 %v5610, %v5693
          %v5695 = vpop.f32.mrf.mxu0
          %v5696 = vpop.f32.mrf.mxu0
          %v5697 = vpop.f32.mrf.mxu0
          %5698 = vdwg.mxu0
          %v5699 = vtanh.pop %v5694
          %v5700 = vpack.c.bf16 %v5699, %v5699
          %s5701 = scalar_lea.vmem [#allocation17], 64
          %v5702 = vld [vmem:[%s5701] sm:$0xf]
          %v5703 = vld [vmem:[%s5701 + $0x4] sm:$0xf]
          %v5704 = vld [vmem:[%s5701 + $0x8] sm:$0xf]
          %v5705 = vld [vmem:[%s5701 + $0xc] sm:$0xf]
          %v5706 = vld [vmem:[%s5701 + $0x10] sm:$0xf]
          %v5707 = vld [vmem:[%s5701 + $0x14] sm:$0xf]
          %v5708 = vld [vmem:[%s5701 + $0x18] sm:$0xf]
          %v5709 = vld [vmem:[%s5701 + $0x1c] sm:$0xf]
          %v5710 = vld [vmem:[%s5701 + $0x20] sm:$0xf]
          %v5711 = vld [vmem:[%s5701 + $0x24] sm:$0xf]
          %v5712 = vld [vmem:[%s5701 + $0x28] sm:$0xf]
          %v5713 = vld [vmem:[%s5701 + $0x2c] sm:$0xf]
          %v5714 = vld [vmem:[%s5701 + $0x30] sm:$0xf]
          %v5715 = vld [vmem:[%s5701 + $0x34] sm:$0xf]
          %v5716 = vld [vmem:[%s5701 + $0x38] sm:$0xf]
          %v5717 = vld [vmem:[%s5701 + $0x3c] sm:$0xf]
          %v5718 = vld [vmem:[#allocation8 + $0x3] sm:$0x1]
          %v5719 = vlaneseq
          %v5720 = vshrl.u32 %v5719, 7
          %v5721 = vsub.s32 0, %v5720
          %v5722 = vrot.slane %v5718, %v5721
          %v5739 = vunpack.c.l.b16 %v5702
          %v5740 = vunpack.c.l.b16 %v5703
          %v5741 = vunpack.c.l.b16 %v5704
          %v5742 = vunpack.c.l.b16 %v5705
          %v5743 = vunpack.c.l.b16 %v5706
          %v5744 = vunpack.c.l.b16 %v5707
          %v5745 = vunpack.c.l.b16 %v5708
          %v5746 = vunpack.c.l.b16 %v5709
          %v5747 = vunpack.c.l.b16 %v5710
          %v5748 = vunpack.c.l.b16 %v5711
          %v5749 = vunpack.c.l.b16 %v5712
          %v5750 = vunpack.c.l.b16 %v5713
          %v5751 = vunpack.c.l.b16 %v5714
          %v5752 = vunpack.c.l.b16 %v5715
          %v5753 = vunpack.c.l.b16 %v5716
          %v5754 = vunpack.c.l.b16 %v5717
          %v5755 = vpack.c.b16 %v5740, %v5739
          %v5756 = vpack.c.b16 %v5742, %v5741
          %v5757 = vpack.c.b16 %v5744, %v5743
          %v5758 = vpack.c.b16 %v5746, %v5745
          %v5759 = vpack.c.b16 %v5748, %v5747
          %v5760 = vpack.c.b16 %v5750, %v5749
          %v5761 = vpack.c.b16 %v5752, %v5751
          %v5762 = vpack.c.b16 %v5754, %v5753
          %5771 = vmatprep.subr.bf16.mxu0 0
          %5772 = vmatpush1.bf16.msra.mxu0 %v5762
          %5773 = vmatprep.subr.bf16.mxu0 0
          %5774 = vmatpush1.bf16.msra.mxu0 %v5761
          %5775 = vmatprep.subr.bf16.mxu0 0
          %5776 = vmatpush1.bf16.msra.mxu0 %v5760
          %5777 = vmatprep.subr.bf16.mxu0 0
          %5778 = vmatpush1.bf16.msra.mxu0 %v5759
          %5779 = vmatprep.subr.bf16.mxu0 0
          %5780 = vmatpush1.bf16.msra.mxu0 %v5758
          %5781 = vmatprep.subr.bf16.mxu0 0
          %5782 = vmatpush1.bf16.msra.mxu0 %v5757
          %5783 = vmatprep.subr.bf16.mxu0 0
          %5784 = vmatpush1.bf16.msra.mxu0 %v5756
          %5785 = vmatprep.subr.bf16.mxu0 0
          %5786 = vmatpush1.bf16.msra.mxu0 %v5755
          %5787 = vmatprep.subr.bf16.mxu0 0
          %5788 = vmatpush2.bf16.msra.mxu0 0
          %5789 = vmatprep.subr.bf16.mxu0 0
          %5790 = vmatpush2.bf16.msra.mxu0 0
          %5791 = vmatprep.subr.bf16.mxu0 0
          %5792 = vmatpush2.bf16.msra.mxu0 0
          %5793 = vmatprep.subr.bf16.mxu0 0
          %5794 = vmatpush2.bf16.msra.mxu0 0
          %5795 = vmatprep.subr.bf16.mxu0 0
          %5796 = vmatpush2.bf16.msra.mxu0 0
          %5797 = vmatprep.subr.bf16.mxu0 0
          %5798 = vmatpush2.bf16.msra.mxu0 0
          %5799 = vmatprep.subr.bf16.mxu0 0
          %5800 = vmatpush2.bf16.msra.mxu0 0
          %5801 = vmatprep.subr.bf16.mxu0 0
          %5802 = vmatpush2.bf16.msra.mxu0 0
          %5803 = vmatprep.mubr.bf16.mxu0 0
          %5804 = vmatmul.mubr.bf16.gmra.mxu0 %v5700
          %v5805 = vpop.f32.mrf.mxu0
          %v5806 = vadd.f32 %v5722, %v5805
          %v5807 = vpop.f32.mrf.mxu0
          %v5808 = vpop.f32.mrf.mxu0
          %v5809 = vpop.f32.mrf.mxu0
          %5810 = vdwg.mxu0
          %5811 = vst [vmem:[#allocation18] sm:$0xff] %v5806
        $region100: #{tpu_custom_call.1} parent=55 // pred_fallthru
          _
        // Predicated region
        $region101: #{tpu_custom_call.1} parent=55 // pred_check
          %p5812 = pneg %p259
        $region102: #{tpu_custom_call.1} parent=55 // pred_check_branch
          %5814 = sbr.rel (%p5812) target = $region104
        $region103: #{tpu_custom_call.1} parent=55 // pred_region
          %s5816 = ssub.s32 128, 128
          %5817 = vsyncadd [#allocation5], %s5816
          %s5819 = sshll.u32 [#allocation18], 4
          %s5820 = int_to_ptr.vmem [resolvable:$true] %s5819
          %5822 = dma.vmem_to_hbm [thread:$0]  %s5820, 128, %s9, [#allocation5]
        $region104: #{tpu_custom_call.1} parent=55 // pred_fallthru
          _
        // Predicated region
        $region105: #{tpu_custom_call.1} parent=55 // pred_check
          %p5823 = pneg %p259
        $region106: #{tpu_custom_call.1} parent=55 // pred_check_branch
          %5825 = sbr.rel (%p5823) target = $region108
        $region107: #{tpu_custom_call.1} parent=55 // pred_region
          %5826 = dma.done [#allocation5], 128
        $region108: #{tpu_custom_call.1} parent=55 // pred_fallthru
          _
      $region56: #{tpu_custom_call.1} parent=5 // pred_fallthru
        _
      %p5827 = scmp.le.s32.totalorder 2, %s27
      // Predicated region
      $region109: #{tpu_custom_call.1} parent=5 // pred_check
        %p5828 = pneg %p5827
      $region110: #{tpu_custom_call.1} parent=5 // pred_check_branch
        %5830 = sbr.rel (%p5828) target = $region112
      $region111: #{tpu_custom_call.1} parent=5 // pred_region
        %s5831 = ssub.s32 %s27, 2
      $region112: #{tpu_custom_call.1} parent=5 // pred_fallthru
        _
    $region6: #{tpu_custom_call.1} parent=1 // loop_footer
      %s31 = sadd.s32 1, %s27
    $region7: #{tpu_custom_call.1} parent=1 // loop_footer_branch
      %26 = sbr.rel target = $region3
    $region8: #{tpu_custom_call.1} parent=1 // loop_exit
      _
    %5832 = vsyncpa [#allocation4], 1
    %s5833 = scalar_lea.sflag [#allocation4], 1
    %5834 = vsyncpa %s5833, 1
    %5835 = vsyncpa [#allocation7], 1
    %5836 = vsyncpa [#allocation10], 1
    %s5837 = scalar_lea.sflag [#allocation10], 1
    %5838 = vsyncpa %s5837, 1
    %5839 = vsyncpa [#allocation13], 1
    %s5840 = scalar_lea.sflag [#allocation13], 1
    %5841 = vsyncpa %s5840, 1
    %5842 = vsyncpa [#allocation16], 1
    %s5843 = scalar_lea.sflag [#allocation16], 1
    %5844 = vsyncpa %s5843, 1
    %5845 = vsyncpa [#allocation5], 1
    %s5846 = scalar_lea.sflag [#allocation5], 1
    %5847 = vsyncpa %s5846, 1

</llo_original>
